<compile_context>
chip_gen: v7x
topology: tpu7x:2x2x1
jax: 0.10.0
libtpu: 0.0.40
codegen_flags: <defaults>
</compile_context>

<pallas_src>
import jax
import jax.numpy as jnp
import numpy as np
from jax import lax
from jax.experimental import pallas as pl
from jax.experimental.pallas import tpu as pltpu


def mynet_kernel(x2d_ref, h01_ref, h02_ref, h03_ref,
                 wih1_ref, b1_ref,
                 wh1_ref, wh2_ref, wh3_ref, b2_ref, b3_ref,
                 wo_ref, bo_ref,
                 y_ref,
                 g1_sc, h3_sc):
    Bp, H = h01_ref.shape
    TB = x2d_ref.shape[0]
    T = TB // Bp
    G = 4 * H                     # fused gate width per cell: [r | z | n_in | n_hid]

    # ---- hoisted: load fused recurrent weights once; pre-broadcast biases
    # outside the loop (JAX does not CSE broadcast_in_dim). ----
    w_h1 = wh1_ref[...]                                   # (H, 2G): [whh1_4 | wih2_4]
    w_h2 = wh2_ref[...]                                   # (H, 2G): [whh2_4 | wih3_4]
    w_h3 = wh3_ref[...]                                   # (H, G) :  whh3_4
    b2 = jnp.broadcast_to(b2_ref[...], (Bp, G))
    b3 = jnp.broadcast_to(b3_ref[...], (Bp, G))

    # ---- hoisted: layer-1 input gates for all timesteps in ONE matmul,
    # lane-dense 4H layout, biases (bih1 + bhh1 appropriately placed) folded. ----
    g1_sc[...] = jnp.dot(x2d_ref[...], wih1_ref[...],
                         preferred_element_type=jnp.float32) + b1_ref[...]

    def gru_gates(a, h):
        # a: (Bp, 4H) = [r | z | n_input | n_hidden]  -> PyTorch GRUCell gating.
        rz = jax.nn.sigmoid(a[:, 0:2 * H])               # one fused sigmoid issue
        r = rz[:, 0:H]
        z = rz[:, H:2 * H]
        n = jnp.tanh(a[:, 2 * H:3 * H] + r * a[:, 3 * H:4 * H])
        return (1.0 - z) * n + z * h

    # ---- wavefront recurrence ----
    def wave(s, carry):
        h1, h2, h3 = carry

        # tail waves (s >= T) harmlessly re-read row T-1; their layer-1 result
        # is never consumed.
        rrow = pl.multiple_of(jnp.minimum(s, T - 1) * Bp, Bp)
        g1 = g1_sc[pl.ds(rrow, Bp), :]                    # (Bp, G)

        # three independent MXU pushes (no concat; wide N fills v6e/v7x MXU).
        p1 = jnp.dot(h1, w_h1, preferred_element_type=jnp.float32)   # (Bp, 2G)
        p2 = jnp.dot(h2, w_h2, preferred_element_type=jnp.float32)   # (Bp, 2G)
        p3 = jnp.dot(h3, w_h3, preferred_element_type=jnp.float32)   # (Bp, G)

        a1 = g1 + p1[:, 0:G]
        a2 = p1[:, G:2 * G] + p2[:, 0:G] + b2
        a3 = p2[:, G:2 * G] + p3 + b3

        nh1 = gru_gates(a1, h1)     # h1(t = s)
        nh2 = gru_gates(a2, h2)     # h2(t = s-1)
        nh3 = gru_gates(a3, h3)     # h3(t = s-2)

        # store h3(t = s-2); waves 0/1 write a throwaway value to row 0 that
        # wave 2 overwrites (branch-free alternative to a pl.when guard).
        wrow = pl.multiple_of(jnp.maximum(s - 2, 0) * Bp, Bp)
        h3_sc[pl.ds(wrow, Bp), :] = nh3

        # layer-2/3 carries must stay at h0 until their first valid wave.
        h2 = jnp.where(s >= 1, nh2, h2)
        h3 = jnp.where(s >= 2, nh3, h3)
        return (nh1, h2, h3)

    n_waves = T + 2
    lax.fori_loop(0, n_waves, wave,
                  (h01_ref[...], h02_ref[...], h03_ref[...]),
                  unroll=True if n_waves <= 8 else 4)

    # ---- hoisted epilogue: one batched lane-dense projection + softmax.
    # Padded class lanes carry a -1e30 bias so exp underflows to exactly 0. ----
    logits = jnp.dot(h3_sc[...], wo_ref[...],
                     preferred_element_type=jnp.float32) + bo_ref[...]
    logits = logits - jnp.max(logits, axis=1, keepdims=True)
    e = jnp.exp(logits)
    y_ref[...] = e * pl.reciprocal(jnp.sum(e, axis=1, keepdims=True), approx=False)


def _prep_kernel_params(params, H, C_pad):
    """Fuse per-cell weights into the lane-dense [r|z|n_in|n_hid] kernel layout."""
    def split3(w):
        return w[:, :H], w[:, H:2 * H], w[:, 2 * H:]

    def top4(wih):        # (in, 4H): [w_r | w_z | w_n | 0]
        r, z, n = split3(wih)
        return jnp.concatenate([r, z, n, jnp.zeros_like(n)], axis=1)

    def bot4(whh):        # (H, 4H): [w_r | w_z | 0 | w_n]
        r, z, n = split3(whh)
        return jnp.concatenate([r, z, jnp.zeros_like(n), n], axis=1)

    def bias4(bih, bhh):  # (1, 4H): [b_ir+b_hr | b_iz+b_hz | b_in | b_hn]
        ir, iz, inn = split3(bih)
        hr, hz, hn = split3(bhh)
        return jnp.concatenate([ir + hr, iz + hz, inn, hn], axis=1)

    wih1 = top4(params["wih1"])                         # (I, 4H) input-gate precompute
    b1 = bias4(params["bih1"], params["bhh1"])          # (1, 4H)
    whh1_4 = bot4(params["whh1"])                       # (H, 4H)

    w2_top, w2_bot = top4(params["wih2"]), bot4(params["whh2"])
    w3_top, w3_bot = top4(params["wih3"]), bot4(params["whh3"])
    b2 = bias4(params["bih2"], params["bhh2"])
    b3 = bias4(params["bih3"], params["bhh3"])

    # One fused RHS per carried state (N = 2*4H): removes in-loop concats and
    # halves the number of MXU pushes per wave.
    w_h1 = jnp.concatenate([whh1_4, w2_top], axis=1)    # (H, 8H)
    w_h2 = jnp.concatenate([w2_bot, w3_top], axis=1)    # (H, 8H)
    w_h3 = w3_bot                                       # (H, 4H)

    # Lane-dense output head: pad class dim to C_pad; padded bias -1e30.
    C = params["wo"].shape[-1]
    wo = jnp.pad(params["wo"], ((0, 0), (0, C_pad - C)))
    bo = jnp.pad(params["bo"], ((0, 0), (0, C_pad - C)), constant_values=-1e30)
    return dict(wih1=wih1, b1=b1, w_h1=w_h1, w_h2=w_h2, w_h3=w_h3,
                b2=b2, b3=b3, wo=wo, bo=bo)


def mynet_forward(x_btI, h0s, params):
    """x_btI: (B, T, I) float32 -> (B, T, C) float32 (softmax probs per step)."""
    B, T, I = x_btI.shape
    H = h0s[0].shape[-1]
    C = params["wo"].shape[-1]
    Bp = ((B + 7) // 8) * 8                   # pad batch to a sublane multiple
    G = 4 * H
    C_pad = ((C + 127) // 128) * 128          # lane-dense class dim

    kp = _prep_kernel_params(params, H, C_pad)

    # time-major, batch-padded, flattened: row index = t * Bp + b
    x_tbI = jnp.transpose(x_btI, (1, 0, 2))
    x2d = jnp.pad(x_tbI, ((0, 0), (0, Bp - B), (0, 0))).reshape(T * Bp, I)
    pad_h = lambda h: jnp.pad(h, ((0, Bp - B), (0, 0)))

    # Explicit VMEM budget for the single-invocation (everything-resident) design.
    resident_f32 = (T * Bp * (I + G + H + C_pad)          # x2d, g1_sc, h3_sc, y
                    + 3 * Bp * H                          # carries
                    + I * G + 2 * H * 2 * G + H * G       # recurrent weights
                    + H * C_pad + 3 * G + C_pad)          # head + biases
    vmem_limit = int(min(max(4 * (4 * resident_f32), 8 << 20), 32 << 20))
    # TODO(synk): for large T (esp. v7x's 64 MiB VMEM), fall back to a T-chunked
    # grid with (h1,h2,h3) carried in scratch across "arbitrary" iterations so
    # x2d/g1 stream via BlockSpec double-buffering instead of staying resident.

    vmem_spec = pl.BlockSpec(memory_space=pltpu.MemorySpace.VMEM)
    y2d = pl.pallas_call(
        mynet_kernel,
        out_shape=jax.ShapeDtypeStruct((T * Bp, C_pad), jnp.float32),
        in_specs=[vmem_spec] * 13,
        out_specs=vmem_spec,
        scratch_shapes=[pltpu.VMEM((T * Bp, G), jnp.float32),
                        pltpu.VMEM((T * Bp, H), jnp.float32)],
        compiler_params=pltpu.CompilerParams(vmem_limit_bytes=vmem_limit),
    )(
        x2d, pad_h(h0s[0]), pad_h(h0s[1]), pad_h(h0s[2]),
        kp["wih1"], kp["b1"], kp["w_h1"], kp["w_h2"], kp["w_h3"],
        kp["b2"], kp["b3"], kp["wo"], kp["bo"],
    )

    y = y2d.reshape(T, Bp, C_pad)[:, :B, :C]
    return jnp.transpose(y, (1, 0, 2))        # back to (B, T, C)


def mynet_reference(x_btI, h0s, params):
    """Pure-JAX reference of the PyTorch forward pass."""
    B, T, I = x_btI.shape
    H = h0s[0].shape[-1]

    def cell(x, h, wih, whh, bih, bhh):
        gi = x @ wih + bih
        gh = h @ whh + bhh
        r = jax.nn.sigmoid(gi[:, :H] + gh[:, :H])
        z = jax.nn.sigmoid(gi[:, H:2 * H] + gh[:, H:2 * H])
        n = jnp.tanh(gi[:, 2 * H:] + r * gh[:, 2 * H:])
        return (1.0 - z) * n + z * h

    h1, h2, h3 = h0s
    ys = []
    for t in range(T):
        xt = x_btI[:, t, :]
        h1 = cell(xt, h1, params["wih1"], params["whh1"], params["bih1"], params["bhh1"])
        h2 = cell(h1, h2, params["wih2"], params["whh2"], params["bih2"], params["bhh2"])
        h3 = cell(h2, h3, params["wih3"], params["whh3"], params["bih3"], params["bhh3"])
        logits = h3 @ params["wo"] + params["bo"]
        ys.append(jax.nn.softmax(logits, axis=1))
    return jnp.stack(ys, axis=1)


def make_params(key, input_size, hidden_size, num_class):
    # Deterministic synthetic init (module's init_weights is not a checkpoint).
    ks = jax.random.split(key, 16)
    H, I, C = hidden_size, input_size, num_class

    def norm(k, shape, scale=0.1):
        return (scale * jax.random.normal(k, shape)).astype(jnp.float32)

    params = {
        # GRU weights stored pre-transposed: (in_features, 3H); biases as (1, 3H).
        "wih1": norm(ks[0], (I, 3 * H)), "whh1": norm(ks[1], (H, 3 * H)),
        "bih1": norm(ks[2], (1, 3 * H)), "bhh1": norm(ks[3], (1, 3 * H)),
        "wih2": norm(ks[4], (H, 3 * H)), "whh2": norm(ks[5], (H, 3 * H)),
        "bih2": norm(ks[6], (1, 3 * H)), "bhh2": norm(ks[7], (1, 3 * H)),
        "wih3": norm(ks[8], (H, 3 * H)), "whh3": norm(ks[9], (H, 3 * H)),
        "bih3": norm(ks[10], (1, 3 * H)), "bhh3": norm(ks[11], (1, 3 * H)),
        # Output linear: (H, C) pre-transposed, bias (1, C).
        "wo": norm(ks[12], (H, C), scale=0.5),
        "bo": jax.random.uniform(ks[13], (1, C)).astype(jnp.float32),
    }
    return params, ks[14], ks[15]


if __name__ == "__main__":
    # model_config-equivalent small shapes
    B, T, I, H, C = 4, 6, 8, 32, 5

    key = jax.random.PRNGKey(0)
    params, k_x, k_h = make_params(key, I, H, C)

    x = jax.random.normal(k_x, (B, T, I), dtype=jnp.float32)
    # The PyTorch forward draws h0 ~ N(0, 0.1) at call time (unseeded); we make
    # it deterministic here with the JAX PRNG and pass it explicitly.
    kh1, kh2, kh3 = jax.random.split(k_h, 3)
    h0s = (0.1 * jax.random.normal(kh1, (B, H)).astype(jnp.float32),
           0.1 * jax.random.normal(kh2, (B, H)).astype(jnp.float32),
           0.1 * jax.random.normal(kh3, (B, H)).astype(jnp.float32))

    y = jax.block_until_ready(mynet_forward(x, h0s, params))
    y_ref = jax.block_until_ready(mynet_reference(x, h0s, params))

    assert y.shape == (B, T, C)
    np.testing.assert_allclose(np.asarray(y), np.asarray(y_ref), rtol=5e-5, atol=5e-5)
    # softmax rows sum to 1
    np.testing.assert_allclose(np.asarray(y).sum(-1), np.ones((B, T)), rtol=1e-5, atol=1e-5)

    print("KERNEL_OK")
</pallas_src>

<mosaic_0001>
module attributes {stable_mosaic.version = 11 : i64} {
  func.func @mynet_kernel(%arg0: memref<48x8xf32, #tpu.memory_space<vmem>>, %arg1: memref<8x32xf32, #tpu.memory_space<vmem>>, %arg2: memref<8x32xf32, #tpu.memory_space<vmem>>, %arg3: memref<8x32xf32, #tpu.memory_space<vmem>>, %arg4: memref<8x128xf32, #tpu.memory_space<vmem>>, %arg5: memref<1x128xf32, #tpu.memory_space<vmem>>, %arg6: memref<32x256xf32, #tpu.memory_space<vmem>>, %arg7: memref<32x256xf32, #tpu.memory_space<vmem>>, %arg8: memref<32x128xf32, #tpu.memory_space<vmem>>, %arg9: memref<1x128xf32, #tpu.memory_space<vmem>>, %arg10: memref<1x128xf32, #tpu.memory_space<vmem>>, %arg11: memref<32x128xf32, #tpu.memory_space<vmem>>, %arg12: memref<1x128xf32, #tpu.memory_space<vmem>>, %arg13: memref<48x128xf32, #tpu.memory_space<vmem>>, %arg14: memref<48x128xf32, #tpu.memory_space<vmem>>, %arg15: memref<48x32xf32, #tpu.memory_space<vmem>>) attributes {dimension_semantics = [], scalar_prefetch = 0 : i64, scratch_operands = 2 : i64, tpu.core_type = #tpu.core_type<tc>} {
    %c0 = arith.constant 0 : index
    %c0_0 = arith.constant 0 : index
    %0 = vector.load %arg6[%c0, %c0_0] : memref<32x256xf32, #tpu.memory_space<vmem>>, vector<32x256xf32>
    %c0_1 = arith.constant 0 : index
    %c0_2 = arith.constant 0 : index
    %1 = vector.load %arg7[%c0_1, %c0_2] : memref<32x256xf32, #tpu.memory_space<vmem>>, vector<32x256xf32>
    %c0_3 = arith.constant 0 : index
    %c0_4 = arith.constant 0 : index
    %2 = vector.load %arg8[%c0_3, %c0_4] : memref<32x128xf32, #tpu.memory_space<vmem>>, vector<32x128xf32>
    %c0_5 = arith.constant 0 : index
    %c0_6 = arith.constant 0 : index
    %3 = vector.load %arg9[%c0_5, %c0_6] : memref<1x128xf32, #tpu.memory_space<vmem>>, vector<1x128xf32>
    %4 = vector.shape_cast %3 : vector<1x128xf32> to vector<1x128xf32>
    %5 = vector.broadcast %4 : vector<1x128xf32> to vector<8x128xf32>
    %c0_7 = arith.constant 0 : index
    %c0_8 = arith.constant 0 : index
    %6 = vector.load %arg10[%c0_7, %c0_8] : memref<1x128xf32, #tpu.memory_space<vmem>>, vector<1x128xf32>
    %7 = vector.shape_cast %6 : vector<1x128xf32> to vector<1x128xf32>
    %8 = vector.broadcast %7 : vector<1x128xf32> to vector<8x128xf32>
    %c0_9 = arith.constant 0 : index
    %c0_10 = arith.constant 0 : index
    %9 = vector.load %arg0[%c0_9, %c0_10] : memref<48x8xf32, #tpu.memory_space<vmem>>, vector<48x8xf32>
    %c0_11 = arith.constant 0 : index
    %c0_12 = arith.constant 0 : index
    %10 = vector.load %arg4[%c0_11, %c0_12] : memref<8x128xf32, #tpu.memory_space<vmem>>, vector<8x128xf32>
    %cst = arith.constant dense<0.000000e+00> : vector<48x128xf32>
    %11 = tpu.matmul %9, %10, %cst {dimension_numbers = #tpu.dot_dimension_numbers<[1], [0], [0], [1], [0, 0, 1, 1], [], []>} : vector<48x8xf32>, vector<8x128xf32>, vector<48x128xf32> -> vector<48x128xf32>
    %c0_13 = arith.constant 0 : index
    %c0_14 = arith.constant 0 : index
    %12 = vector.load %arg5[%c0_13, %c0_14] : memref<1x128xf32, #tpu.memory_space<vmem>>, vector<1x128xf32>
    %13 = vector.broadcast %12 : vector<1x128xf32> to vector<48x128xf32>
    %14 = arith.addf %11, %13 : vector<48x128xf32>
    %c0_15 = arith.constant 0 : index
    %c0_16 = arith.constant 0 : index
    %15 = vector.load %arg14[%c0_15, %c0_16] : memref<48x128xf32, #tpu.memory_space<vmem>>, vector<48x128xf32>
    tpu.vector_store %arg14[%c0_15, %c0_16], %14 {strides = array<i32>} : memref<48x128xf32, #tpu.memory_space<vmem>>, vector<48x128xf32>,
    %c0_17 = arith.constant 0 : index
    %c0_18 = arith.constant 0 : index
    %16 = vector.load %arg1[%c0_17, %c0_18] : memref<8x32xf32, #tpu.memory_space<vmem>>, vector<8x32xf32>
    %c0_19 = arith.constant 0 : index
    %c0_20 = arith.constant 0 : index
    %17 = vector.load %arg2[%c0_19, %c0_20] : memref<8x32xf32, #tpu.memory_space<vmem>>, vector<8x32xf32>
    %c0_21 = arith.constant 0 : index
    %c0_22 = arith.constant 0 : index
    %18 = vector.load %arg3[%c0_21, %c0_22] : memref<8x32xf32, #tpu.memory_space<vmem>>, vector<8x32xf32>
    %c0_i32 = arith.constant 0 : i32
    %c5_i32 = arith.constant 5 : i32
    %19 = arith.minsi %c0_i32, %c5_i32 : i32
    %c8_i32 = arith.constant 8 : i32
    %20 = arith.muli %19, %c8_i32 : i32
    %21 = tpu.assume_multiple %20, 8 : i32
    %22 = arith.index_cast %21 : i32 to index
    %c0_23 = arith.constant 0 : index
    %23 = vector.load %arg14[%22, %c0_23] : memref<48x128xf32, #tpu.memory_space<vmem>>, vector<8x128xf32>
    %cst_24 = arith.constant dense<0.000000e+00> : vector<8x256xf32>
    %24 = tpu.matmul %16, %0, %cst_24 {dimension_numbers = #tpu.dot_dimension_numbers<[1], [0], [0], [1], [0, 0, 1, 1], [], []>} : vector<8x32xf32>, vector<32x256xf32>, vector<8x256xf32> -> vector<8x256xf32>
    %cst_25 = arith.constant dense<0.000000e+00> : vector<8x256xf32>
    %25 = tpu.matmul %17, %1, %cst_25 {dimension_numbers = #tpu.dot_dimension_numbers<[1], [0], [0], [1], [0, 0, 1, 1], [], []>} : vector<8x32xf32>, vector<32x256xf32>, vector<8x256xf32> -> vector<8x256xf32>
    %cst_26 = arith.constant dense<0.000000e+00> : vector<8x128xf32>
    %26 = tpu.matmul %18, %2, %cst_26 {dimension_numbers = #tpu.dot_dimension_numbers<[1], [0], [0], [1], [0, 0, 1, 1], [], []>} : vector<8x32xf32>, vector<32x128xf32>, vector<8x128xf32> -> vector<8x128xf32>
    %27 = vector.extract_strided_slice %24 {offsets = [0, 0], sizes = [8, 128], strides = [1, 1]} : vector<8x256xf32> to vector<8x128xf32>
    %28 = arith.addf %23, %27 : vector<8x128xf32>
    %29 = vector.extract_strided_slice %24 {offsets = [0, 128], sizes = [8, 128], strides = [1, 1]} : vector<8x256xf32> to vector<8x128xf32>
    %30 = vector.extract_strided_slice %25 {offsets = [0, 0], sizes = [8, 128], strides = [1, 1]} : vector<8x256xf32> to vector<8x128xf32>
    %31 = arith.addf %29, %30 : vector<8x128xf32>
    %32 = arith.addf %31, %5 : vector<8x128xf32>
    %33 = vector.extract_strided_slice %25 {offsets = [0, 128], sizes = [8, 128], strides = [1, 1]} : vector<8x256xf32> to vector<8x128xf32>
    %34 = arith.addf %33, %26 : vector<8x128xf32>
    %35 = arith.addf %34, %8 : vector<8x128xf32>
    %36 = vector.extract_strided_slice %28 {offsets = [0, 0], sizes = [8, 64], strides = [1, 1]} : vector<8x128xf32> to vector<8x64xf32>
    %37 = arith.negf %36 : vector<8x64xf32>
    %38 = math.exp %37 : vector<8x64xf32>
    %cst_27 = arith.constant 1.000000e+00 : f32
    %39 = vector.broadcast %cst_27 : f32 to vector<8x64xf32>
    %40 = arith.addf %39, %38 : vector<8x64xf32>
    %41 = arith.divf %39, %40 : vector<8x64xf32>
    %42 = vector.extract_strided_slice %41 {offsets = [0, 0], sizes = [8, 32], strides = [1, 1]} : vector<8x64xf32> to vector<8x32xf32>
    %43 = vector.extract_strided_slice %41 {offsets = [0, 32], sizes = [8, 32], strides = [1, 1]} : vector<8x64xf32> to vector<8x32xf32>
    %44 = vector.extract_strided_slice %28 {offsets = [0, 64], sizes = [8, 32], strides = [1, 1]} : vector<8x128xf32> to vector<8x32xf32>
    %45 = vector.extract_strided_slice %28 {offsets = [0, 96], sizes = [8, 32], strides = [1, 1]} : vector<8x128xf32> to vector<8x32xf32>
    %46 = arith.mulf %42, %45 : vector<8x32xf32>
    %47 = arith.addf %44, %46 : vector<8x32xf32>
    %48 = math.tanh %47 : vector<8x32xf32>
    %cst_28 = arith.constant 1.000000e+00 : f32
    %49 = vector.broadcast %cst_28 : f32 to vector<8x32xf32>
    %50 = arith.subf %49, %43 : vector<8x32xf32>
    %51 = arith.mulf %50, %48 : vector<8x32xf32>
    %52 = arith.mulf %43, %16 : vector<8x32xf32>
    %53 = arith.addf %51, %52 : vector<8x32xf32>
    %54 = vector.extract_strided_slice %32 {offsets = [0, 0], sizes = [8, 64], strides = [1, 1]} : vector<8x128xf32> to vector<8x64xf32>
    %55 = arith.negf %54 : vector<8x64xf32>
    %56 = math.exp %55 : vector<8x64xf32>
    %cst_29 = arith.constant 1.000000e+00 : f32
    %57 = vector.broadcast %cst_29 : f32 to vector<8x64xf32>
    %58 = arith.addf %57, %56 : vector<8x64xf32>
    %59 = arith.divf %57, %58 : vector<8x64xf32>
    %60 = vector.extract_strided_slice %59 {offsets = [0, 0], sizes = [8, 32], strides = [1, 1]} : vector<8x64xf32> to vector<8x32xf32>
    %61 = vector.extract_strided_slice %59 {offsets = [0, 32], sizes = [8, 32], strides = [1, 1]} : vector<8x64xf32> to vector<8x32xf32>
    %62 = vector.extract_strided_slice %32 {offsets = [0, 64], sizes = [8, 32], strides = [1, 1]} : vector<8x128xf32> to vector<8x32xf32>
    %63 = vector.extract_strided_slice %32 {offsets = [0, 96], sizes = [8, 32], strides = [1, 1]} : vector<8x128xf32> to vector<8x32xf32>
    %64 = arith.mulf %60, %63 : vector<8x32xf32>
    %65 = arith.addf %62, %64 : vector<8x32xf32>
    %66 = math.tanh %65 : vector<8x32xf32>
    %cst_30 = arith.constant 1.000000e+00 : f32
    %67 = vector.broadcast %cst_30 : f32 to vector<8x32xf32>
    %68 = arith.subf %67, %61 : vector<8x32xf32>
    %69 = arith.mulf %68, %66 : vector<8x32xf32>
    %70 = arith.mulf %61, %17 : vector<8x32xf32>
    %71 = arith.addf %69, %70 : vector<8x32xf32>
    %72 = vector.extract_strided_slice %35 {offsets = [0, 0], sizes = [8, 64], strides = [1, 1]} : vector<8x128xf32> to vector<8x64xf32>
    %73 = arith.negf %72 : vector<8x64xf32>
    %74 = math.exp %73 : vector<8x64xf32>
    %cst_31 = arith.constant 1.000000e+00 : f32
    %75 = vector.broadcast %cst_31 : f32 to vector<8x64xf32>
    %76 = arith.addf %75, %74 : vector<8x64xf32>
    %77 = arith.divf %75, %76 : vector<8x64xf32>
    %78 = vector.extract_strided_slice %77 {offsets = [0, 0], sizes = [8, 32], strides = [1, 1]} : vector<8x64xf32> to vector<8x32xf32>
    %79 = vector.extract_strided_slice %77 {offsets = [0, 32], sizes = [8, 32], strides = [1, 1]} : vector<8x64xf32> to vector<8x32xf32>
    %80 = vector.extract_strided_slice %35 {offsets = [0, 64], sizes = [8, 32], strides = [1, 1]} : vector<8x128xf32> to vector<8x32xf32>
    %81 = vector.extract_strided_slice %35 {offsets = [0, 96], sizes = [8, 32], strides = [1, 1]} : vector<8x128xf32> to vector<8x32xf32>
    %82 = arith.mulf %78, %81 : vector<8x32xf32>
    %83 = arith.addf %80, %82 : vector<8x32xf32>
    %84 = math.tanh %83 : vector<8x32xf32>
    %cst_32 = arith.constant 1.000000e+00 : f32
    %85 = vector.broadcast %cst_32 : f32 to vector<8x32xf32>
    %86 = arith.subf %85, %79 : vector<8x32xf32>
    %87 = arith.mulf %86, %84 : vector<8x32xf32>
    %88 = arith.mulf %79, %18 : vector<8x32xf32>
    %89 = arith.addf %87, %88 : vector<8x32xf32>
    %c2_i32 = arith.constant 2 : i32
    %90 = arith.subi %c0_i32, %c2_i32 : i32
    %c0_i32_33 = arith.constant 0 : i32
    %91 = arith.maxsi %90, %c0_i32_33 : i32
    %c8_i32_34 = arith.constant 8 : i32
    %92 = arith.muli %91, %c8_i32_34 : i32
    %93 = tpu.assume_multiple %92, 8 : i32
    %94 = arith.index_cast %93 : i32 to index
    %c0_35 = arith.constant 0 : index
    %95 = vector.load %arg15[%94, %c0_35] : memref<48x32xf32, #tpu.memory_space<vmem>>, vector<8x32xf32>
    tpu.vector_store %arg15[%94, %c0_35], %89 {strides = array<i32>} : memref<48x32xf32, #tpu.memory_space<vmem>>, vector<8x32xf32>,
    %c1_i32 = arith.constant 1 : i32
    %96 = arith.cmpi sge, %c0_i32, %c1_i32 : i32
    %97 = arith.select %96, %71, %17 : vector<8x32xf32>
    %c2_i32_36 = arith.constant 2 : i32
    %98 = arith.cmpi sge, %c0_i32, %c2_i32_36 : i32
    %99 = arith.select %98, %89, %18 : vector<8x32xf32>
    %c1_i32_37 = arith.constant 1 : i32
    %c5_i32_38 = arith.constant 5 : i32
    %100 = arith.minsi %c1_i32_37, %c5_i32_38 : i32
    %c8_i32_39 = arith.constant 8 : i32
    %101 = arith.muli %100, %c8_i32_39 : i32
    %102 = tpu.assume_multiple %101, 8 : i32
    %103 = arith.index_cast %102 : i32 to index
    %c0_40 = arith.constant 0 : index
    %104 = vector.load %arg14[%103, %c0_40] : memref<48x128xf32, #tpu.memory_space<vmem>>, vector<8x128xf32>
    %cst_41 = arith.constant dense<0.000000e+00> : vector<8x256xf32>
    %105 = tpu.matmul %53, %0, %cst_41 {dimension_numbers = #tpu.dot_dimension_numbers<[1], [0], [0], [1], [0, 0, 1, 1], [], []>} : vector<8x32xf32>, vector<32x256xf32>, vector<8x256xf32> -> vector<8x256xf32>
    %cst_42 = arith.constant dense<0.000000e+00> : vector<8x256xf32>
    %106 = tpu.matmul %97, %1, %cst_42 {dimension_numbers = #tpu.dot_dimension_numbers<[1], [0], [0], [1], [0, 0, 1, 1], [], []>} : vector<8x32xf32>, vector<32x256xf32>, vector<8x256xf32> -> vector<8x256xf32>
    %cst_43 = arith.constant dense<0.000000e+00> : vector<8x128xf32>
    %107 = tpu.matmul %99, %2, %cst_43 {dimension_numbers = #tpu.dot_dimension_numbers<[1], [0], [0], [1], [0, 0, 1, 1], [], []>} : vector<8x32xf32>, vector<32x128xf32>, vector<8x128xf32> -> vector<8x128xf32>
    %108 = vector.extract_strided_slice %105 {offsets = [0, 0], sizes = [8, 128], strides = [1, 1]} : vector<8x256xf32> to vector<8x128xf32>
    %109 = arith.addf %104, %108 : vector<8x128xf32>
    %110 = vector.extract_strided_slice %105 {offsets = [0, 128], sizes = [8, 128], strides = [1, 1]} : vector<8x256xf32> to vector<8x128xf32>
    %111 = vector.extract_strided_slice %106 {offsets = [0, 0], sizes = [8, 128], strides = [1, 1]} : vector<8x256xf32> to vector<8x128xf32>
    %112 = arith.addf %110, %111 : vector<8x128xf32>
    %113 = arith.addf %112, %5 : vector<8x128xf32>
    %114 = vector.extract_strided_slice %106 {offsets = [0, 128], sizes = [8, 128], strides = [1, 1]} : vector<8x256xf32> to vector<8x128xf32>
    %115 = arith.addf %114, %107 : vector<8x128xf32>
    %116 = arith.addf %115, %8 : vector<8x128xf32>
    %117 = vector.extract_strided_slice %109 {offsets = [0, 0], sizes = [8, 64], strides = [1, 1]} : vector<8x128xf32> to vector<8x64xf32>
    %118 = arith.negf %117 : vector<8x64xf32>
    %119 = math.exp %118 : vector<8x64xf32>
    %cst_44 = arith.constant 1.000000e+00 : f32
    %120 = vector.broadcast %cst_44 : f32 to vector<8x64xf32>
    %121 = arith.addf %120, %119 : vector<8x64xf32>
    %122 = arith.divf %120, %121 : vector<8x64xf32>
    %123 = vector.extract_strided_slice %122 {offsets = [0, 0], sizes = [8, 32], strides = [1, 1]} : vector<8x64xf32> to vector<8x32xf32>
    %124 = vector.extract_strided_slice %122 {offsets = [0, 32], sizes = [8, 32], strides = [1, 1]} : vector<8x64xf32> to vector<8x32xf32>
    %125 = vector.extract_strided_slice %109 {offsets = [0, 64], sizes = [8, 32], strides = [1, 1]} : vector<8x128xf32> to vector<8x32xf32>
    %126 = vector.extract_strided_slice %109 {offsets = [0, 96], sizes = [8, 32], strides = [1, 1]} : vector<8x128xf32> to vector<8x32xf32>
    %127 = arith.mulf %123, %126 : vector<8x32xf32>
    %128 = arith.addf %125, %127 : vector<8x32xf32>
    %129 = math.tanh %128 : vector<8x32xf32>
    %cst_45 = arith.constant 1.000000e+00 : f32
    %130 = vector.broadcast %cst_45 : f32 to vector<8x32xf32>
    %131 = arith.subf %130, %124 : vector<8x32xf32>
    %132 = arith.mulf %131, %129 : vector<8x32xf32>
    %133 = arith.mulf %124, %53 : vector<8x32xf32>
    %134 = arith.addf %132, %133 : vector<8x32xf32>
    %135 = vector.extract_strided_slice %113 {offsets = [0, 0], sizes = [8, 64], strides = [1, 1]} : vector<8x128xf32> to vector<8x64xf32>
    %136 = arith.negf %135 : vector<8x64xf32>
    %137 = math.exp %136 : vector<8x64xf32>
    %cst_46 = arith.constant 1.000000e+00 : f32
    %138 = vector.broadcast %cst_46 : f32 to vector<8x64xf32>
    %139 = arith.addf %138, %137 : vector<8x64xf32>
    %140 = arith.divf %138, %139 : vector<8x64xf32>
    %141 = vector.extract_strided_slice %140 {offsets = [0, 0], sizes = [8, 32], strides = [1, 1]} : vector<8x64xf32> to vector<8x32xf32>
    %142 = vector.extract_strided_slice %140 {offsets = [0, 32], sizes = [8, 32], strides = [1, 1]} : vector<8x64xf32> to vector<8x32xf32>
    %143 = vector.extract_strided_slice %113 {offsets = [0, 64], sizes = [8, 32], strides = [1, 1]} : vector<8x128xf32> to vector<8x32xf32>
    %144 = vector.extract_strided_slice %113 {offsets = [0, 96], sizes = [8, 32], strides = [1, 1]} : vector<8x128xf32> to vector<8x32xf32>
    %145 = arith.mulf %141, %144 : vector<8x32xf32>
    %146 = arith.addf %143, %145 : vector<8x32xf32>
    %147 = math.tanh %146 : vector<8x32xf32>
    %cst_47 = arith.constant 1.000000e+00 : f32
    %148 = vector.broadcast %cst_47 : f32 to vector<8x32xf32>
    %149 = arith.subf %148, %142 : vector<8x32xf32>
    %150 = arith.mulf %149, %147 : vector<8x32xf32>
    %151 = arith.mulf %142, %97 : vector<8x32xf32>
    %152 = arith.addf %150, %151 : vector<8x32xf32>
    %153 = vector.extract_strided_slice %116 {offsets = [0, 0], sizes = [8, 64], strides = [1, 1]} : vector<8x128xf32> to vector<8x64xf32>
    %154 = arith.negf %153 : vector<8x64xf32>
    %155 = math.exp %154 : vector<8x64xf32>
    %cst_48 = arith.constant 1.000000e+00 : f32
    %156 = vector.broadcast %cst_48 : f32 to vector<8x64xf32>
    %157 = arith.addf %156, %155 : vector<8x64xf32>
    %158 = arith.divf %156, %157 : vector<8x64xf32>
    %159 = vector.extract_strided_slice %158 {offsets = [0, 0], sizes = [8, 32], strides = [1, 1]} : vector<8x64xf32> to vector<8x32xf32>
    %160 = vector.extract_strided_slice %158 {offsets = [0, 32], sizes = [8, 32], strides = [1, 1]} : vector<8x64xf32> to vector<8x32xf32>
    %161 = vector.extract_strided_slice %116 {offsets = [0, 64], sizes = [8, 32], strides = [1, 1]} : vector<8x128xf32> to vector<8x32xf32>
    %162 = vector.extract_strided_slice %116 {offsets = [0, 96], sizes = [8, 32], strides = [1, 1]} : vector<8x128xf32> to vector<8x32xf32>
    %163 = arith.mulf %159, %162 : vector<8x32xf32>
    %164 = arith.addf %161, %163 : vector<8x32xf32>
    %165 = math.tanh %164 : vector<8x32xf32>
    %cst_49 = arith.constant 1.000000e+00 : f32
    %166 = vector.broadcast %cst_49 : f32 to vector<8x32xf32>
    %167 = arith.subf %166, %160 : vector<8x32xf32>
    %168 = arith.mulf %167, %165 : vector<8x32xf32>
    %169 = arith.mulf %160, %99 : vector<8x32xf32>
    %170 = arith.addf %168, %169 : vector<8x32xf32>
    %c2_i32_50 = arith.constant 2 : i32
    %171 = arith.subi %c1_i32_37, %c2_i32_50 : i32
    %c0_i32_51 = arith.constant 0 : i32
    %172 = arith.maxsi %171, %c0_i32_51 : i32
    %c8_i32_52 = arith.constant 8 : i32
    %173 = arith.muli %172, %c8_i32_52 : i32
    %174 = tpu.assume_multiple %173, 8 : i32
    %175 = arith.index_cast %174 : i32 to index
    %c0_53 = arith.constant 0 : index
    %176 = vector.load %arg15[%175, %c0_53] : memref<48x32xf32, #tpu.memory_space<vmem>>, vector<8x32xf32>
    tpu.vector_store %arg15[%175, %c0_53], %170 {strides = array<i32>} : memref<48x32xf32, #tpu.memory_space<vmem>>, vector<8x32xf32>,
    %c1_i32_54 = arith.constant 1 : i32
    %177 = arith.cmpi sge, %c1_i32_37, %c1_i32_54 : i32
    %178 = arith.select %177, %152, %97 : vector<8x32xf32>
    %c2_i32_55 = arith.constant 2 : i32
    %179 = arith.cmpi sge, %c1_i32_37, %c2_i32_55 : i32
    %180 = arith.select %179, %170, %99 : vector<8x32xf32>
    %c2_i32_56 = arith.constant 2 : i32
    %c5_i32_57 = arith.constant 5 : i32
    %181 = arith.minsi %c2_i32_56, %c5_i32_57 : i32
    %c8_i32_58 = arith.constant 8 : i32
    %182 = arith.muli %181, %c8_i32_58 : i32
    %183 = tpu.assume_multiple %182, 8 : i32
    %184 = arith.index_cast %183 : i32 to index
    %c0_59 = arith.constant 0 : index
    %185 = vector.load %arg14[%184, %c0_59] : memref<48x128xf32, #tpu.memory_space<vmem>>, vector<8x128xf32>
    %cst_60 = arith.constant dense<0.000000e+00> : vector<8x256xf32>
    %186 = tpu.matmul %134, %0, %cst_60 {dimension_numbers = #tpu.dot_dimension_numbers<[1], [0], [0], [1], [0, 0, 1, 1], [], []>} : vector<8x32xf32>, vector<32x256xf32>, vector<8x256xf32> -> vector<8x256xf32>
    %cst_61 = arith.constant dense<0.000000e+00> : vector<8x256xf32>
    %187 = tpu.matmul %178, %1, %cst_61 {dimension_numbers = #tpu.dot_dimension_numbers<[1], [0], [0], [1], [0, 0, 1, 1], [], []>} : vector<8x32xf32>, vector<32x256xf32>, vector<8x256xf32> -> vector<8x256xf32>
    %cst_62 = arith.constant dense<0.000000e+00> : vector<8x128xf32>
    %188 = tpu.matmul %180, %2, %cst_62 {dimension_numbers = #tpu.dot_dimension_numbers<[1], [0], [0], [1], [0, 0, 1, 1], [], []>} : vector<8x32xf32>, vector<32x128xf32>, vector<8x128xf32> -> vector<8x128xf32>
    %189 = vector.extract_strided_slice %186 {offsets = [0, 0], sizes = [8, 128], strides = [1, 1]} : vector<8x256xf32> to vector<8x128xf32>
    %190 = arith.addf %185, %189 : vector<8x128xf32>
    %191 = vector.extract_strided_slice %186 {offsets = [0, 128], sizes = [8, 128], strides = [1, 1]} : vector<8x256xf32> to vector<8x128xf32>
    %192 = vector.extract_strided_slice %187 {offsets = [0, 0], sizes = [8, 128], strides = [1, 1]} : vector<8x256xf32> to vector<8x128xf32>
    %193 = arith.addf %191, %192 : vector<8x128xf32>
    %194 = arith.addf %193, %5 : vector<8x128xf32>
    %195 = vector.extract_strided_slice %187 {offsets = [0, 128], sizes = [8, 128], strides = [1, 1]} : vector<8x256xf32> to vector<8x128xf32>
    %196 = arith.addf %195, %188 : vector<8x128xf32>
    %197 = arith.addf %196, %8 : vector<8x128xf32>
    %198 = vector.extract_strided_slice %190 {offsets = [0, 0], sizes = [8, 64], strides = [1, 1]} : vector<8x128xf32> to vector<8x64xf32>
    %199 = arith.negf %198 : vector<8x64xf32>
    %200 = math.exp %199 : vector<8x64xf32>
    %cst_63 = arith.constant 1.000000e+00 : f32
    %201 = vector.broadcast %cst_63 : f32 to vector<8x64xf32>
    %202 = arith.addf %201, %200 : vector<8x64xf32>
    %203 = arith.divf %201, %202 : vector<8x64xf32>
    %204 = vector.extract_strided_slice %203 {offsets = [0, 0], sizes = [8, 32], strides = [1, 1]} : vector<8x64xf32> to vector<8x32xf32>
    %205 = vector.extract_strided_slice %203 {offsets = [0, 32], sizes = [8, 32], strides = [1, 1]} : vector<8x64xf32> to vector<8x32xf32>
    %206 = vector.extract_strided_slice %190 {offsets = [0, 64], sizes = [8, 32], strides = [1, 1]} : vector<8x128xf32> to vector<8x32xf32>
    %207 = vector.extract_strided_slice %190 {offsets = [0, 96], sizes = [8, 32], strides = [1, 1]} : vector<8x128xf32> to vector<8x32xf32>
    %208 = arith.mulf %204, %207 : vector<8x32xf32>
    %209 = arith.addf %206, %208 : vector<8x32xf32>
    %210 = math.tanh %209 : vector<8x32xf32>
    %cst_64 = arith.constant 1.000000e+00 : f32
    %211 = vector.broadcast %cst_64 : f32 to vector<8x32xf32>
    %212 = arith.subf %211, %205 : vector<8x32xf32>
    %213 = arith.mulf %212, %210 : vector<8x32xf32>
    %214 = arith.mulf %205, %134 : vector<8x32xf32>
    %215 = arith.addf %213, %214 : vector<8x32xf32>
    %216 = vector.extract_strided_slice %194 {offsets = [0, 0], sizes = [8, 64], strides = [1, 1]} : vector<8x128xf32> to vector<8x64xf32>
    %217 = arith.negf %216 : vector<8x64xf32>
    %218 = math.exp %217 : vector<8x64xf32>
    %cst_65 = arith.constant 1.000000e+00 : f32
    %219 = vector.broadcast %cst_65 : f32 to vector<8x64xf32>
    %220 = arith.addf %219, %218 : vector<8x64xf32>
    %221 = arith.divf %219, %220 : vector<8x64xf32>
    %222 = vector.extract_strided_slice %221 {offsets = [0, 0], sizes = [8, 32], strides = [1, 1]} : vector<8x64xf32> to vector<8x32xf32>
    %223 = vector.extract_strided_slice %221 {offsets = [0, 32], sizes = [8, 32], strides = [1, 1]} : vector<8x64xf32> to vector<8x32xf32>
    %224 = vector.extract_strided_slice %194 {offsets = [0, 64], sizes = [8, 32], strides = [1, 1]} : vector<8x128xf32> to vector<8x32xf32>
    %225 = vector.extract_strided_slice %194 {offsets = [0, 96], sizes = [8, 32], strides = [1, 1]} : vector<8x128xf32> to vector<8x32xf32>
    %226 = arith.mulf %222, %225 : vector<8x32xf32>
    %227 = arith.addf %224, %226 : vector<8x32xf32>
    %228 = math.tanh %227 : vector<8x32xf32>
    %cst_66 = arith.constant 1.000000e+00 : f32
    %229 = vector.broadcast %cst_66 : f32 to vector<8x32xf32>
    %230 = arith.subf %229, %223 : vector<8x32xf32>
    %231 = arith.mulf %230, %228 : vector<8x32xf32>
    %232 = arith.mulf %223, %178 : vector<8x32xf32>
    %233 = arith.addf %231, %232 : vector<8x32xf32>
    %234 = vector.extract_strided_slice %197 {offsets = [0, 0], sizes = [8, 64], strides = [1, 1]} : vector<8x128xf32> to vector<8x64xf32>
    %235 = arith.negf %234 : vector<8x64xf32>
    %236 = math.exp %235 : vector<8x64xf32>
    %cst_67 = arith.constant 1.000000e+00 : f32
    %237 = vector.broadcast %cst_67 : f32 to vector<8x64xf32>
    %238 = arith.addf %237, %236 : vector<8x64xf32>
    %239 = arith.divf %237, %238 : vector<8x64xf32>
    %240 = vector.extract_strided_slice %239 {offsets = [0, 0], sizes = [8, 32], strides = [1, 1]} : vector<8x64xf32> to vector<8x32xf32>
    %241 = vector.extract_strided_slice %239 {offsets = [0, 32], sizes = [8, 32], strides = [1, 1]} : vector<8x64xf32> to vector<8x32xf32>
    %242 = vector.extract_strided_slice %197 {offsets = [0, 64], sizes = [8, 32], strides = [1, 1]} : vector<8x128xf32> to vector<8x32xf32>
    %243 = vector.extract_strided_slice %197 {offsets = [0, 96], sizes = [8, 32], strides = [1, 1]} : vector<8x128xf32> to vector<8x32xf32>
    %244 = arith.mulf %240, %243 : vector<8x32xf32>
    %245 = arith.addf %242, %244 : vector<8x32xf32>
    %246 = math.tanh %245 : vector<8x32xf32>
    %cst_68 = arith.constant 1.000000e+00 : f32
    %247 = vector.broadcast %cst_68 : f32 to vector<8x32xf32>
    %248 = arith.subf %247, %241 : vector<8x32xf32>
    %249 = arith.mulf %248, %246 : vector<8x32xf32>
    %250 = arith.mulf %241, %180 : vector<8x32xf32>
    %251 = arith.addf %249, %250 : vector<8x32xf32>
    %c2_i32_69 = arith.constant 2 : i32
    %252 = arith.subi %c2_i32_56, %c2_i32_69 : i32
    %c0_i32_70 = arith.constant 0 : i32
    %253 = arith.maxsi %252, %c0_i32_70 : i32
    %c8_i32_71 = arith.constant 8 : i32
    %254 = arith.muli %253, %c8_i32_71 : i32
    %255 = tpu.assume_multiple %254, 8 : i32
    %256 = arith.index_cast %255 : i32 to index
    %c0_72 = arith.constant 0 : index
    %257 = vector.load %arg15[%256, %c0_72] : memref<48x32xf32, #tpu.memory_space<vmem>>, vector<8x32xf32>
    tpu.vector_store %arg15[%256, %c0_72], %251 {strides = array<i32>} : memref<48x32xf32, #tpu.memory_space<vmem>>, vector<8x32xf32>,
    %c1_i32_73 = arith.constant 1 : i32
    %258 = arith.cmpi sge, %c2_i32_56, %c1_i32_73 : i32
    %259 = arith.select %258, %233, %178 : vector<8x32xf32>
    %c2_i32_74 = arith.constant 2 : i32
    %260 = arith.cmpi sge, %c2_i32_56, %c2_i32_74 : i32
    %261 = arith.select %260, %251, %180 : vector<8x32xf32>
    %c3_i32 = arith.constant 3 : i32
    %c5_i32_75 = arith.constant 5 : i32
    %262 = arith.minsi %c3_i32, %c5_i32_75 : i32
    %c8_i32_76 = arith.constant 8 : i32
    %263 = arith.muli %262, %c8_i32_76 : i32
    %264 = tpu.assume_multiple %263, 8 : i32
    %265 = arith.index_cast %264 : i32 to index
    %c0_77 = arith.constant 0 : index
    %266 = vector.load %arg14[%265, %c0_77] : memref<48x128xf32, #tpu.memory_space<vmem>>, vector<8x128xf32>
    %cst_78 = arith.constant dense<0.000000e+00> : vector<8x256xf32>
    %267 = tpu.matmul %215, %0, %cst_78 {dimension_numbers = #tpu.dot_dimension_numbers<[1], [0], [0], [1], [0, 0, 1, 1], [], []>} : vector<8x32xf32>, vector<32x256xf32>, vector<8x256xf32> -> vector<8x256xf32>
    %cst_79 = arith.constant dense<0.000000e+00> : vector<8x256xf32>
    %268 = tpu.matmul %259, %1, %cst_79 {dimension_numbers = #tpu.dot_dimension_numbers<[1], [0], [0], [1], [0, 0, 1, 1], [], []>} : vector<8x32xf32>, vector<32x256xf32>, vector<8x256xf32> -> vector<8x256xf32>
    %cst_80 = arith.constant dense<0.000000e+00> : vector<8x128xf32>
    %269 = tpu.matmul %261, %2, %cst_80 {dimension_numbers = #tpu.dot_dimension_numbers<[1], [0], [0], [1], [0, 0, 1, 1], [], []>} : vector<8x32xf32>, vector<32x128xf32>, vector<8x128xf32> -> vector<8x128xf32>
    %270 = vector.extract_strided_slice %267 {offsets = [0, 0], sizes = [8, 128], strides = [1, 1]} : vector<8x256xf32> to vector<8x128xf32>
    %271 = arith.addf %266, %270 : vector<8x128xf32>
    %272 = vector.extract_strided_slice %267 {offsets = [0, 128], sizes = [8, 128], strides = [1, 1]} : vector<8x256xf32> to vector<8x128xf32>
    %273 = vector.extract_strided_slice %268 {offsets = [0, 0], sizes = [8, 128], strides = [1, 1]} : vector<8x256xf32> to vector<8x128xf32>
    %274 = arith.addf %272, %273 : vector<8x128xf32>
    %275 = arith.addf %274, %5 : vector<8x128xf32>
    %276 = vector.extract_strided_slice %268 {offsets = [0, 128], sizes = [8, 128], strides = [1, 1]} : vector<8x256xf32> to vector<8x128xf32>
    %277 = arith.addf %276, %269 : vector<8x128xf32>
    %278 = arith.addf %277, %8 : vector<8x128xf32>
    %279 = vector.extract_strided_slice %271 {offsets = [0, 0], sizes = [8, 64], strides = [1, 1]} : vector<8x128xf32> to vector<8x64xf32>
    %280 = arith.negf %279 : vector<8x64xf32>
    %281 = math.exp %280 : vector<8x64xf32>
    %cst_81 = arith.constant 1.000000e+00 : f32
    %282 = vector.broadcast %cst_81 : f32 to vector<8x64xf32>
    %283 = arith.addf %282, %281 : vector<8x64xf32>
    %284 = arith.divf %282, %283 : vector<8x64xf32>
    %285 = vector.extract_strided_slice %284 {offsets = [0, 0], sizes = [8, 32], strides = [1, 1]} : vector<8x64xf32> to vector<8x32xf32>
    %286 = vector.extract_strided_slice %284 {offsets = [0, 32], sizes = [8, 32], strides = [1, 1]} : vector<8x64xf32> to vector<8x32xf32>
    %287 = vector.extract_strided_slice %271 {offsets = [0, 64], sizes = [8, 32], strides = [1, 1]} : vector<8x128xf32> to vector<8x32xf32>
    %288 = vector.extract_strided_slice %271 {offsets = [0, 96], sizes = [8, 32], strides = [1, 1]} : vector<8x128xf32> to vector<8x32xf32>
    %289 = arith.mulf %285, %288 : vector<8x32xf32>
    %290 = arith.addf %287, %289 : vector<8x32xf32>
    %291 = math.tanh %290 : vector<8x32xf32>
    %cst_82 = arith.constant 1.000000e+00 : f32
    %292 = vector.broadcast %cst_82 : f32 to vector<8x32xf32>
    %293 = arith.subf %292, %286 : vector<8x32xf32>
    %294 = arith.mulf %293, %291 : vector<8x32xf32>
    %295 = arith.mulf %286, %215 : vector<8x32xf32>
    %296 = arith.addf %294, %295 : vector<8x32xf32>
    %297 = vector.extract_strided_slice %275 {offsets = [0, 0], sizes = [8, 64], strides = [1, 1]} : vector<8x128xf32> to vector<8x64xf32>
    %298 = arith.negf %297 : vector<8x64xf32>
    %299 = math.exp %298 : vector<8x64xf32>
    %cst_83 = arith.constant 1.000000e+00 : f32
    %300 = vector.broadcast %cst_83 : f32 to vector<8x64xf32>
    %301 = arith.addf %300, %299 : vector<8x64xf32>
    %302 = arith.divf %300, %301 : vector<8x64xf32>
    %303 = vector.extract_strided_slice %302 {offsets = [0, 0], sizes = [8, 32], strides = [1, 1]} : vector<8x64xf32> to vector<8x32xf32>
    %304 = vector.extract_strided_slice %302 {offsets = [0, 32], sizes = [8, 32], strides = [1, 1]} : vector<8x64xf32> to vector<8x32xf32>
    %305 = vector.extract_strided_slice %275 {offsets = [0, 64], sizes = [8, 32], strides = [1, 1]} : vector<8x128xf32> to vector<8x32xf32>
    %306 = vector.extract_strided_slice %275 {offsets = [0, 96], sizes = [8, 32], strides = [1, 1]} : vector<8x128xf32> to vector<8x32xf32>
    %307 = arith.mulf %303, %306 : vector<8x32xf32>
    %308 = arith.addf %305, %307 : vector<8x32xf32>
    %309 = math.tanh %308 : vector<8x32xf32>
    %cst_84 = arith.constant 1.000000e+00 : f32
    %310 = vector.broadcast %cst_84 : f32 to vector<8x32xf32>
    %311 = arith.subf %310, %304 : vector<8x32xf32>
    %312 = arith.mulf %311, %309 : vector<8x32xf32>
    %313 = arith.mulf %304, %259 : vector<8x32xf32>
    %314 = arith.addf %312, %313 : vector<8x32xf32>
    %315 = vector.extract_strided_slice %278 {offsets = [0, 0], sizes = [8, 64], strides = [1, 1]} : vector<8x128xf32> to vector<8x64xf32>
    %316 = arith.negf %315 : vector<8x64xf32>
    %317 = math.exp %316 : vector<8x64xf32>
    %cst_85 = arith.constant 1.000000e+00 : f32
    %318 = vector.broadcast %cst_85 : f32 to vector<8x64xf32>
    %319 = arith.addf %318, %317 : vector<8x64xf32>
    %320 = arith.divf %318, %319 : vector<8x64xf32>
    %321 = vector.extract_strided_slice %320 {offsets = [0, 0], sizes = [8, 32], strides = [1, 1]} : vector<8x64xf32> to vector<8x32xf32>
    %322 = vector.extract_strided_slice %320 {offsets = [0, 32], sizes = [8, 32], strides = [1, 1]} : vector<8x64xf32> to vector<8x32xf32>
    %323 = vector.extract_strided_slice %278 {offsets = [0, 64], sizes = [8, 32], strides = [1, 1]} : vector<8x128xf32> to vector<8x32xf32>
    %324 = vector.extract_strided_slice %278 {offsets = [0, 96], sizes = [8, 32], strides = [1, 1]} : vector<8x128xf32> to vector<8x32xf32>
    %325 = arith.mulf %321, %324 : vector<8x32xf32>
    %326 = arith.addf %323, %325 : vector<8x32xf32>
    %327 = math.tanh %326 : vector<8x32xf32>
    %cst_86 = arith.constant 1.000000e+00 : f32
    %328 = vector.broadcast %cst_86 : f32 to vector<8x32xf32>
    %329 = arith.subf %328, %322 : vector<8x32xf32>
    %330 = arith.mulf %329, %327 : vector<8x32xf32>
    %331 = arith.mulf %322, %261 : vector<8x32xf32>
    %332 = arith.addf %330, %331 : vector<8x32xf32>
    %c2_i32_87 = arith.constant 2 : i32
    %333 = arith.subi %c3_i32, %c2_i32_87 : i32
    %c0_i32_88 = arith.constant 0 : i32
    %334 = arith.maxsi %333, %c0_i32_88 : i32
    %c8_i32_89 = arith.constant 8 : i32
    %335 = arith.muli %334, %c8_i32_89 : i32
    %336 = tpu.assume_multiple %335, 8 : i32
    %337 = arith.index_cast %336 : i32 to index
    %c0_90 = arith.constant 0 : index
    %338 = vector.load %arg15[%337, %c0_90] : memref<48x32xf32, #tpu.memory_space<vmem>>, vector<8x32xf32>
    tpu.vector_store %arg15[%337, %c0_90], %332 {strides = array<i32>} : memref<48x32xf32, #tpu.memory_space<vmem>>, vector<8x32xf32>,
    %c1_i32_91 = arith.constant 1 : i32
    %339 = arith.cmpi sge, %c3_i32, %c1_i32_91 : i32
    %340 = arith.select %339, %314, %259 : vector<8x32xf32>
    %c2_i32_92 = arith.constant 2 : i32
    %341 = arith.cmpi sge, %c3_i32, %c2_i32_92 : i32
    %342 = arith.select %341, %332, %261 : vector<8x32xf32>
    %c4_i32 = arith.constant 4 : i32
    %c5_i32_93 = arith.constant 5 : i32
    %343 = arith.minsi %c4_i32, %c5_i32_93 : i32
    %c8_i32_94 = arith.constant 8 : i32
    %344 = arith.muli %343, %c8_i32_94 : i32
    %345 = tpu.assume_multiple %344, 8 : i32
    %346 = arith.index_cast %345 : i32 to index
    %c0_95 = arith.constant 0 : index
    %347 = vector.load %arg14[%346, %c0_95] : memref<48x128xf32, #tpu.memory_space<vmem>>, vector<8x128xf32>
    %cst_96 = arith.constant dense<0.000000e+00> : vector<8x256xf32>
    %348 = tpu.matmul %296, %0, %cst_96 {dimension_numbers = #tpu.dot_dimension_numbers<[1], [0], [0], [1], [0, 0, 1, 1], [], []>} : vector<8x32xf32>, vector<32x256xf32>, vector<8x256xf32> -> vector<8x256xf32>
    %cst_97 = arith.constant dense<0.000000e+00> : vector<8x256xf32>
    %349 = tpu.matmul %340, %1, %cst_97 {dimension_numbers = #tpu.dot_dimension_numbers<[1], [0], [0], [1], [0, 0, 1, 1], [], []>} : vector<8x32xf32>, vector<32x256xf32>, vector<8x256xf32> -> vector<8x256xf32>
    %cst_98 = arith.constant dense<0.000000e+00> : vector<8x128xf32>
    %350 = tpu.matmul %342, %2, %cst_98 {dimension_numbers = #tpu.dot_dimension_numbers<[1], [0], [0], [1], [0, 0, 1, 1], [], []>} : vector<8x32xf32>, vector<32x128xf32>, vector<8x128xf32> -> vector<8x128xf32>
    %351 = vector.extract_strided_slice %348 {offsets = [0, 0], sizes = [8, 128], strides = [1, 1]} : vector<8x256xf32> to vector<8x128xf32>
    %352 = arith.addf %347, %351 : vector<8x128xf32>
    %353 = vector.extract_strided_slice %348 {offsets = [0, 128], sizes = [8, 128], strides = [1, 1]} : vector<8x256xf32> to vector<8x128xf32>
    %354 = vector.extract_strided_slice %349 {offsets = [0, 0], sizes = [8, 128], strides = [1, 1]} : vector<8x256xf32> to vector<8x128xf32>
    %355 = arith.addf %353, %354 : vector<8x128xf32>
    %356 = arith.addf %355, %5 : vector<8x128xf32>
    %357 = vector.extract_strided_slice %349 {offsets = [0, 128], sizes = [8, 128], strides = [1, 1]} : vector<8x256xf32> to vector<8x128xf32>
    %358 = arith.addf %357, %350 : vector<8x128xf32>
    %359 = arith.addf %358, %8 : vector<8x128xf32>
    %360 = vector.extract_strided_slice %352 {offsets = [0, 0], sizes = [8, 64], strides = [1, 1]} : vector<8x128xf32> to vector<8x64xf32>
    %361 = arith.negf %360 : vector<8x64xf32>
    %362 = math.exp %361 : vector<8x64xf32>
    %cst_99 = arith.constant 1.000000e+00 : f32
    %363 = vector.broadcast %cst_99 : f32 to vector<8x64xf32>
    %364 = arith.addf %363, %362 : vector<8x64xf32>
    %365 = arith.divf %363, %364 : vector<8x64xf32>
    %366 = vector.extract_strided_slice %365 {offsets = [0, 0], sizes = [8, 32], strides = [1, 1]} : vector<8x64xf32> to vector<8x32xf32>
    %367 = vector.extract_strided_slice %365 {offsets = [0, 32], sizes = [8, 32], strides = [1, 1]} : vector<8x64xf32> to vector<8x32xf32>
    %368 = vector.extract_strided_slice %352 {offsets = [0, 64], sizes = [8, 32], strides = [1, 1]} : vector<8x128xf32> to vector<8x32xf32>
    %369 = vector.extract_strided_slice %352 {offsets = [0, 96], sizes = [8, 32], strides = [1, 1]} : vector<8x128xf32> to vector<8x32xf32>
    %370 = arith.mulf %366, %369 : vector<8x32xf32>
    %371 = arith.addf %368, %370 : vector<8x32xf32>
    %372 = math.tanh %371 : vector<8x32xf32>
    %cst_100 = arith.constant 1.000000e+00 : f32
    %373 = vector.broadcast %cst_100 : f32 to vector<8x32xf32>
    %374 = arith.subf %373, %367 : vector<8x32xf32>
    %375 = arith.mulf %374, %372 : vector<8x32xf32>
    %376 = arith.mulf %367, %296 : vector<8x32xf32>
    %377 = arith.addf %375, %376 : vector<8x32xf32>
    %378 = vector.extract_strided_slice %356 {offsets = [0, 0], sizes = [8, 64], strides = [1, 1]} : vector<8x128xf32> to vector<8x64xf32>
    %379 = arith.negf %378 : vector<8x64xf32>
    %380 = math.exp %379 : vector<8x64xf32>
    %cst_101 = arith.constant 1.000000e+00 : f32
    %381 = vector.broadcast %cst_101 : f32 to vector<8x64xf32>
    %382 = arith.addf %381, %380 : vector<8x64xf32>
    %383 = arith.divf %381, %382 : vector<8x64xf32>
    %384 = vector.extract_strided_slice %383 {offsets = [0, 0], sizes = [8, 32], strides = [1, 1]} : vector<8x64xf32> to vector<8x32xf32>
    %385 = vector.extract_strided_slice %383 {offsets = [0, 32], sizes = [8, 32], strides = [1, 1]} : vector<8x64xf32> to vector<8x32xf32>
    %386 = vector.extract_strided_slice %356 {offsets = [0, 64], sizes = [8, 32], strides = [1, 1]} : vector<8x128xf32> to vector<8x32xf32>
    %387 = vector.extract_strided_slice %356 {offsets = [0, 96], sizes = [8, 32], strides = [1, 1]} : vector<8x128xf32> to vector<8x32xf32>
    %388 = arith.mulf %384, %387 : vector<8x32xf32>
    %389 = arith.addf %386, %388 : vector<8x32xf32>
    %390 = math.tanh %389 : vector<8x32xf32>
    %cst_102 = arith.constant 1.000000e+00 : f32
    %391 = vector.broadcast %cst_102 : f32 to vector<8x32xf32>
    %392 = arith.subf %391, %385 : vector<8x32xf32>
    %393 = arith.mulf %392, %390 : vector<8x32xf32>
    %394 = arith.mulf %385, %340 : vector<8x32xf32>
    %395 = arith.addf %393, %394 : vector<8x32xf32>
    %396 = vector.extract_strided_slice %359 {offsets = [0, 0], sizes = [8, 64], strides = [1, 1]} : vector<8x128xf32> to vector<8x64xf32>
    %397 = arith.negf %396 : vector<8x64xf32>
    %398 = math.exp %397 : vector<8x64xf32>
    %cst_103 = arith.constant 1.000000e+00 : f32
    %399 = vector.broadcast %cst_103 : f32 to vector<8x64xf32>
    %400 = arith.addf %399, %398 : vector<8x64xf32>
    %401 = arith.divf %399, %400 : vector<8x64xf32>
    %402 = vector.extract_strided_slice %401 {offsets = [0, 0], sizes = [8, 32], strides = [1, 1]} : vector<8x64xf32> to vector<8x32xf32>
    %403 = vector.extract_strided_slice %401 {offsets = [0, 32], sizes = [8, 32], strides = [1, 1]} : vector<8x64xf32> to vector<8x32xf32>
    %404 = vector.extract_strided_slice %359 {offsets = [0, 64], sizes = [8, 32], strides = [1, 1]} : vector<8x128xf32> to vector<8x32xf32>
    %405 = vector.extract_strided_slice %359 {offsets = [0, 96], sizes = [8, 32], strides = [1, 1]} : vector<8x128xf32> to vector<8x32xf32>
    %406 = arith.mulf %402, %405 : vector<8x32xf32>
    %407 = arith.addf %404, %406 : vector<8x32xf32>
    %408 = math.tanh %407 : vector<8x32xf32>
    %cst_104 = arith.constant 1.000000e+00 : f32
    %409 = vector.broadcast %cst_104 : f32 to vector<8x32xf32>
    %410 = arith.subf %409, %403 : vector<8x32xf32>
    %411 = arith.mulf %410, %408 : vector<8x32xf32>
    %412 = arith.mulf %403, %342 : vector<8x32xf32>
    %413 = arith.addf %411, %412 : vector<8x32xf32>
    %c2_i32_105 = arith.constant 2 : i32
    %414 = arith.subi %c4_i32, %c2_i32_105 : i32
    %c0_i32_106 = arith.constant 0 : i32
    %415 = arith.maxsi %414, %c0_i32_106 : i32
    %c8_i32_107 = arith.constant 8 : i32
    %416 = arith.muli %415, %c8_i32_107 : i32
    %417 = tpu.assume_multiple %416, 8 : i32
    %418 = arith.index_cast %417 : i32 to index
    %c0_108 = arith.constant 0 : index
    %419 = vector.load %arg15[%418, %c0_108] : memref<48x32xf32, #tpu.memory_space<vmem>>, vector<8x32xf32>
    tpu.vector_store %arg15[%418, %c0_108], %413 {strides = array<i32>} : memref<48x32xf32, #tpu.memory_space<vmem>>, vector<8x32xf32>,
    %c1_i32_109 = arith.constant 1 : i32
    %420 = arith.cmpi sge, %c4_i32, %c1_i32_109 : i32
    %421 = arith.select %420, %395, %340 : vector<8x32xf32>
    %c2_i32_110 = arith.constant 2 : i32
    %422 = arith.cmpi sge, %c4_i32, %c2_i32_110 : i32
    %423 = arith.select %422, %413, %342 : vector<8x32xf32>
    %c5_i32_111 = arith.constant 5 : i32
    %c5_i32_112 = arith.constant 5 : i32
    %424 = arith.minsi %c5_i32_111, %c5_i32_112 : i32
    %c8_i32_113 = arith.constant 8 : i32
    %425 = arith.muli %424, %c8_i32_113 : i32
    %426 = tpu.assume_multiple %425, 8 : i32
    %427 = arith.index_cast %426 : i32 to index
    %c0_114 = arith.constant 0 : index
    %428 = vector.load %arg14[%427, %c0_114] : memref<48x128xf32, #tpu.memory_space<vmem>>, vector<8x128xf32>
    %cst_115 = arith.constant dense<0.000000e+00> : vector<8x256xf32>
    %429 = tpu.matmul %377, %0, %cst_115 {dimension_numbers = #tpu.dot_dimension_numbers<[1], [0], [0], [1], [0, 0, 1, 1], [], []>} : vector<8x32xf32>, vector<32x256xf32>, vector<8x256xf32> -> vector<8x256xf32>
    %cst_116 = arith.constant dense<0.000000e+00> : vector<8x256xf32>
    %430 = tpu.matmul %421, %1, %cst_116 {dimension_numbers = #tpu.dot_dimension_numbers<[1], [0], [0], [1], [0, 0, 1, 1], [], []>} : vector<8x32xf32>, vector<32x256xf32>, vector<8x256xf32> -> vector<8x256xf32>
    %cst_117 = arith.constant dense<0.000000e+00> : vector<8x128xf32>
    %431 = tpu.matmul %423, %2, %cst_117 {dimension_numbers = #tpu.dot_dimension_numbers<[1], [0], [0], [1], [0, 0, 1, 1], [], []>} : vector<8x32xf32>, vector<32x128xf32>, vector<8x128xf32> -> vector<8x128xf32>
    %432 = vector.extract_strided_slice %429 {offsets = [0, 0], sizes = [8, 128], strides = [1, 1]} : vector<8x256xf32> to vector<8x128xf32>
    %433 = arith.addf %428, %432 : vector<8x128xf32>
    %434 = vector.extract_strided_slice %429 {offsets = [0, 128], sizes = [8, 128], strides = [1, 1]} : vector<8x256xf32> to vector<8x128xf32>
    %435 = vector.extract_strided_slice %430 {offsets = [0, 0], sizes = [8, 128], strides = [1, 1]} : vector<8x256xf32> to vector<8x128xf32>
    %436 = arith.addf %434, %435 : vector<8x128xf32>
    %437 = arith.addf %436, %5 : vector<8x128xf32>
    %438 = vector.extract_strided_slice %430 {offsets = [0, 128], sizes = [8, 128], strides = [1, 1]} : vector<8x256xf32> to vector<8x128xf32>
    %439 = arith.addf %438, %431 : vector<8x128xf32>
    %440 = arith.addf %439, %8 : vector<8x128xf32>
    %441 = vector.extract_strided_slice %433 {offsets = [0, 0], sizes = [8, 64], strides = [1, 1]} : vector<8x128xf32> to vector<8x64xf32>
    %442 = arith.negf %441 : vector<8x64xf32>
    %443 = math.exp %442 : vector<8x64xf32>
    %cst_118 = arith.constant 1.000000e+00 : f32
    %444 = vector.broadcast %cst_118 : f32 to vector<8x64xf32>
    %445 = arith.addf %444, %443 : vector<8x64xf32>
    %446 = arith.divf %444, %445 : vector<8x64xf32>
    %447 = vector.extract_strided_slice %446 {offsets = [0, 0], sizes = [8, 32], strides = [1, 1]} : vector<8x64xf32> to vector<8x32xf32>
    %448 = vector.extract_strided_slice %446 {offsets = [0, 32], sizes = [8, 32], strides = [1, 1]} : vector<8x64xf32> to vector<8x32xf32>
    %449 = vector.extract_strided_slice %433 {offsets = [0, 64], sizes = [8, 32], strides = [1, 1]} : vector<8x128xf32> to vector<8x32xf32>
    %450 = vector.extract_strided_slice %433 {offsets = [0, 96], sizes = [8, 32], strides = [1, 1]} : vector<8x128xf32> to vector<8x32xf32>
    %451 = arith.mulf %447, %450 : vector<8x32xf32>
    %452 = arith.addf %449, %451 : vector<8x32xf32>
    %453 = math.tanh %452 : vector<8x32xf32>
    %cst_119 = arith.constant 1.000000e+00 : f32
    %454 = vector.broadcast %cst_119 : f32 to vector<8x32xf32>
    %455 = arith.subf %454, %448 : vector<8x32xf32>
    %456 = arith.mulf %455, %453 : vector<8x32xf32>
    %457 = arith.mulf %448, %377 : vector<8x32xf32>
    %458 = arith.addf %456, %457 : vector<8x32xf32>
    %459 = vector.extract_strided_slice %437 {offsets = [0, 0], sizes = [8, 64], strides = [1, 1]} : vector<8x128xf32> to vector<8x64xf32>
    %460 = arith.negf %459 : vector<8x64xf32>
    %461 = math.exp %460 : vector<8x64xf32>
    %cst_120 = arith.constant 1.000000e+00 : f32
    %462 = vector.broadcast %cst_120 : f32 to vector<8x64xf32>
    %463 = arith.addf %462, %461 : vector<8x64xf32>
    %464 = arith.divf %462, %463 : vector<8x64xf32>
    %465 = vector.extract_strided_slice %464 {offsets = [0, 0], sizes = [8, 32], strides = [1, 1]} : vector<8x64xf32> to vector<8x32xf32>
    %466 = vector.extract_strided_slice %464 {offsets = [0, 32], sizes = [8, 32], strides = [1, 1]} : vector<8x64xf32> to vector<8x32xf32>
    %467 = vector.extract_strided_slice %437 {offsets = [0, 64], sizes = [8, 32], strides = [1, 1]} : vector<8x128xf32> to vector<8x32xf32>
    %468 = vector.extract_strided_slice %437 {offsets = [0, 96], sizes = [8, 32], strides = [1, 1]} : vector<8x128xf32> to vector<8x32xf32>
    %469 = arith.mulf %465, %468 : vector<8x32xf32>
    %470 = arith.addf %467, %469 : vector<8x32xf32>
    %471 = math.tanh %470 : vector<8x32xf32>
    %cst_121 = arith.constant 1.000000e+00 : f32
    %472 = vector.broadcast %cst_121 : f32 to vector<8x32xf32>
    %473 = arith.subf %472, %466 : vector<8x32xf32>
    %474 = arith.mulf %473, %471 : vector<8x32xf32>
    %475 = arith.mulf %466, %421 : vector<8x32xf32>
    %476 = arith.addf %474, %475 : vector<8x32xf32>
    %477 = vector.extract_strided_slice %440 {offsets = [0, 0], sizes = [8, 64], strides = [1, 1]} : vector<8x128xf32> to vector<8x64xf32>
    %478 = arith.negf %477 : vector<8x64xf32>
    %479 = math.exp %478 : vector<8x64xf32>
    %cst_122 = arith.constant 1.000000e+00 : f32
    %480 = vector.broadcast %cst_122 : f32 to vector<8x64xf32>
    %481 = arith.addf %480, %479 : vector<8x64xf32>
    %482 = arith.divf %480, %481 : vector<8x64xf32>
    %483 = vector.extract_strided_slice %482 {offsets = [0, 0], sizes = [8, 32], strides = [1, 1]} : vector<8x64xf32> to vector<8x32xf32>
    %484 = vector.extract_strided_slice %482 {offsets = [0, 32], sizes = [8, 32], strides = [1, 1]} : vector<8x64xf32> to vector<8x32xf32>
    %485 = vector.extract_strided_slice %440 {offsets = [0, 64], sizes = [8, 32], strides = [1, 1]} : vector<8x128xf32> to vector<8x32xf32>
    %486 = vector.extract_strided_slice %440 {offsets = [0, 96], sizes = [8, 32], strides = [1, 1]} : vector<8x128xf32> to vector<8x32xf32>
    %487 = arith.mulf %483, %486 : vector<8x32xf32>
    %488 = arith.addf %485, %487 : vector<8x32xf32>
    %489 = math.tanh %488 : vector<8x32xf32>
    %cst_123 = arith.constant 1.000000e+00 : f32
    %490 = vector.broadcast %cst_123 : f32 to vector<8x32xf32>
    %491 = arith.subf %490, %484 : vector<8x32xf32>
    %492 = arith.mulf %491, %489 : vector<8x32xf32>
    %493 = arith.mulf %484, %423 : vector<8x32xf32>
    %494 = arith.addf %492, %493 : vector<8x32xf32>
    %c2_i32_124 = arith.constant 2 : i32
    %495 = arith.subi %c5_i32_111, %c2_i32_124 : i32
    %c0_i32_125 = arith.constant 0 : i32
    %496 = arith.maxsi %495, %c0_i32_125 : i32
    %c8_i32_126 = arith.constant 8 : i32
    %497 = arith.muli %496, %c8_i32_126 : i32
    %498 = tpu.assume_multiple %497, 8 : i32
    %499 = arith.index_cast %498 : i32 to index
    %c0_127 = arith.constant 0 : index
    %500 = vector.load %arg15[%499, %c0_127] : memref<48x32xf32, #tpu.memory_space<vmem>>, vector<8x32xf32>
    tpu.vector_store %arg15[%499, %c0_127], %494 {strides = array<i32>} : memref<48x32xf32, #tpu.memory_space<vmem>>, vector<8x32xf32>,
    %c1_i32_128 = arith.constant 1 : i32
    %501 = arith.cmpi sge, %c5_i32_111, %c1_i32_128 : i32
    %502 = arith.select %501, %476, %421 : vector<8x32xf32>
    %c2_i32_129 = arith.constant 2 : i32
    %503 = arith.cmpi sge, %c5_i32_111, %c2_i32_129 : i32
    %504 = arith.select %503, %494, %423 : vector<8x32xf32>
    %c6_i32 = arith.constant 6 : i32
    %c5_i32_130 = arith.constant 5 : i32
    %505 = arith.minsi %c6_i32, %c5_i32_130 : i32
    %c8_i32_131 = arith.constant 8 : i32
    %506 = arith.muli %505, %c8_i32_131 : i32
    %507 = tpu.assume_multiple %506, 8 : i32
    %508 = arith.index_cast %507 : i32 to index
    %c0_132 = arith.constant 0 : index
    %509 = vector.load %arg14[%508, %c0_132] : memref<48x128xf32, #tpu.memory_space<vmem>>, vector<8x128xf32>
    %cst_133 = arith.constant dense<0.000000e+00> : vector<8x256xf32>
    %510 = tpu.matmul %458, %0, %cst_133 {dimension_numbers = #tpu.dot_dimension_numbers<[1], [0], [0], [1], [0, 0, 1, 1], [], []>} : vector<8x32xf32>, vector<32x256xf32>, vector<8x256xf32> -> vector<8x256xf32>
    %cst_134 = arith.constant dense<0.000000e+00> : vector<8x256xf32>
    %511 = tpu.matmul %502, %1, %cst_134 {dimension_numbers = #tpu.dot_dimension_numbers<[1], [0], [0], [1], [0, 0, 1, 1], [], []>} : vector<8x32xf32>, vector<32x256xf32>, vector<8x256xf32> -> vector<8x256xf32>
    %cst_135 = arith.constant dense<0.000000e+00> : vector<8x128xf32>
    %512 = tpu.matmul %504, %2, %cst_135 {dimension_numbers = #tpu.dot_dimension_numbers<[1], [0], [0], [1], [0, 0, 1, 1], [], []>} : vector<8x32xf32>, vector<32x128xf32>, vector<8x128xf32> -> vector<8x128xf32>
    %513 = vector.extract_strided_slice %510 {offsets = [0, 0], sizes = [8, 128], strides = [1, 1]} : vector<8x256xf32> to vector<8x128xf32>
    %514 = arith.addf %509, %513 : vector<8x128xf32>
    %515 = vector.extract_strided_slice %510 {offsets = [0, 128], sizes = [8, 128], strides = [1, 1]} : vector<8x256xf32> to vector<8x128xf32>
    %516 = vector.extract_strided_slice %511 {offsets = [0, 0], sizes = [8, 128], strides = [1, 1]} : vector<8x256xf32> to vector<8x128xf32>
    %517 = arith.addf %515, %516 : vector<8x128xf32>
    %518 = arith.addf %517, %5 : vector<8x128xf32>
    %519 = vector.extract_strided_slice %511 {offsets = [0, 128], sizes = [8, 128], strides = [1, 1]} : vector<8x256xf32> to vector<8x128xf32>
    %520 = arith.addf %519, %512 : vector<8x128xf32>
    %521 = arith.addf %520, %8 : vector<8x128xf32>
    %522 = vector.extract_strided_slice %514 {offsets = [0, 0], sizes = [8, 64], strides = [1, 1]} : vector<8x128xf32> to vector<8x64xf32>
    %523 = arith.negf %522 : vector<8x64xf32>
    %524 = math.exp %523 : vector<8x64xf32>
    %cst_136 = arith.constant 1.000000e+00 : f32
    %525 = vector.broadcast %cst_136 : f32 to vector<8x64xf32>
    %526 = arith.addf %525, %524 : vector<8x64xf32>
    %527 = arith.divf %525, %526 : vector<8x64xf32>
    %528 = vector.extract_strided_slice %527 {offsets = [0, 0], sizes = [8, 32], strides = [1, 1]} : vector<8x64xf32> to vector<8x32xf32>
    %529 = vector.extract_strided_slice %527 {offsets = [0, 32], sizes = [8, 32], strides = [1, 1]} : vector<8x64xf32> to vector<8x32xf32>
    %530 = vector.extract_strided_slice %514 {offsets = [0, 64], sizes = [8, 32], strides = [1, 1]} : vector<8x128xf32> to vector<8x32xf32>
    %531 = vector.extract_strided_slice %514 {offsets = [0, 96], sizes = [8, 32], strides = [1, 1]} : vector<8x128xf32> to vector<8x32xf32>
    %532 = arith.mulf %528, %531 : vector<8x32xf32>
    %533 = arith.addf %530, %532 : vector<8x32xf32>
    %534 = math.tanh %533 : vector<8x32xf32>
    %cst_137 = arith.constant 1.000000e+00 : f32
    %535 = vector.broadcast %cst_137 : f32 to vector<8x32xf32>
    %536 = arith.subf %535, %529 : vector<8x32xf32>
    %537 = arith.mulf %536, %534 : vector<8x32xf32>
    %538 = arith.mulf %529, %458 : vector<8x32xf32>
    %539 = arith.addf %537, %538 : vector<8x32xf32>
    %540 = vector.extract_strided_slice %518 {offsets = [0, 0], sizes = [8, 64], strides = [1, 1]} : vector<8x128xf32> to vector<8x64xf32>
    %541 = arith.negf %540 : vector<8x64xf32>
    %542 = math.exp %541 : vector<8x64xf32>
    %cst_138 = arith.constant 1.000000e+00 : f32
    %543 = vector.broadcast %cst_138 : f32 to vector<8x64xf32>
    %544 = arith.addf %543, %542 : vector<8x64xf32>
    %545 = arith.divf %543, %544 : vector<8x64xf32>
    %546 = vector.extract_strided_slice %545 {offsets = [0, 0], sizes = [8, 32], strides = [1, 1]} : vector<8x64xf32> to vector<8x32xf32>
    %547 = vector.extract_strided_slice %545 {offsets = [0, 32], sizes = [8, 32], strides = [1, 1]} : vector<8x64xf32> to vector<8x32xf32>
    %548 = vector.extract_strided_slice %518 {offsets = [0, 64], sizes = [8, 32], strides = [1, 1]} : vector<8x128xf32> to vector<8x32xf32>
    %549 = vector.extract_strided_slice %518 {offsets = [0, 96], sizes = [8, 32], strides = [1, 1]} : vector<8x128xf32> to vector<8x32xf32>
    %550 = arith.mulf %546, %549 : vector<8x32xf32>
    %551 = arith.addf %548, %550 : vector<8x32xf32>
    %552 = math.tanh %551 : vector<8x32xf32>
    %cst_139 = arith.constant 1.000000e+00 : f32
    %553 = vector.broadcast %cst_139 : f32 to vector<8x32xf32>
    %554 = arith.subf %553, %547 : vector<8x32xf32>
    %555 = arith.mulf %554, %552 : vector<8x32xf32>
    %556 = arith.mulf %547, %502 : vector<8x32xf32>
    %557 = arith.addf %555, %556 : vector<8x32xf32>
    %558 = vector.extract_strided_slice %521 {offsets = [0, 0], sizes = [8, 64], strides = [1, 1]} : vector<8x128xf32> to vector<8x64xf32>
    %559 = arith.negf %558 : vector<8x64xf32>
    %560 = math.exp %559 : vector<8x64xf32>
    %cst_140 = arith.constant 1.000000e+00 : f32
    %561 = vector.broadcast %cst_140 : f32 to vector<8x64xf32>
    %562 = arith.addf %561, %560 : vector<8x64xf32>
    %563 = arith.divf %561, %562 : vector<8x64xf32>
    %564 = vector.extract_strided_slice %563 {offsets = [0, 0], sizes = [8, 32], strides = [1, 1]} : vector<8x64xf32> to vector<8x32xf32>
    %565 = vector.extract_strided_slice %563 {offsets = [0, 32], sizes = [8, 32], strides = [1, 1]} : vector<8x64xf32> to vector<8x32xf32>
    %566 = vector.extract_strided_slice %521 {offsets = [0, 64], sizes = [8, 32], strides = [1, 1]} : vector<8x128xf32> to vector<8x32xf32>
    %567 = vector.extract_strided_slice %521 {offsets = [0, 96], sizes = [8, 32], strides = [1, 1]} : vector<8x128xf32> to vector<8x32xf32>
    %568 = arith.mulf %564, %567 : vector<8x32xf32>
    %569 = arith.addf %566, %568 : vector<8x32xf32>
    %570 = math.tanh %569 : vector<8x32xf32>
    %cst_141 = arith.constant 1.000000e+00 : f32
    %571 = vector.broadcast %cst_141 : f32 to vector<8x32xf32>
    %572 = arith.subf %571, %565 : vector<8x32xf32>
    %573 = arith.mulf %572, %570 : vector<8x32xf32>
    %574 = arith.mulf %565, %504 : vector<8x32xf32>
    %575 = arith.addf %573, %574 : vector<8x32xf32>
    %c2_i32_142 = arith.constant 2 : i32
    %576 = arith.subi %c6_i32, %c2_i32_142 : i32
    %c0_i32_143 = arith.constant 0 : i32
    %577 = arith.maxsi %576, %c0_i32_143 : i32
    %c8_i32_144 = arith.constant 8 : i32
    %578 = arith.muli %577, %c8_i32_144 : i32
    %579 = tpu.assume_multiple %578, 8 : i32
    %580 = arith.index_cast %579 : i32 to index
    %c0_145 = arith.constant 0 : index
    %581 = vector.load %arg15[%580, %c0_145] : memref<48x32xf32, #tpu.memory_space<vmem>>, vector<8x32xf32>
    tpu.vector_store %arg15[%580, %c0_145], %575 {strides = array<i32>} : memref<48x32xf32, #tpu.memory_space<vmem>>, vector<8x32xf32>,
    %c1_i32_146 = arith.constant 1 : i32
    %582 = arith.cmpi sge, %c6_i32, %c1_i32_146 : i32
    %583 = arith.select %582, %557, %502 : vector<8x32xf32>
    %c2_i32_147 = arith.constant 2 : i32
    %584 = arith.cmpi sge, %c6_i32, %c2_i32_147 : i32
    %585 = arith.select %584, %575, %504 : vector<8x32xf32>
    %c7_i32 = arith.constant 7 : i32
    %c5_i32_148 = arith.constant 5 : i32
    %586 = arith.minsi %c7_i32, %c5_i32_148 : i32
    %c8_i32_149 = arith.constant 8 : i32
    %587 = arith.muli %586, %c8_i32_149 : i32
    %588 = tpu.assume_multiple %587, 8 : i32
    %589 = arith.index_cast %588 : i32 to index
    %c0_150 = arith.constant 0 : index
    %590 = vector.load %arg14[%589, %c0_150] : memref<48x128xf32, #tpu.memory_space<vmem>>, vector<8x128xf32>
    %cst_151 = arith.constant dense<0.000000e+00> : vector<8x256xf32>
    %591 = tpu.matmul %539, %0, %cst_151 {dimension_numbers = #tpu.dot_dimension_numbers<[1], [0], [0], [1], [0, 0, 1, 1], [], []>} : vector<8x32xf32>, vector<32x256xf32>, vector<8x256xf32> -> vector<8x256xf32>
    %cst_152 = arith.constant dense<0.000000e+00> : vector<8x256xf32>
    %592 = tpu.matmul %583, %1, %cst_152 {dimension_numbers = #tpu.dot_dimension_numbers<[1], [0], [0], [1], [0, 0, 1, 1], [], []>} : vector<8x32xf32>, vector<32x256xf32>, vector<8x256xf32> -> vector<8x256xf32>
    %cst_153 = arith.constant dense<0.000000e+00> : vector<8x128xf32>
    %593 = tpu.matmul %585, %2, %cst_153 {dimension_numbers = #tpu.dot_dimension_numbers<[1], [0], [0], [1], [0, 0, 1, 1], [], []>} : vector<8x32xf32>, vector<32x128xf32>, vector<8x128xf32> -> vector<8x128xf32>
    %594 = vector.extract_strided_slice %591 {offsets = [0, 0], sizes = [8, 128], strides = [1, 1]} : vector<8x256xf32> to vector<8x128xf32>
    %595 = arith.addf %590, %594 : vector<8x128xf32>
    %596 = vector.extract_strided_slice %591 {offsets = [0, 128], sizes = [8, 128], strides = [1, 1]} : vector<8x256xf32> to vector<8x128xf32>
    %597 = vector.extract_strided_slice %592 {offsets = [0, 0], sizes = [8, 128], strides = [1, 1]} : vector<8x256xf32> to vector<8x128xf32>
    %598 = arith.addf %596, %597 : vector<8x128xf32>
    %599 = arith.addf %598, %5 : vector<8x128xf32>
    %600 = vector.extract_strided_slice %592 {offsets = [0, 128], sizes = [8, 128], strides = [1, 1]} : vector<8x256xf32> to vector<8x128xf32>
    %601 = arith.addf %600, %593 : vector<8x128xf32>
    %602 = arith.addf %601, %8 : vector<8x128xf32>
    %603 = vector.extract_strided_slice %595 {offsets = [0, 0], sizes = [8, 64], strides = [1, 1]} : vector<8x128xf32> to vector<8x64xf32>
    %604 = arith.negf %603 : vector<8x64xf32>
    %605 = math.exp %604 : vector<8x64xf32>
    %cst_154 = arith.constant 1.000000e+00 : f32
    %606 = vector.broadcast %cst_154 : f32 to vector<8x64xf32>
    %607 = arith.addf %606, %605 : vector<8x64xf32>
    %608 = arith.divf %606, %607 : vector<8x64xf32>
    %609 = vector.extract_strided_slice %608 {offsets = [0, 0], sizes = [8, 32], strides = [1, 1]} : vector<8x64xf32> to vector<8x32xf32>
    %610 = vector.extract_strided_slice %608 {offsets = [0, 32], sizes = [8, 32], strides = [1, 1]} : vector<8x64xf32> to vector<8x32xf32>
    %611 = vector.extract_strided_slice %595 {offsets = [0, 64], sizes = [8, 32], strides = [1, 1]} : vector<8x128xf32> to vector<8x32xf32>
    %612 = vector.extract_strided_slice %595 {offsets = [0, 96], sizes = [8, 32], strides = [1, 1]} : vector<8x128xf32> to vector<8x32xf32>
    %613 = arith.mulf %609, %612 : vector<8x32xf32>
    %614 = arith.addf %611, %613 : vector<8x32xf32>
    %615 = math.tanh %614 : vector<8x32xf32>
    %cst_155 = arith.constant 1.000000e+00 : f32
    %616 = vector.broadcast %cst_155 : f32 to vector<8x32xf32>
    %617 = arith.subf %616, %610 : vector<8x32xf32>
    %618 = arith.mulf %617, %615 : vector<8x32xf32>
    %619 = arith.mulf %610, %539 : vector<8x32xf32>
    %620 = arith.addf %618, %619 : vector<8x32xf32>
    %621 = vector.extract_strided_slice %599 {offsets = [0, 0], sizes = [8, 64], strides = [1, 1]} : vector<8x128xf32> to vector<8x64xf32>
    %622 = arith.negf %621 : vector<8x64xf32>
    %623 = math.exp %622 : vector<8x64xf32>
    %cst_156 = arith.constant 1.000000e+00 : f32
    %624 = vector.broadcast %cst_156 : f32 to vector<8x64xf32>
    %625 = arith.addf %624, %623 : vector<8x64xf32>
    %626 = arith.divf %624, %625 : vector<8x64xf32>
    %627 = vector.extract_strided_slice %626 {offsets = [0, 0], sizes = [8, 32], strides = [1, 1]} : vector<8x64xf32> to vector<8x32xf32>
    %628 = vector.extract_strided_slice %626 {offsets = [0, 32], sizes = [8, 32], strides = [1, 1]} : vector<8x64xf32> to vector<8x32xf32>
    %629 = vector.extract_strided_slice %599 {offsets = [0, 64], sizes = [8, 32], strides = [1, 1]} : vector<8x128xf32> to vector<8x32xf32>
    %630 = vector.extract_strided_slice %599 {offsets = [0, 96], sizes = [8, 32], strides = [1, 1]} : vector<8x128xf32> to vector<8x32xf32>
    %631 = arith.mulf %627, %630 : vector<8x32xf32>
    %632 = arith.addf %629, %631 : vector<8x32xf32>
    %633 = math.tanh %632 : vector<8x32xf32>
    %cst_157 = arith.constant 1.000000e+00 : f32
    %634 = vector.broadcast %cst_157 : f32 to vector<8x32xf32>
    %635 = arith.subf %634, %628 : vector<8x32xf32>
    %636 = arith.mulf %635, %633 : vector<8x32xf32>
    %637 = arith.mulf %628, %583 : vector<8x32xf32>
    %638 = arith.addf %636, %637 : vector<8x32xf32>
    %639 = vector.extract_strided_slice %602 {offsets = [0, 0], sizes = [8, 64], strides = [1, 1]} : vector<8x128xf32> to vector<8x64xf32>
    %640 = arith.negf %639 : vector<8x64xf32>
    %641 = math.exp %640 : vector<8x64xf32>
    %cst_158 = arith.constant 1.000000e+00 : f32
    %642 = vector.broadcast %cst_158 : f32 to vector<8x64xf32>
    %643 = arith.addf %642, %641 : vector<8x64xf32>
    %644 = arith.divf %642, %643 : vector<8x64xf32>
    %645 = vector.extract_strided_slice %644 {offsets = [0, 0], sizes = [8, 32], strides = [1, 1]} : vector<8x64xf32> to vector<8x32xf32>
    %646 = vector.extract_strided_slice %644 {offsets = [0, 32], sizes = [8, 32], strides = [1, 1]} : vector<8x64xf32> to vector<8x32xf32>
    %647 = vector.extract_strided_slice %602 {offsets = [0, 64], sizes = [8, 32], strides = [1, 1]} : vector<8x128xf32> to vector<8x32xf32>
    %648 = vector.extract_strided_slice %602 {offsets = [0, 96], sizes = [8, 32], strides = [1, 1]} : vector<8x128xf32> to vector<8x32xf32>
    %649 = arith.mulf %645, %648 : vector<8x32xf32>
    %650 = arith.addf %647, %649 : vector<8x32xf32>
    %651 = math.tanh %650 : vector<8x32xf32>
    %cst_159 = arith.constant 1.000000e+00 : f32
    %652 = vector.broadcast %cst_159 : f32 to vector<8x32xf32>
    %653 = arith.subf %652, %646 : vector<8x32xf32>
    %654 = arith.mulf %653, %651 : vector<8x32xf32>
    %655 = arith.mulf %646, %585 : vector<8x32xf32>
    %656 = arith.addf %654, %655 : vector<8x32xf32>
    %c2_i32_160 = arith.constant 2 : i32
    %657 = arith.subi %c7_i32, %c2_i32_160 : i32
    %c0_i32_161 = arith.constant 0 : i32
    %658 = arith.maxsi %657, %c0_i32_161 : i32
    %c8_i32_162 = arith.constant 8 : i32
    %659 = arith.muli %658, %c8_i32_162 : i32
    %660 = tpu.assume_multiple %659, 8 : i32
    %661 = arith.index_cast %660 : i32 to index
    %c0_163 = arith.constant 0 : index
    %662 = vector.load %arg15[%661, %c0_163] : memref<48x32xf32, #tpu.memory_space<vmem>>, vector<8x32xf32>
    tpu.vector_store %arg15[%661, %c0_163], %656 {strides = array<i32>} : memref<48x32xf32, #tpu.memory_space<vmem>>, vector<8x32xf32>,
    %c1_i32_164 = arith.constant 1 : i32
    %663 = arith.cmpi sge, %c7_i32, %c1_i32_164 : i32
    %664 = arith.select %663, %638, %583 : vector<8x32xf32>
    %c2_i32_165 = arith.constant 2 : i32
    %665 = arith.cmpi sge, %c7_i32, %c2_i32_165 : i32
    %666 = arith.select %665, %656, %585 : vector<8x32xf32>
    %c8_i32_166 = arith.constant 8 : i32
    %c0_167 = arith.constant 0 : index
    %c0_168 = arith.constant 0 : index
    %667 = vector.load %arg15[%c0_167, %c0_168] : memref<48x32xf32, #tpu.memory_space<vmem>>, vector<48x32xf32>
    %c0_169 = arith.constant 0 : index
    %c0_170 = arith.constant 0 : index
    %668 = vector.load %arg11[%c0_169, %c0_170] : memref<32x128xf32, #tpu.memory_space<vmem>>, vector<32x128xf32>
    %cst_171 = arith.constant dense<0.000000e+00> : vector<48x128xf32>
    %669 = tpu.matmul %667, %668, %cst_171 {dimension_numbers = #tpu.dot_dimension_numbers<[1], [0], [0], [1], [0, 0, 1, 1], [], []>} : vector<48x32xf32>, vector<32x128xf32>, vector<48x128xf32> -> vector<48x128xf32>
    %c0_172 = arith.constant 0 : index
    %c0_173 = arith.constant 0 : index
    %670 = vector.load %arg12[%c0_172, %c0_173] : memref<1x128xf32, #tpu.memory_space<vmem>>, vector<1x128xf32>
    %671 = vector.broadcast %670 : vector<1x128xf32> to vector<48x128xf32>
    %672 = arith.addf %669, %671 : vector<48x128xf32>
    %cst_174 = arith.constant dense<0xFF800000> : vector<48xf32>
    %673 = vector.multi_reduction <maximumf>, %672, %cst_174 [1] : vector<48x128xf32> to vector<48xf32>
    %674 = vector.shape_cast %673 : vector<48xf32> to vector<48x1xf32>
    %675 = vector.broadcast %674 : vector<48x1xf32> to vector<48x128xf32>
    %676 = arith.subf %672, %675 : vector<48x128xf32>
    %677 = math.exp %676 : vector<48x128xf32>
    %cst_175 = arith.constant dense<0.000000e+00> : vector<48xf32>
    %678 = vector.multi_reduction <add>, %677, %cst_175 [1] : vector<48x128xf32> to vector<48xf32>
    %679 = vector.shape_cast %678 : vector<48xf32> to vector<48x1xf32>
    %680 = tpu.reciprocal %679 : vector<48x1xf32> -> vector<48x1xf32>
    %681 = vector.broadcast %680 : vector<48x1xf32> to vector<48x128xf32>
    %682 = arith.mulf %677, %681 : vector<48x128xf32>
    %c0_176 = arith.constant 0 : index
    %c0_177 = arith.constant 0 : index
    %683 = vector.load %arg13[%c0_176, %c0_177] : memref<48x128xf32, #tpu.memory_space<vmem>>, vector<48x128xf32>
    tpu.vector_store %arg13[%c0_176, %c0_177], %682 {strides = array<i32>} : memref<48x128xf32, #tpu.memory_space<vmem>>, vector<48x128xf32>,
    return
  }
}

</mosaic_0001>

<llo_original>
// kernel: tpu_custom_call.1
$region0: #{tpu_custom_call.1}
  #allocation0 [shape = 'u32[]', space=smem, size = 0x4, offset = 0x4, fixed_abs, tag = 'smem constant byte address 0x4 - core index']
  #allocation1 [shape = 'u32[144,128]{1,0:T(1,128)}', space=vmem, size = 0x12000, scoped, tag = 'internal scratch']
  #allocation2 [shape = 'f32[48,128]{1,0:T(8,128)}', space=vmem, size = 0x6000, scoped, tag = 'scratch operand']
  #allocation3 [shape = 'f32[48,32]{1,0:T(8,128)}', space=vmem, size = 0x6000, scoped, tag = 'scratch operand']
  %s0 = inlined_call_operand.vmem [shape: f32[48,8], index: 0, kind: input, shape index: {}]
  %s1 = inlined_call_operand.hbm [shape: f32[8,32], index: 1, kind: input, shape index: {}]
  %s2 = inlined_call_operand.hbm [shape: f32[8,32], index: 2, kind: input, shape index: {}]
  %s3 = inlined_call_operand.hbm [shape: f32[8,32], index: 3, kind: input, shape index: {}]
  %s4 = inlined_call_operand.hbm [shape: f32[8,128], index: 4, kind: input, shape index: {}]
  %s5 = inlined_call_operand.vmem [shape: f32[1,128], index: 5, kind: input, shape index: {}]
  %s6 = inlined_call_operand.vmem [shape: f32[32,256], index: 6, kind: input, shape index: {}]
  %s7 = inlined_call_operand.hbm [shape: f32[32,256], index: 7, kind: input, shape index: {}]
  %s8 = inlined_call_operand.hbm [shape: f32[32,128], index: 8, kind: input, shape index: {}]
  %s9 = inlined_call_operand.hbm [shape: f32[1,128], index: 9, kind: input, shape index: {}]
  %s10 = inlined_call_operand.hbm [shape: f32[1,128], index: 10, kind: input, shape index: {}]
  %s11 = inlined_call_operand.vmem [shape: f32[32,128], index: 11, kind: input, shape index: {}]
  %s12 = inlined_call_operand.vmem [shape: f32[1,128], index: 12, kind: input, shape index: {}]
  %s13 = inlined_call_operand.hbm [shape: f32[48,128], index: 13, kind: output, shape index: {}]
  %s14 = sld [smem:[#allocation0]]
  $region94: #{tpu_custom_call.1} parent=0
    _
  %s16 = ssub.s32 1, %s14
  %s17 = scalar_select 0, %s16, %s14
  $region1: #{tpu_custom_call.1} parent=0
    #allocation4 [shape = 'u8[4096]{0}', space=vmem, size = 0x1000, scoped, tag = 'input window, operand 1, single buffered']
    #allocation5 [shape = 's32[1]{0}', space=sflag, size = 0x4, scoped, tag = 'scoped memory for tpu_custom_call.1']
    #allocation6 [shape = 's32[1]{0}', space=sflag, size = 0x4, scoped, tag = 'scoped memory for tpu_custom_call.1']
    #allocation7 [shape = 'u8[4096]{0}', space=vmem, size = 0x1000, scoped, tag = 'input window, operand 2, single buffered']
    #allocation8 [shape = 's32[1]{0}', space=sflag, size = 0x4, scoped, tag = 'scoped memory for tpu_custom_call.1']
    #allocation9 [shape = 'u8[4096]{0}', space=vmem, size = 0x1000, scoped, tag = 'input window, operand 3, single buffered']
    #allocation10 [shape = 'u8[4096]{0}', space=vmem, size = 0x1000, scoped, tag = 'input window, operand 4, single buffered']
    #allocation11 [shape = 's32[1]{0}', space=sflag, size = 0x4, scoped, tag = 'scoped memory for tpu_custom_call.1']
    #allocation12 [shape = 'u8[32768]{0}', space=vmem, size = 0x8000, scoped, tag = 'input window, operand 7, single buffered']
    #allocation13 [shape = 'u8[16384]{0}', space=vmem, size = 0x4000, scoped, tag = 'input window, operand 8, single buffered']
    #allocation14 [shape = 's32[1]{0}', space=sflag, size = 0x4, scoped, tag = 'scoped memory for tpu_custom_call.1']
    #allocation15 [shape = 'u8[512]{0}', space=vmem, size = 0x400, scoped, tag = 'input window, operand 9, single buffered']
    #allocation16 [shape = 'u8[512]{0}', space=vmem, size = 0x400, scoped, tag = 'input window, operand 10, single buffered']
    #allocation17 [shape = 's32[1]{0}', space=sflag, size = 0x4, scoped, tag = 'scoped memory for tpu_custom_call.1']
    #allocation18 [shape = 'u8[24576]{0}', space=vmem, size = 0x6000, scoped, tag = 'output window, operand 0, single buffered']
    %18 = vsyncpa [#allocation5], 0
    %19 = vsyncpa [#allocation8], 0
    %20 = vsyncpa [#allocation11], 0
    %21 = vsyncpa [#allocation14], 0
    %22 = vsyncpa [#allocation17], 0
    %23 = vsyncpa [#allocation6], 0
    // Predicated region
    $region2: #{tpu_custom_call.1} parent=1 // pred_check
      _
    $region3: #{tpu_custom_call.1} parent=1 // pred_check_branch
      %25 = sbr.rel (0) target = $region5
    $region4: #{tpu_custom_call.1} parent=1 // pred_region
      _
    $region5: #{tpu_custom_call.1} parent=1 // pred_fallthru
      _
    // Predicated region
    $region6: #{tpu_custom_call.1} parent=1 // pred_check
      _
    $region7: #{tpu_custom_call.1} parent=1 // pred_check_branch
      %27 = sbr.rel (0) target = $region9
    $region8: #{tpu_custom_call.1} parent=1 // pred_region
      %s29 = ssub.s32 128, 128
      %30 = vsyncadd [#allocation5], %s29
      %s32 = sshll.u32 [#allocation4], 4
      %s33 = int_to_ptr.vmem [resolvable:$true] %s32
      %35 = dma.hbm_to_vmem [thread:$0]  %s1, 128, %s33, [#allocation5]
    $region9: #{tpu_custom_call.1} parent=1 // pred_fallthru
      _
    // Predicated region
    $region10: #{tpu_custom_call.1} parent=1 // pred_check
      _
    $region11: #{tpu_custom_call.1} parent=1 // pred_check_branch
      %37 = sbr.rel (0) target = $region13
    $region12: #{tpu_custom_call.1} parent=1 // pred_region
      %s39 = ssub.s32 128, 128
      %40 = vsyncadd [#allocation8], %s39
      %s42 = sshll.u32 [#allocation7], 4
      %s43 = int_to_ptr.vmem [resolvable:$true] %s42
      %45 = dma.hbm_to_vmem [thread:$0]  %s2, 128, %s43, [#allocation8]
    $region13: #{tpu_custom_call.1} parent=1 // pred_fallthru
      _
    // Predicated region
    $region14: #{tpu_custom_call.1} parent=1 // pred_check
      _
    $region15: #{tpu_custom_call.1} parent=1 // pred_check_branch
      %47 = sbr.rel (0) target = $region17
    $region16: #{tpu_custom_call.1} parent=1 // pred_region
      %s49 = ssub.s32 128, 128
      %50 = vsyncadd [#allocation8], %s49
      %s52 = sshll.u32 [#allocation9], 4
      %s53 = int_to_ptr.vmem [resolvable:$true] %s52
      %55 = dma.hbm_to_vmem [thread:$0]  %s3, 128, %s53, [#allocation8]
    $region17: #{tpu_custom_call.1} parent=1 // pred_fallthru
      _
    // Predicated region
    $region18: #{tpu_custom_call.1} parent=1 // pred_check
      _
    $region19: #{tpu_custom_call.1} parent=1 // pred_check_branch
      %57 = sbr.rel (0) target = $region21
    $region20: #{tpu_custom_call.1} parent=1 // pred_region
      %s59 = ssub.s32 128, 128
      %60 = vsyncadd [#allocation11], %s59
      %s62 = sshll.u32 [#allocation10], 4
      %s63 = int_to_ptr.vmem [resolvable:$true] %s62
      %65 = dma.hbm_to_vmem [thread:$0]  %s4, 128, %s63, [#allocation11]
    $region21: #{tpu_custom_call.1} parent=1 // pred_fallthru
      _
    // Predicated region
    $region22: #{tpu_custom_call.1} parent=1 // pred_check
      _
    $region23: #{tpu_custom_call.1} parent=1 // pred_check_branch
      %67 = sbr.rel (0) target = $region25
    $region24: #{tpu_custom_call.1} parent=1 // pred_region
      _
    $region25: #{tpu_custom_call.1} parent=1 // pred_fallthru
      _
    // Predicated region
    $region26: #{tpu_custom_call.1} parent=1 // pred_check
      _
    $region27: #{tpu_custom_call.1} parent=1 // pred_check_branch
      %69 = sbr.rel (0) target = $region29
    $region28: #{tpu_custom_call.1} parent=1 // pred_region
      _
    $region29: #{tpu_custom_call.1} parent=1 // pred_fallthru
      _
    // Predicated region
    $region30: #{tpu_custom_call.1} parent=1 // pred_check
      _
    $region31: #{tpu_custom_call.1} parent=1 // pred_check_branch
      %71 = sbr.rel (0) target = $region33
    $region32: #{tpu_custom_call.1} parent=1 // pred_region
      %s73 = ssub.s32 1024, 1024
      %74 = vsyncadd [#allocation11], %s73
      %s75 = sshll.u32 [#allocation12], 4
      %s76 = int_to_ptr.vmem [resolvable:$true] %s75
      %81 = dma.hbm_to_vmem [thread:$0]  %s7, 1024, %s76, [#allocation11], 256, 256, 16
    $region33: #{tpu_custom_call.1} parent=1 // pred_fallthru
      _
    // Predicated region
    $region34: #{tpu_custom_call.1} parent=1 // pred_check
      _
    $region35: #{tpu_custom_call.1} parent=1 // pred_check_branch
      %83 = sbr.rel (0) target = $region37
    $region36: #{tpu_custom_call.1} parent=1 // pred_region
      %s85 = ssub.s32 512, 512
      %86 = vsyncadd [#allocation14], %s85
      %s87 = sshll.u32 [#allocation13], 4
      %s88 = int_to_ptr.vmem [resolvable:$true] %s87
      %93 = dma.hbm_to_vmem [thread:$0]  %s8, 512, %s88, [#allocation14], 128, 128, 8
    $region37: #{tpu_custom_call.1} parent=1 // pred_fallthru
      _
    // Predicated region
    $region38: #{tpu_custom_call.1} parent=1 // pred_check
      _
    $region39: #{tpu_custom_call.1} parent=1 // pred_check_branch
      %95 = sbr.rel (0) target = $region41
    $region40: #{tpu_custom_call.1} parent=1 // pred_region
      %s97 = ssub.s32 16, 16
      %98 = vsyncadd [#allocation14], %s97
      %s100 = sshll.u32 [#allocation15], 4
      %s101 = int_to_ptr.vmem [resolvable:$true] %s100
      %103 = dma.hbm_to_vmem [thread:$0]  %s9, 16, %s101, [#allocation14]
    $region41: #{tpu_custom_call.1} parent=1 // pred_fallthru
      _
    // Predicated region
    $region42: #{tpu_custom_call.1} parent=1 // pred_check
      _
    $region43: #{tpu_custom_call.1} parent=1 // pred_check_branch
      %105 = sbr.rel (0) target = $region45
    $region44: #{tpu_custom_call.1} parent=1 // pred_region
      %s107 = ssub.s32 16, 16
      %108 = vsyncadd [#allocation17], %s107
      %s110 = sshll.u32 [#allocation16], 4
      %s111 = int_to_ptr.vmem [resolvable:$true] %s110
      %113 = dma.hbm_to_vmem [thread:$0]  %s10, 16, %s111, [#allocation17]
    $region45: #{tpu_custom_call.1} parent=1 // pred_fallthru
      _
    // Predicated region
    $region46: #{tpu_custom_call.1} parent=1 // pred_check
      _
    $region47: #{tpu_custom_call.1} parent=1 // pred_check_branch
      %115 = sbr.rel (0) target = $region49
    $region48: #{tpu_custom_call.1} parent=1 // pred_region
      _
    $region49: #{tpu_custom_call.1} parent=1 // pred_fallthru
      _
    // Predicated region
    $region50: #{tpu_custom_call.1} parent=1 // pred_check
      _
    $region51: #{tpu_custom_call.1} parent=1 // pred_check_branch
      %117 = sbr.rel (0) target = $region53
    $region52: #{tpu_custom_call.1} parent=1 // pred_region
      _
    $region53: #{tpu_custom_call.1} parent=1 // pred_fallthru
      _
    // Predicated region
    $region54: #{tpu_custom_call.1} parent=1 // pred_check
      _
    $region55: #{tpu_custom_call.1} parent=1 // pred_check_branch
      %119 = sbr.rel (0) target = $region57
    $region56: #{tpu_custom_call.1} parent=1 // pred_region
      %120 = dma.done [#allocation5], 128
    $region57: #{tpu_custom_call.1} parent=1 // pred_fallthru
      _
    // Predicated region
    $region58: #{tpu_custom_call.1} parent=1 // pred_check
      _
    $region59: #{tpu_custom_call.1} parent=1 // pred_check_branch
      %122 = sbr.rel (0) target = $region61
    $region60: #{tpu_custom_call.1} parent=1 // pred_region
      %123 = dma.done [#allocation8], 128
    $region61: #{tpu_custom_call.1} parent=1 // pred_fallthru
      _
    // Predicated region
    $region62: #{tpu_custom_call.1} parent=1 // pred_check
      _
    $region63: #{tpu_custom_call.1} parent=1 // pred_check_branch
      %125 = sbr.rel (0) target = $region65
    $region64: #{tpu_custom_call.1} parent=1 // pred_region
      %126 = dma.done [#allocation8], 128
    $region65: #{tpu_custom_call.1} parent=1 // pred_fallthru
      _
    // Predicated region
    $region66: #{tpu_custom_call.1} parent=1 // pred_check
      _
    $region67: #{tpu_custom_call.1} parent=1 // pred_check_branch
      %128 = sbr.rel (0) target = $region69
    $region68: #{tpu_custom_call.1} parent=1 // pred_region
      %129 = dma.done [#allocation11], 128
    $region69: #{tpu_custom_call.1} parent=1 // pred_fallthru
      _
    // Predicated region
    $region70: #{tpu_custom_call.1} parent=1 // pred_check
      _
    $region71: #{tpu_custom_call.1} parent=1 // pred_check_branch
      %131 = sbr.rel (0) target = $region73
    $region72: #{tpu_custom_call.1} parent=1 // pred_region
      %132 = dma.done [#allocation11], 1024
    $region73: #{tpu_custom_call.1} parent=1 // pred_fallthru
      _
    // Predicated region
    $region74: #{tpu_custom_call.1} parent=1 // pred_check
      _
    $region75: #{tpu_custom_call.1} parent=1 // pred_check_branch
      %134 = sbr.rel (0) target = $region77
    $region76: #{tpu_custom_call.1} parent=1 // pred_region
      %135 = dma.done [#allocation14], 512
    $region77: #{tpu_custom_call.1} parent=1 // pred_fallthru
      _
    // Predicated region
    $region78: #{tpu_custom_call.1} parent=1 // pred_check
      _
    $region79: #{tpu_custom_call.1} parent=1 // pred_check_branch
      %137 = sbr.rel (0) target = $region81
    $region80: #{tpu_custom_call.1} parent=1 // pred_region
      %138 = dma.done [#allocation14], 16
    $region81: #{tpu_custom_call.1} parent=1 // pred_fallthru
      _
    // Predicated region
    $region82: #{tpu_custom_call.1} parent=1 // pred_check
      _
    $region83: #{tpu_custom_call.1} parent=1 // pred_check_branch
      %140 = sbr.rel (0) target = $region85
    $region84: #{tpu_custom_call.1} parent=1 // pred_region
      %141 = dma.done [#allocation17], 16
    $region85: #{tpu_custom_call.1} parent=1 // pred_fallthru
      _
    %v142 = vld [vmem:[%s6] sm:$0xff]
    %v143 = vld [vmem:[%s6 + $0x8] sm:$0xff]
    %v144 = vld [vmem:[%s6 + $0x10] sm:$0xff]
    %v145 = vld [vmem:[%s6 + $0x18] sm:$0xff]
    %v146 = vld [vmem:[%s6 + $0x20] sm:$0xff]
    %v147 = vld [vmem:[%s6 + $0x28] sm:$0xff]
    %v148 = vld [vmem:[%s6 + $0x30] sm:$0xff]
    %v149 = vld [vmem:[%s6 + $0x38] sm:$0xff]
    %v150 = vld [vmem:[#allocation12] sm:$0xff]
    %v151 = vld [vmem:[#allocation12 + $0x8] sm:$0xff]
    %v152 = vld [vmem:[#allocation12 + $0x10] sm:$0xff]
    %v153 = vld [vmem:[#allocation12 + $0x18] sm:$0xff]
    %v154 = vld [vmem:[#allocation12 + $0x20] sm:$0xff]
    %v155 = vld [vmem:[#allocation12 + $0x28] sm:$0xff]
    %v156 = vld [vmem:[#allocation12 + $0x30] sm:$0xff]
    %v157 = vld [vmem:[#allocation12 + $0x38] sm:$0xff]
    %v158 = vld [vmem:[#allocation13] sm:$0xff]
    %v159 = vld [vmem:[#allocation13 + $0x8] sm:$0xff]
    %v160 = vld [vmem:[#allocation13 + $0x10] sm:$0xff]
    %v161 = vld [vmem:[#allocation13 + $0x18] sm:$0xff]
    %v162 = vld [vmem:[#allocation15] sm:$0x1]
    %v164 = vlaneseq
    %v165 = vshrl.u32 %v164, 7
    %v166 = vsub.s32 0, %v165
    %v167 = vrot.slane %v162, %v166
    %v169 = vld [vmem:[#allocation16] sm:$0x1]
    %v171 = vlaneseq
    %v172 = vshrl.u32 %v171, 7
    %v173 = vsub.s32 0, %v172
    %v174 = vrot.slane %v169, %v173
    %v176 = vld [vmem:[%s0] sm:$0xff]
    %v177 = vld [vmem:[%s0 + $0x8] sm:$0xff]
    %v178 = vld [vmem:[%s0 + $0x10] sm:$0xff]
    %v179 = vld [vmem:[%s0 + $0x18] sm:$0xff]
    %v180 = vld [vmem:[%s0 + $0x20] sm:$0xff]
    %v181 = vld [vmem:[%s0 + $0x28] sm:$0xff]
    %v182 = vld [vmem:[#allocation10] sm:$0xff]
    %v183 = vld [vmem:[%s5] sm:$0x1]
    %v185 = vlaneseq
    %v186 = vshrl.u32 %v185, 7
    %v187 = vsub.s32 0, %v186
    %v188 = vrot.slane %v183, %v187
    %vm190 = vcmask 64512
    %v192 = vsel %vm190, %v176, 0
    %v195 = vsel %vm190, %v177, 0
    %v198 = vsel %vm190, %v178, 0
    %v201 = vsel %vm190, %v179, 0
    %v204 = vsel %vm190, %v180, 0
    %v207 = vsel %vm190, %v181, 0
    %209 = vmatprep.subr.mxu0 0.0
    %210 = vmatpush1.msra.mxu0 %v182
    %211 = vmatprep.subr.mxu0 0.0
    %212 = vmatpush1.msra.mxu0 0.0
    %213 = vmatprep.subr.mxu0 0.0
    %214 = vmatpush1.msra.mxu0 0.0
    %215 = vmatprep.subr.mxu0 0.0
    %216 = vmatpush1.msra.mxu0 0.0
    %217 = vmatprep.subr.mxu0 0.0
    %218 = vmatpush1.msra.mxu0 0.0
    %219 = vmatprep.subr.mxu0 0.0
    %220 = vmatpush1.msra.mxu0 0.0
    %221 = vmatprep.subr.mxu0 0.0
    %222 = vmatpush1.msra.mxu0 0.0
    %223 = vmatprep.subr.mxu0 0.0
    %224 = vmatpush1.msra.mxu0 0.0
    %225 = vmatprep.subr.mxu0 0.0
    %226 = vmatpush1.msra.mxu0 0.0
    %227 = vmatprep.subr.mxu0 0.0
    %228 = vmatpush1.msra.mxu0 0.0
    %229 = vmatprep.subr.mxu0 0.0
    %230 = vmatpush1.msra.mxu0 0.0
    %231 = vmatprep.subr.mxu0 0.0
    %232 = vmatpush1.msra.mxu0 0.0
    %233 = vmatprep.subr.mxu0 0.0
    %234 = vmatpush1.msra.mxu0 0.0
    %235 = vmatprep.subr.mxu0 0.0
    %236 = vmatpush1.msra.mxu0 0.0
    %237 = vmatprep.subr.mxu0 0.0
    %238 = vmatpush1.msra.mxu0 0.0
    %239 = vmatprep.subr.mxu0 0.0
    %240 = vmatpush1.msra.mxu0 0.0
    %241 = vmatprep.subr.mxu0 0.0
    %242 = vmatpush1.msra.mxu0 0.0
    %243 = vmatprep.subr.mxu0 0.0
    %244 = vmatpush1.msra.mxu0 0.0
    %245 = vmatprep.subr.mxu0 0.0
    %246 = vmatpush1.msra.mxu0 0.0
    %247 = vmatprep.subr.mxu0 0.0
    %248 = vmatpush1.msra.mxu0 0.0
    %249 = vmatprep.subr.mxu0 0.0
    %250 = vmatpush1.msra.mxu0 0.0
    %251 = vmatprep.subr.mxu0 0.0
    %252 = vmatpush1.msra.mxu0 0.0
    %253 = vmatprep.subr.mxu0 0.0
    %254 = vmatpush1.msra.mxu0 0.0
    %255 = vmatprep.subr.mxu0 0.0
    %256 = vmatpush1.msra.mxu0 0.0
    %257 = vmatprep.subr.mxu0 0.0
    %258 = vmatpush1.msra.mxu0 0.0
    %259 = vmatprep.subr.mxu0 0.0
    %260 = vmatpush1.msra.mxu0 0.0
    %261 = vmatprep.subr.mxu0 0.0
    %262 = vmatpush1.msra.mxu0 0.0
    %263 = vmatprep.subr.mxu0 0.0
    %264 = vmatpush1.msra.mxu0 0.0
    %265 = vmatprep.subr.mxu0 0.0
    %266 = vmatpush1.msra.mxu0 0.0
    %267 = vmatprep.subr.mxu0 0.0
    %268 = vmatpush1.msra.mxu0 0.0
    %269 = vmatprep.subr.mxu0 0.0
    %270 = vmatpush1.msra.mxu0 0.0
    %271 = vmatprep.subr.mxu0 0.0
    %272 = vmatpush1.msra.mxu0 0.0
    %273 = vmatprep.mubr.f32.mxu0 0.0
    %274 = vmatmul.mubr.f32.gmra.mrb[0].mxu0 %v192
    %v275 = vpop.f32.mrb[0].mxu0
    %v276 = vadd.f32 %v188, %v275
    %v277 = vpop.f32.mrb[0].mxu0
    %278 = vmatprep.mubr.f32.mxu0 0.0
    %279 = vmatmul.mubr.f32.gmra.mrb[0].mxu0 %v195
    %v280 = vpop.f32.mrb[0].mxu0
    %v281 = vadd.f32 %v188, %v280
    %v282 = vpop.f32.mrb[0].mxu0
    %283 = vmatprep.mubr.f32.mxu0 0.0
    %284 = vmatmul.mubr.f32.gmra.mrb[0].mxu0 %v198
    %v285 = vpop.f32.mrb[0].mxu0
    %v286 = vadd.f32 %v188, %v285
    %v287 = vpop.f32.mrb[0].mxu0
    %288 = vmatprep.mubr.f32.mxu0 0.0
    %289 = vmatmul.mubr.f32.gmra.mrb[0].mxu0 %v201
    %v290 = vpop.f32.mrb[0].mxu0
    %v291 = vadd.f32 %v188, %v290
    %v292 = vpop.f32.mrb[0].mxu0
    %293 = vmatprep.mubr.f32.mxu0 0.0
    %294 = vmatmul.mubr.f32.gmra.mrb[0].mxu0 %v204
    %v295 = vpop.f32.mrb[0].mxu0
    %v296 = vadd.f32 %v188, %v295
    %v297 = vpop.f32.mrb[0].mxu0
    %298 = vmatprep.mubr.f32.mxu0 0.0
    %299 = vmatmul.mubr.f32.gmra.mrb[0].mxu0 %v207
    %v300 = vpop.f32.mrb[0].mxu0
    %v301 = vadd.f32 %v188, %v300
    %v302 = vpop.f32.mrb[0].mxu0
    %303 = vdwg.mxu0
    %304 = vst [vmem:[#allocation2] sm:$0xff] %v276
    %305 = vst [vmem:[#allocation2 + $0x8] sm:$0xff] %v281
    %306 = vst [vmem:[#allocation2 + $0x10] sm:$0xff] %v286
    %307 = vst [vmem:[#allocation2 + $0x18] sm:$0xff] %v291
    %308 = vst [vmem:[#allocation2 + $0x20] sm:$0xff] %v296
    %309 = vst [vmem:[#allocation2 + $0x28] sm:$0xff] %v301
    %v310 = vld [vmem:[#allocation4] sm:$0xff]
    %v311 = vld [vmem:[#allocation7] sm:$0xff]
    %v312 = vld [vmem:[#allocation9] sm:$0xff]
    %v313 = vld [vmem:[#allocation2] sm:$0xff]
    %vm314 = vcmask 261120
    %v316 = vsel %vm314, %v310, 0
    %318 = vmatprep.subr.mxu0 %v143
    %319 = vmatpush1.msra.mxu0 %v142
    %320 = vmatprep.subr.mxu0 %v145
    %321 = vmatpush1.msra.mxu0 %v144
    %322 = vmatprep.subr.mxu0 %v147
    %323 = vmatpush1.msra.mxu0 %v146
    %324 = vmatprep.subr.mxu0 %v149
    %325 = vmatpush1.msra.mxu0 %v148
    %326 = vmatprep.subr.mxu0 0.0
    %327 = vmatpush1.msra.mxu0 0.0
    %328 = vmatprep.subr.mxu0 0.0
    %329 = vmatpush1.msra.mxu0 0.0
    %330 = vmatprep.subr.mxu0 0.0
    %331 = vmatpush1.msra.mxu0 0.0
    %332 = vmatprep.subr.mxu0 0.0
    %333 = vmatpush1.msra.mxu0 0.0
    %334 = vmatprep.subr.mxu0 0.0
    %335 = vmatpush1.msra.mxu0 0.0
    %336 = vmatprep.subr.mxu0 0.0
    %337 = vmatpush1.msra.mxu0 0.0
    %338 = vmatprep.subr.mxu0 0.0
    %339 = vmatpush1.msra.mxu0 0.0
    %340 = vmatprep.subr.mxu0 0.0
    %341 = vmatpush1.msra.mxu0 0.0
    %342 = vmatprep.subr.mxu0 0.0
    %343 = vmatpush1.msra.mxu0 0.0
    %344 = vmatprep.subr.mxu0 0.0
    %345 = vmatpush1.msra.mxu0 0.0
    %346 = vmatprep.subr.mxu0 0.0
    %347 = vmatpush1.msra.mxu0 0.0
    %348 = vmatprep.subr.mxu0 0.0
    %349 = vmatpush1.msra.mxu0 0.0
    %350 = vmatprep.subr.mxu0 0.0
    %351 = vmatpush1.msra.mxu0 0.0
    %352 = vmatprep.subr.mxu0 0.0
    %353 = vmatpush1.msra.mxu0 0.0
    %354 = vmatprep.subr.mxu0 0.0
    %355 = vmatpush1.msra.mxu0 0.0
    %356 = vmatprep.subr.mxu0 0.0
    %357 = vmatpush1.msra.mxu0 0.0
    %358 = vmatprep.subr.mxu0 0.0
    %359 = vmatpush1.msra.mxu0 0.0
    %360 = vmatprep.subr.mxu0 0.0
    %361 = vmatpush1.msra.mxu0 0.0
    %362 = vmatprep.subr.mxu0 0.0
    %363 = vmatpush1.msra.mxu0 0.0
    %364 = vmatprep.subr.mxu0 0.0
    %365 = vmatpush1.msra.mxu0 0.0
    %366 = vmatprep.subr.mxu0 0.0
    %367 = vmatpush1.msra.mxu0 0.0
    %368 = vmatprep.subr.mxu0 0.0
    %369 = vmatpush1.msra.mxu0 0.0
    %370 = vmatprep.subr.mxu0 0.0
    %371 = vmatpush1.msra.mxu0 0.0
    %372 = vmatprep.subr.mxu0 0.0
    %373 = vmatpush1.msra.mxu0 0.0
    %374 = vmatprep.subr.mxu0 0.0
    %375 = vmatpush1.msra.mxu0 0.0
    %376 = vmatprep.subr.mxu0 0.0
    %377 = vmatpush1.msra.mxu0 0.0
    %378 = vmatprep.subr.mxu0 0.0
    %379 = vmatpush1.msra.mxu0 0.0
    %380 = vmatprep.subr.mxu0 0.0
    %381 = vmatpush1.msra.mxu0 0.0
    %382 = vmatprep.mubr.f32.mxu0 0.0
    %383 = vmatmul.mubr.f32.gmra.mrb[0].mxu0 %v316
    %v384 = vpop.f32.mrb[0].mxu0
    %v385 = vadd.f32 0.0, %v384
    %v386 = vpop.f32.mrb[0].mxu0
    %387 = vdwg.mxu0
    %v389 = vsel %vm314, %v311, 0
    %391 = vmatprep.subr.mxu0 %v151
    %392 = vmatpush1.msra.mxu0 %v150
    %393 = vmatprep.subr.mxu0 %v153
    %394 = vmatpush1.msra.mxu0 %v152
    %395 = vmatprep.subr.mxu0 %v155
    %396 = vmatpush1.msra.mxu0 %v154
    %397 = vmatprep.subr.mxu0 %v157
    %398 = vmatpush1.msra.mxu0 %v156
    %399 = vmatprep.subr.mxu0 0.0
    %400 = vmatpush1.msra.mxu0 0.0
    %401 = vmatprep.subr.mxu0 0.0
    %402 = vmatpush1.msra.mxu0 0.0
    %403 = vmatprep.subr.mxu0 0.0
    %404 = vmatpush1.msra.mxu0 0.0
    %405 = vmatprep.subr.mxu0 0.0
    %406 = vmatpush1.msra.mxu0 0.0
    %407 = vmatprep.subr.mxu0 0.0
    %408 = vmatpush1.msra.mxu0 0.0
    %409 = vmatprep.subr.mxu0 0.0
    %410 = vmatpush1.msra.mxu0 0.0
    %411 = vmatprep.subr.mxu0 0.0
    %412 = vmatpush1.msra.mxu0 0.0
    %413 = vmatprep.subr.mxu0 0.0
    %414 = vmatpush1.msra.mxu0 0.0
    %415 = vmatprep.subr.mxu0 0.0
    %416 = vmatpush1.msra.mxu0 0.0
    %417 = vmatprep.subr.mxu0 0.0
    %418 = vmatpush1.msra.mxu0 0.0
    %419 = vmatprep.subr.mxu0 0.0
    %420 = vmatpush1.msra.mxu0 0.0
    %421 = vmatprep.subr.mxu0 0.0
    %422 = vmatpush1.msra.mxu0 0.0
    %423 = vmatprep.subr.mxu0 0.0
    %424 = vmatpush1.msra.mxu0 0.0
    %425 = vmatprep.subr.mxu0 0.0
    %426 = vmatpush1.msra.mxu0 0.0
    %427 = vmatprep.subr.mxu0 0.0
    %428 = vmatpush1.msra.mxu0 0.0
    %429 = vmatprep.subr.mxu0 0.0
    %430 = vmatpush1.msra.mxu0 0.0
    %431 = vmatprep.subr.mxu0 0.0
    %432 = vmatpush1.msra.mxu0 0.0
    %433 = vmatprep.subr.mxu0 0.0
    %434 = vmatpush1.msra.mxu0 0.0
    %435 = vmatprep.subr.mxu0 0.0
    %436 = vmatpush1.msra.mxu0 0.0
    %437 = vmatprep.subr.mxu0 0.0
    %438 = vmatpush1.msra.mxu0 0.0
    %439 = vmatprep.subr.mxu0 0.0
    %440 = vmatpush1.msra.mxu0 0.0
    %441 = vmatprep.subr.mxu0 0.0
    %442 = vmatpush1.msra.mxu0 0.0
    %443 = vmatprep.subr.mxu0 0.0
    %444 = vmatpush1.msra.mxu0 0.0
    %445 = vmatprep.subr.mxu0 0.0
    %446 = vmatpush1.msra.mxu0 0.0
    %447 = vmatprep.subr.mxu0 0.0
    %448 = vmatpush1.msra.mxu0 0.0
    %449 = vmatprep.subr.mxu0 0.0
    %450 = vmatpush1.msra.mxu0 0.0
    %451 = vmatprep.subr.mxu0 0.0
    %452 = vmatpush1.msra.mxu0 0.0
    %453 = vmatprep.subr.mxu0 0.0
    %454 = vmatpush1.msra.mxu0 0.0
    %455 = vmatprep.mubr.f32.mxu0 0.0
    %456 = vmatmul.mubr.f32.gmra.mrb[0].mxu0 %v389
    %v457 = vpop.f32.mrb[0].mxu0
    %v458 = vadd.f32 0.0, %v457
    %v459 = vpop.f32.mrb[0].mxu0
    %v460 = vadd.f32 0.0, %v459
    %461 = vdwg.mxu0
    %v463 = vsel %vm314, %v312, 0
    %465 = vmatprep.subr.mxu0 0.0
    %466 = vmatpush1.msra.mxu0 %v158
    %467 = vmatprep.subr.mxu0 0.0
    %468 = vmatpush1.msra.mxu0 %v159
    %469 = vmatprep.subr.mxu0 0.0
    %470 = vmatpush1.msra.mxu0 %v160
    %471 = vmatprep.subr.mxu0 0.0
    %472 = vmatpush1.msra.mxu0 %v161
    %473 = vmatprep.subr.mxu0 0.0
    %474 = vmatpush1.msra.mxu0 0.0
    %475 = vmatprep.subr.mxu0 0.0
    %476 = vmatpush1.msra.mxu0 0.0
    %477 = vmatprep.subr.mxu0 0.0
    %478 = vmatpush1.msra.mxu0 0.0
    %479 = vmatprep.subr.mxu0 0.0
    %480 = vmatpush1.msra.mxu0 0.0
    %481 = vmatprep.subr.mxu0 0.0
    %482 = vmatpush1.msra.mxu0 0.0
    %483 = vmatprep.subr.mxu0 0.0
    %484 = vmatpush1.msra.mxu0 0.0
    %485 = vmatprep.subr.mxu0 0.0
    %486 = vmatpush1.msra.mxu0 0.0
    %487 = vmatprep.subr.mxu0 0.0
    %488 = vmatpush1.msra.mxu0 0.0
    %489 = vmatprep.subr.mxu0 0.0
    %490 = vmatpush1.msra.mxu0 0.0
    %491 = vmatprep.subr.mxu0 0.0
    %492 = vmatpush1.msra.mxu0 0.0
    %493 = vmatprep.subr.mxu0 0.0
    %494 = vmatpush1.msra.mxu0 0.0
    %495 = vmatprep.subr.mxu0 0.0
    %496 = vmatpush1.msra.mxu0 0.0
    %497 = vmatprep.subr.mxu0 0.0
    %498 = vmatpush1.msra.mxu0 0.0
    %499 = vmatprep.subr.mxu0 0.0
    %500 = vmatpush1.msra.mxu0 0.0
    %501 = vmatprep.subr.mxu0 0.0
    %502 = vmatpush1.msra.mxu0 0.0
    %503 = vmatprep.subr.mxu0 0.0
    %504 = vmatpush1.msra.mxu0 0.0
    %505 = vmatprep.subr.mxu0 0.0
    %506 = vmatpush1.msra.mxu0 0.0
    %507 = vmatprep.subr.mxu0 0.0
    %508 = vmatpush1.msra.mxu0 0.0
    %509 = vmatprep.subr.mxu0 0.0
    %510 = vmatpush1.msra.mxu0 0.0
    %511 = vmatprep.subr.mxu0 0.0
    %512 = vmatpush1.msra.mxu0 0.0
    %513 = vmatprep.subr.mxu0 0.0
    %514 = vmatpush1.msra.mxu0 0.0
    %515 = vmatprep.subr.mxu0 0.0
    %516 = vmatpush1.msra.mxu0 0.0
    %517 = vmatprep.subr.mxu0 0.0
    %518 = vmatpush1.msra.mxu0 0.0
    %519 = vmatprep.subr.mxu0 0.0
    %520 = vmatpush1.msra.mxu0 0.0
    %521 = vmatprep.subr.mxu0 0.0
    %522 = vmatpush1.msra.mxu0 0.0
    %523 = vmatprep.subr.mxu0 0.0
    %524 = vmatpush1.msra.mxu0 0.0
    %525 = vmatprep.subr.mxu0 0.0
    %526 = vmatpush1.msra.mxu0 0.0
    %527 = vmatprep.subr.mxu0 0.0
    %528 = vmatpush1.msra.mxu0 0.0
    %529 = vmatprep.mubr.f32.mxu0 0.0
    %530 = vmatmul.mubr.f32.gmra.mrb[0].mxu0 %v463
    %v531 = vpop.f32.mrb[0].mxu0
    %v532 = vadd.f32 0.0, %v531
    %v533 = vpop.f32.mrb[0].mxu0
    %534 = vdwg.mxu0
    %v535 = vadd.f32 %v313, %v385
    %v536 = vadd.f32 %v460, %v532
    %v537 = vadd.f32 %v536, %v174
    %v538 = vxor.u32 %v535, 2147483648
    %v539 = vmul.f32 %v538, 1.442695
    %v540 = vpow.pop %v539
    %v541 = vadd.f32 %v540, 1.0
    %v542 = vrcp.pop %v541
    %v543 = vmul.f32 1.0, %v542
    %545 = vrot.lane.b32.xlu0 %v535, 32
    %v546 = vpop.permute.xlu0 %545
    %v548 = vmul.f32 %v543, %v546
    %550 = vrot.lane.b32.xlu0 %v548, 64
    %v551 = vpop.permute.xlu0 %550
    %v553 = vadd.f32 %v535, %v551
    %v554 = vtanh.pop %v553
    %v555 = vsub.f32 1.0, %v543
    %557 = vrot.lane.b32.xlu0 %v554, 96
    %v558 = vpop.permute.xlu0 %557
    %v560 = vmul.f32 %v555, %v558
    %561 = vrot.lane.b32.xlu0 %v310, 32
    %v562 = vpop.permute.xlu0 %561
    %v564 = vmul.f32 %v543, %v562
    %v565 = vadd.f32 %v560, %v564
    %v566 = vxor.u32 %v537, 2147483648
    %v567 = vmul.f32 %v566, 1.442695
    %v568 = vpow.pop %v567
    %v569 = vadd.f32 %v568, 1.0
    %v570 = vrcp.pop %v569
    %v571 = vmul.f32 1.0, %v570
    %573 = vrot.lane.b32.xlu0 %v537, 32
    %v574 = vpop.permute.xlu0 %573
    %v576 = vmul.f32 %v571, %v574
    %578 = vrot.lane.b32.xlu0 %v576, 64
    %v579 = vpop.permute.xlu0 %578
    %v581 = vadd.f32 %v537, %v579
    %v582 = vtanh.pop %v581
    %v583 = vsub.f32 1.0, %v571
    %585 = vrot.lane.b32.xlu0 %v582, 96
    %v586 = vpop.permute.xlu0 %585
    %v588 = vmul.f32 %v583, %v586
    %589 = vrot.lane.b32.xlu0 %v312, 32
    %v590 = vpop.permute.xlu0 %589
    %v592 = vmul.f32 %v571, %v590
    %v593 = vadd.f32 %v588, %v592
    %595 = vrot.lane.b32.xlu0 %v593, 96
    %v596 = vpop.permute.xlu0 %595
    %598 = vst.msk [vmem:[#allocation3] sm:$0xff] %vm314, %v596
    %s599 = scalar_lea.vmem [#allocation2], 8
    %v600 = vld [vmem:[%s599] sm:$0xff]
    %602 = vrot.lane.b32.xlu0 %v565, 96
    %v603 = vpop.permute.xlu0 %602
    %v604 = vsel %vm314, %v603, 0
    %606 = vmatprep.subr.mxu0 %v143
    %607 = vmatpush1.msra.mxu0 %v142
    %608 = vmatprep.subr.mxu0 %v145
    %609 = vmatpush1.msra.mxu0 %v144
    %610 = vmatprep.subr.mxu0 %v147
    %611 = vmatpush1.msra.mxu0 %v146
    %612 = vmatprep.subr.mxu0 %v149
    %613 = vmatpush1.msra.mxu0 %v148
    %614 = vmatprep.subr.mxu0 0.0
    %615 = vmatpush1.msra.mxu0 0.0
    %616 = vmatprep.subr.mxu0 0.0
    %617 = vmatpush1.msra.mxu0 0.0
    %618 = vmatprep.subr.mxu0 0.0
    %619 = vmatpush1.msra.mxu0 0.0
    %620 = vmatprep.subr.mxu0 0.0
    %621 = vmatpush1.msra.mxu0 0.0
    %622 = vmatprep.subr.mxu0 0.0
    %623 = vmatpush1.msra.mxu0 0.0
    %624 = vmatprep.subr.mxu0 0.0
    %625 = vmatpush1.msra.mxu0 0.0
    %626 = vmatprep.subr.mxu0 0.0
    %627 = vmatpush1.msra.mxu0 0.0
    %628 = vmatprep.subr.mxu0 0.0
    %629 = vmatpush1.msra.mxu0 0.0
    %630 = vmatprep.subr.mxu0 0.0
    %631 = vmatpush1.msra.mxu0 0.0
    %632 = vmatprep.subr.mxu0 0.0
    %633 = vmatpush1.msra.mxu0 0.0
    %634 = vmatprep.subr.mxu0 0.0
    %635 = vmatpush1.msra.mxu0 0.0
    %636 = vmatprep.subr.mxu0 0.0
    %637 = vmatpush1.msra.mxu0 0.0
    %638 = vmatprep.subr.mxu0 0.0
    %639 = vmatpush1.msra.mxu0 0.0
    %640 = vmatprep.subr.mxu0 0.0
    %641 = vmatpush1.msra.mxu0 0.0
    %642 = vmatprep.subr.mxu0 0.0
    %643 = vmatpush1.msra.mxu0 0.0
    %644 = vmatprep.subr.mxu0 0.0
    %645 = vmatpush1.msra.mxu0 0.0
    %646 = vmatprep.subr.mxu0 0.0
    %647 = vmatpush1.msra.mxu0 0.0
    %648 = vmatprep.subr.mxu0 0.0
    %649 = vmatpush1.msra.mxu0 0.0
    %650 = vmatprep.subr.mxu0 0.0
    %651 = vmatpush1.msra.mxu0 0.0
    %652 = vmatprep.subr.mxu0 0.0
    %653 = vmatpush1.msra.mxu0 0.0
    %654 = vmatprep.subr.mxu0 0.0
    %655 = vmatpush1.msra.mxu0 0.0
    %656 = vmatprep.subr.mxu0 0.0
    %657 = vmatpush1.msra.mxu0 0.0
    %658 = vmatprep.subr.mxu0 0.0
    %659 = vmatpush1.msra.mxu0 0.0
    %660 = vmatprep.subr.mxu0 0.0
    %661 = vmatpush1.msra.mxu0 0.0
    %662 = vmatprep.subr.mxu0 0.0
    %663 = vmatpush1.msra.mxu0 0.0
    %664 = vmatprep.subr.mxu0 0.0
    %665 = vmatpush1.msra.mxu0 0.0
    %666 = vmatprep.subr.mxu0 0.0
    %667 = vmatpush1.msra.mxu0 0.0
    %668 = vmatprep.subr.mxu0 0.0
    %669 = vmatpush1.msra.mxu0 0.0
    %670 = vmatprep.mubr.f32.mxu0 0.0
    %671 = vmatmul.mubr.f32.gmra.mrb[0].mxu0 %v604
    %v672 = vpop.f32.mrb[0].mxu0
    %v673 = vadd.f32 0.0, %v672
    %v674 = vpop.f32.mrb[0].mxu0
    %v675 = vadd.f32 0.0, %v674
    %676 = vdwg.mxu0
    %v677 = vadd.f32 %v600, %v673
    %v678 = vadd.f32 %v675, %v458
    %v679 = vadd.f32 %v678, %v167
    %v680 = vxor.u32 %v677, 2147483648
    %v681 = vmul.f32 %v680, 1.442695
    %v682 = vpow.pop %v681
    %v683 = vadd.f32 %v682, 1.0
    %v684 = vrcp.pop %v683
    %v685 = vmul.f32 1.0, %v684
    %687 = vrot.lane.b32.xlu0 %v677, 32
    %v688 = vpop.permute.xlu0 %687
    %v690 = vmul.f32 %v685, %v688
    %692 = vrot.lane.b32.xlu0 %v690, 64
    %v693 = vpop.permute.xlu0 %692
    %v695 = vadd.f32 %v677, %v693
    %v696 = vtanh.pop %v695
    %v697 = vsub.f32 1.0, %v685
    %699 = vrot.lane.b32.xlu0 %v696, 96
    %v700 = vpop.permute.xlu0 %699
    %v702 = vmul.f32 %v697, %v700
    %v703 = vmul.f32 %v685, %v565
    %v704 = vadd.f32 %v702, %v703
    %v705 = vxor.u32 %v679, 2147483648
    %v706 = vmul.f32 %v705, 1.442695
    %v707 = vpow.pop %v706
    %v708 = vadd.f32 %v707, 1.0
    %v709 = vrcp.pop %v708
    %v710 = vmul.f32 1.0, %v709
    %712 = vrot.lane.b32.xlu0 %v679, 32
    %v713 = vpop.permute.xlu0 %712
    %v715 = vmul.f32 %v710, %v713
    %717 = vrot.lane.b32.xlu0 %v715, 64
    %v718 = vpop.permute.xlu0 %717
    %v720 = vadd.f32 %v679, %v718
    %v721 = vtanh.pop %v720
    %v722 = vsub.f32 1.0, %v710
    %724 = vrot.lane.b32.xlu0 %v721, 96
    %v725 = vpop.permute.xlu0 %724
    %v727 = vmul.f32 %v722, %v725
    %728 = vrot.lane.b32.xlu0 %v311, 32
    %v729 = vpop.permute.xlu0 %728
    %v731 = vmul.f32 %v710, %v729
    %v732 = vadd.f32 %v727, %v731
    %733 = vst.msk [vmem:[#allocation3] sm:$0xff] %vm314, %v596
    %s734 = scalar_lea.vmem [#allocation2], 16
    %v735 = vld [vmem:[%s734] sm:$0xff]
    %737 = vrot.lane.b32.xlu0 %v704, 96
    %v738 = vpop.permute.xlu0 %737
    %v739 = vsel %vm314, %v738, 0
    %741 = vmatprep.subr.mxu0 %v143
    %742 = vmatpush1.msra.mxu0 %v142
    %743 = vmatprep.subr.mxu0 %v145
    %744 = vmatpush1.msra.mxu0 %v144
    %745 = vmatprep.subr.mxu0 %v147
    %746 = vmatpush1.msra.mxu0 %v146
    %747 = vmatprep.subr.mxu0 %v149
    %748 = vmatpush1.msra.mxu0 %v148
    %749 = vmatprep.subr.mxu0 0.0
    %750 = vmatpush1.msra.mxu0 0.0
    %751 = vmatprep.subr.mxu0 0.0
    %752 = vmatpush1.msra.mxu0 0.0
    %753 = vmatprep.subr.mxu0 0.0
    %754 = vmatpush1.msra.mxu0 0.0
    %755 = vmatprep.subr.mxu0 0.0
    %756 = vmatpush1.msra.mxu0 0.0
    %757 = vmatprep.subr.mxu0 0.0
    %758 = vmatpush1.msra.mxu0 0.0
    %759 = vmatprep.subr.mxu0 0.0
    %760 = vmatpush1.msra.mxu0 0.0
    %761 = vmatprep.subr.mxu0 0.0
    %762 = vmatpush1.msra.mxu0 0.0
    %763 = vmatprep.subr.mxu0 0.0
    %764 = vmatpush1.msra.mxu0 0.0
    %765 = vmatprep.subr.mxu0 0.0
    %766 = vmatpush1.msra.mxu0 0.0
    %767 = vmatprep.subr.mxu0 0.0
    %768 = vmatpush1.msra.mxu0 0.0
    %769 = vmatprep.subr.mxu0 0.0
    %770 = vmatpush1.msra.mxu0 0.0
    %771 = vmatprep.subr.mxu0 0.0
    %772 = vmatpush1.msra.mxu0 0.0
    %773 = vmatprep.subr.mxu0 0.0
    %774 = vmatpush1.msra.mxu0 0.0
    %775 = vmatprep.subr.mxu0 0.0
    %776 = vmatpush1.msra.mxu0 0.0
    %777 = vmatprep.subr.mxu0 0.0
    %778 = vmatpush1.msra.mxu0 0.0
    %779 = vmatprep.subr.mxu0 0.0
    %780 = vmatpush1.msra.mxu0 0.0
    %781 = vmatprep.subr.mxu0 0.0
    %782 = vmatpush1.msra.mxu0 0.0
    %783 = vmatprep.subr.mxu0 0.0
    %784 = vmatpush1.msra.mxu0 0.0
    %785 = vmatprep.subr.mxu0 0.0
    %786 = vmatpush1.msra.mxu0 0.0
    %787 = vmatprep.subr.mxu0 0.0
    %788 = vmatpush1.msra.mxu0 0.0
    %789 = vmatprep.subr.mxu0 0.0
    %790 = vmatpush1.msra.mxu0 0.0
    %791 = vmatprep.subr.mxu0 0.0
    %792 = vmatpush1.msra.mxu0 0.0
    %793 = vmatprep.subr.mxu0 0.0
    %794 = vmatpush1.msra.mxu0 0.0
    %795 = vmatprep.subr.mxu0 0.0
    %796 = vmatpush1.msra.mxu0 0.0
    %797 = vmatprep.subr.mxu0 0.0
    %798 = vmatpush1.msra.mxu0 0.0
    %799 = vmatprep.subr.mxu0 0.0
    %800 = vmatpush1.msra.mxu0 0.0
    %801 = vmatprep.subr.mxu0 0.0
    %802 = vmatpush1.msra.mxu0 0.0
    %803 = vmatprep.subr.mxu0 0.0
    %804 = vmatpush1.msra.mxu0 0.0
    %805 = vmatprep.mubr.f32.mxu0 0.0
    %806 = vmatmul.mubr.f32.gmra.mrb[0].mxu0 %v739
    %v807 = vpop.f32.mrb[0].mxu0
    %v808 = vadd.f32 0.0, %v807
    %v809 = vpop.f32.mrb[0].mxu0
    %v810 = vadd.f32 0.0, %v809
    %811 = vdwg.mxu0
    %813 = vrot.lane.b32.xlu0 %v732, 96
    %v814 = vpop.permute.xlu0 %813
    %v815 = vsel %vm314, %v814, 0
    %817 = vmatprep.subr.mxu0 %v151
    %818 = vmatpush1.msra.mxu0 %v150
    %819 = vmatprep.subr.mxu0 %v153
    %820 = vmatpush1.msra.mxu0 %v152
    %821 = vmatprep.subr.mxu0 %v155
    %822 = vmatpush1.msra.mxu0 %v154
    %823 = vmatprep.subr.mxu0 %v157
    %824 = vmatpush1.msra.mxu0 %v156
    %825 = vmatprep.subr.mxu0 0.0
    %826 = vmatpush1.msra.mxu0 0.0
    %827 = vmatprep.subr.mxu0 0.0
    %828 = vmatpush1.msra.mxu0 0.0
    %829 = vmatprep.subr.mxu0 0.0
    %830 = vmatpush1.msra.mxu0 0.0
    %831 = vmatprep.subr.mxu0 0.0
    %832 = vmatpush1.msra.mxu0 0.0
    %833 = vmatprep.subr.mxu0 0.0
    %834 = vmatpush1.msra.mxu0 0.0
    %835 = vmatprep.subr.mxu0 0.0
    %836 = vmatpush1.msra.mxu0 0.0
    %837 = vmatprep.subr.mxu0 0.0
    %838 = vmatpush1.msra.mxu0 0.0
    %839 = vmatprep.subr.mxu0 0.0
    %840 = vmatpush1.msra.mxu0 0.0
    %841 = vmatprep.subr.mxu0 0.0
    %842 = vmatpush1.msra.mxu0 0.0
    %843 = vmatprep.subr.mxu0 0.0
    %844 = vmatpush1.msra.mxu0 0.0
    %845 = vmatprep.subr.mxu0 0.0
    %846 = vmatpush1.msra.mxu0 0.0
    %847 = vmatprep.subr.mxu0 0.0
    %848 = vmatpush1.msra.mxu0 0.0
    %849 = vmatprep.subr.mxu0 0.0
    %850 = vmatpush1.msra.mxu0 0.0
    %851 = vmatprep.subr.mxu0 0.0
    %852 = vmatpush1.msra.mxu0 0.0
    %853 = vmatprep.subr.mxu0 0.0
    %854 = vmatpush1.msra.mxu0 0.0
    %855 = vmatprep.subr.mxu0 0.0
    %856 = vmatpush1.msra.mxu0 0.0
    %857 = vmatprep.subr.mxu0 0.0
    %858 = vmatpush1.msra.mxu0 0.0
    %859 = vmatprep.subr.mxu0 0.0
    %860 = vmatpush1.msra.mxu0 0.0
    %861 = vmatprep.subr.mxu0 0.0
    %862 = vmatpush1.msra.mxu0 0.0
    %863 = vmatprep.subr.mxu0 0.0
    %864 = vmatpush1.msra.mxu0 0.0
    %865 = vmatprep.subr.mxu0 0.0
    %866 = vmatpush1.msra.mxu0 0.0
    %867 = vmatprep.subr.mxu0 0.0
    %868 = vmatpush1.msra.mxu0 0.0
    %869 = vmatprep.subr.mxu0 0.0
    %870 = vmatpush1.msra.mxu0 0.0
    %871 = vmatprep.subr.mxu0 0.0
    %872 = vmatpush1.msra.mxu0 0.0
    %873 = vmatprep.subr.mxu0 0.0
    %874 = vmatpush1.msra.mxu0 0.0
    %875 = vmatprep.subr.mxu0 0.0
    %876 = vmatpush1.msra.mxu0 0.0
    %877 = vmatprep.subr.mxu0 0.0
    %878 = vmatpush1.msra.mxu0 0.0
    %879 = vmatprep.subr.mxu0 0.0
    %880 = vmatpush1.msra.mxu0 0.0
    %881 = vmatprep.mubr.f32.mxu0 0.0
    %882 = vmatmul.mubr.f32.gmra.mrb[0].mxu0 %v815
    %v883 = vpop.f32.mrb[0].mxu0
    %v884 = vadd.f32 0.0, %v883
    %v885 = vpop.f32.mrb[0].mxu0
    %v886 = vadd.f32 0.0, %v885
    %887 = vdwg.mxu0
    %v888 = vadd.f32 %v735, %v808
    %v889 = vadd.f32 %v810, %v884
    %v890 = vadd.f32 %v889, %v167
    %v891 = vadd.f32 %v886, %v532
    %v892 = vadd.f32 %v891, %v174
    %v893 = vxor.u32 %v888, 2147483648
    %v894 = vmul.f32 %v893, 1.442695
    %v895 = vpow.pop %v894
    %v896 = vadd.f32 %v895, 1.0
    %v897 = vrcp.pop %v896
    %v898 = vmul.f32 1.0, %v897
    %900 = vrot.lane.b32.xlu0 %v888, 32
    %v901 = vpop.permute.xlu0 %900
    %v903 = vmul.f32 %v898, %v901
    %905 = vrot.lane.b32.xlu0 %v903, 64
    %v906 = vpop.permute.xlu0 %905
    %v908 = vadd.f32 %v888, %v906
    %v909 = vtanh.pop %v908
    %v910 = vsub.f32 1.0, %v898
    %912 = vrot.lane.b32.xlu0 %v909, 96
    %v913 = vpop.permute.xlu0 %912
    %v915 = vmul.f32 %v910, %v913
    %v916 = vmul.f32 %v898, %v704
    %v917 = vadd.f32 %v915, %v916
    %v918 = vxor.u32 %v890, 2147483648
    %v919 = vmul.f32 %v918, 1.442695
    %v920 = vpow.pop %v919
    %v921 = vadd.f32 %v920, 1.0
    %v922 = vrcp.pop %v921
    %v923 = vmul.f32 1.0, %v922
    %925 = vrot.lane.b32.xlu0 %v890, 32
    %v926 = vpop.permute.xlu0 %925
    %v928 = vmul.f32 %v923, %v926
    %930 = vrot.lane.b32.xlu0 %v928, 64
    %v931 = vpop.permute.xlu0 %930
    %v933 = vadd.f32 %v890, %v931
    %v934 = vtanh.pop %v933
    %v935 = vsub.f32 1.0, %v923
    %937 = vrot.lane.b32.xlu0 %v934, 96
    %v938 = vpop.permute.xlu0 %937
    %v940 = vmul.f32 %v935, %v938
    %v941 = vmul.f32 %v923, %v732
    %v942 = vadd.f32 %v940, %v941
    %v943 = vxor.u32 %v892, 2147483648
    %v944 = vmul.f32 %v943, 1.442695
    %v945 = vpow.pop %v944
    %v946 = vadd.f32 %v945, 1.0
    %v947 = vrcp.pop %v946
    %v948 = vmul.f32 1.0, %v947
    %950 = vrot.lane.b32.xlu0 %v892, 32
    %v951 = vpop.permute.xlu0 %950
    %v953 = vmul.f32 %v948, %v951
    %955 = vrot.lane.b32.xlu0 %v953, 64
    %v956 = vpop.permute.xlu0 %955
    %v958 = vadd.f32 %v892, %v956
    %v959 = vtanh.pop %v958
    %v960 = vsub.f32 1.0, %v948
    %962 = vrot.lane.b32.xlu0 %v959, 96
    %v963 = vpop.permute.xlu0 %962
    %v965 = vmul.f32 %v960, %v963
    %v966 = vmul.f32 %v948, %v590
    %v967 = vadd.f32 %v965, %v966
    %969 = vrot.lane.b32.xlu0 %v967, 96
    %v970 = vpop.permute.xlu0 %969
    %972 = vst.msk [vmem:[#allocation3] sm:$0xff] %vm314, %v970
    %s973 = scalar_lea.vmem [#allocation2], 24
    %v974 = vld [vmem:[%s973] sm:$0xff]
    %976 = vrot.lane.b32.xlu0 %v917, 96
    %v977 = vpop.permute.xlu0 %976
    %v978 = vsel %vm314, %v977, 0
    %980 = vmatprep.subr.mxu0 %v143
    %981 = vmatpush1.msra.mxu0 %v142
    %982 = vmatprep.subr.mxu0 %v145
    %983 = vmatpush1.msra.mxu0 %v144
    %984 = vmatprep.subr.mxu0 %v147
    %985 = vmatpush1.msra.mxu0 %v146
    %986 = vmatprep.subr.mxu0 %v149
    %987 = vmatpush1.msra.mxu0 %v148
    %988 = vmatprep.subr.mxu0 0.0
    %989 = vmatpush1.msra.mxu0 0.0
    %990 = vmatprep.subr.mxu0 0.0
    %991 = vmatpush1.msra.mxu0 0.0
    %992 = vmatprep.subr.mxu0 0.0
    %993 = vmatpush1.msra.mxu0 0.0
    %994 = vmatprep.subr.mxu0 0.0
    %995 = vmatpush1.msra.mxu0 0.0
    %996 = vmatprep.subr.mxu0 0.0
    %997 = vmatpush1.msra.mxu0 0.0
    %998 = vmatprep.subr.mxu0 0.0
    %999 = vmatpush1.msra.mxu0 0.0
    %1000 = vmatprep.subr.mxu0 0.0
    %1001 = vmatpush1.msra.mxu0 0.0
    %1002 = vmatprep.subr.mxu0 0.0
    %1003 = vmatpush1.msra.mxu0 0.0
    %1004 = vmatprep.subr.mxu0 0.0
    %1005 = vmatpush1.msra.mxu0 0.0
    %1006 = vmatprep.subr.mxu0 0.0
    %1007 = vmatpush1.msra.mxu0 0.0
    %1008 = vmatprep.subr.mxu0 0.0
    %1009 = vmatpush1.msra.mxu0 0.0
    %1010 = vmatprep.subr.mxu0 0.0
    %1011 = vmatpush1.msra.mxu0 0.0
    %1012 = vmatprep.subr.mxu0 0.0
    %1013 = vmatpush1.msra.mxu0 0.0
    %1014 = vmatprep.subr.mxu0 0.0
    %1015 = vmatpush1.msra.mxu0 0.0
    %1016 = vmatprep.subr.mxu0 0.0
    %1017 = vmatpush1.msra.mxu0 0.0
    %1018 = vmatprep.subr.mxu0 0.0
    %1019 = vmatpush1.msra.mxu0 0.0
    %1020 = vmatprep.subr.mxu0 0.0
    %1021 = vmatpush1.msra.mxu0 0.0
    %1022 = vmatprep.subr.mxu0 0.0
    %1023 = vmatpush1.msra.mxu0 0.0
    %1024 = vmatprep.subr.mxu0 0.0
    %1025 = vmatpush1.msra.mxu0 0.0
    %1026 = vmatprep.subr.mxu0 0.0
    %1027 = vmatpush1.msra.mxu0 0.0
    %1028 = vmatprep.subr.mxu0 0.0
    %1029 = vmatpush1.msra.mxu0 0.0
    %1030 = vmatprep.subr.mxu0 0.0
    %1031 = vmatpush1.msra.mxu0 0.0
    %1032 = vmatprep.subr.mxu0 0.0
    %1033 = vmatpush1.msra.mxu0 0.0
    %1034 = vmatprep.subr.mxu0 0.0
    %1035 = vmatpush1.msra.mxu0 0.0
    %1036 = vmatprep.subr.mxu0 0.0
    %1037 = vmatpush1.msra.mxu0 0.0
    %1038 = vmatprep.subr.mxu0 0.0
    %1039 = vmatpush1.msra.mxu0 0.0
    %1040 = vmatprep.subr.mxu0 0.0
    %1041 = vmatpush1.msra.mxu0 0.0
    %1042 = vmatprep.subr.mxu0 0.0
    %1043 = vmatpush1.msra.mxu0 0.0
    %1044 = vmatprep.mubr.f32.mxu0 0.0
    %1045 = vmatmul.mubr.f32.gmra.mrb[0].mxu0 %v978
    %v1046 = vpop.f32.mrb[0].mxu0
    %v1047 = vadd.f32 0.0, %v1046
    %v1048 = vpop.f32.mrb[0].mxu0
    %v1049 = vadd.f32 0.0, %v1048
    %1050 = vdwg.mxu0
    %1052 = vrot.lane.b32.xlu0 %v942, 96
    %v1053 = vpop.permute.xlu0 %1052
    %v1054 = vsel %vm314, %v1053, 0
    %1056 = vmatprep.subr.mxu0 %v151
    %1057 = vmatpush1.msra.mxu0 %v150
    %1058 = vmatprep.subr.mxu0 %v153
    %1059 = vmatpush1.msra.mxu0 %v152
    %1060 = vmatprep.subr.mxu0 %v155
    %1061 = vmatpush1.msra.mxu0 %v154
    %1062 = vmatprep.subr.mxu0 %v157
    %1063 = vmatpush1.msra.mxu0 %v156
    %1064 = vmatprep.subr.mxu0 0.0
    %1065 = vmatpush1.msra.mxu0 0.0
    %1066 = vmatprep.subr.mxu0 0.0
    %1067 = vmatpush1.msra.mxu0 0.0
    %1068 = vmatprep.subr.mxu0 0.0
    %1069 = vmatpush1.msra.mxu0 0.0
    %1070 = vmatprep.subr.mxu0 0.0
    %1071 = vmatpush1.msra.mxu0 0.0
    %1072 = vmatprep.subr.mxu0 0.0
    %1073 = vmatpush1.msra.mxu0 0.0
    %1074 = vmatprep.subr.mxu0 0.0
    %1075 = vmatpush1.msra.mxu0 0.0
    %1076 = vmatprep.subr.mxu0 0.0
    %1077 = vmatpush1.msra.mxu0 0.0
    %1078 = vmatprep.subr.mxu0 0.0
    %1079 = vmatpush1.msra.mxu0 0.0
    %1080 = vmatprep.subr.mxu0 0.0
    %1081 = vmatpush1.msra.mxu0 0.0
    %1082 = vmatprep.subr.mxu0 0.0
    %1083 = vmatpush1.msra.mxu0 0.0
    %1084 = vmatprep.subr.mxu0 0.0
    %1085 = vmatpush1.msra.mxu0 0.0
    %1086 = vmatprep.subr.mxu0 0.0
    %1087 = vmatpush1.msra.mxu0 0.0
    %1088 = vmatprep.subr.mxu0 0.0
    %1089 = vmatpush1.msra.mxu0 0.0
    %1090 = vmatprep.subr.mxu0 0.0
    %1091 = vmatpush1.msra.mxu0 0.0
    %1092 = vmatprep.subr.mxu0 0.0
    %1093 = vmatpush1.msra.mxu0 0.0
    %1094 = vmatprep.subr.mxu0 0.0
    %1095 = vmatpush1.msra.mxu0 0.0
    %1096 = vmatprep.subr.mxu0 0.0
    %1097 = vmatpush1.msra.mxu0 0.0
    %1098 = vmatprep.subr.mxu0 0.0
    %1099 = vmatpush1.msra.mxu0 0.0
    %1100 = vmatprep.subr.mxu0 0.0
    %1101 = vmatpush1.msra.mxu0 0.0
    %1102 = vmatprep.subr.mxu0 0.0
    %1103 = vmatpush1.msra.mxu0 0.0
    %1104 = vmatprep.subr.mxu0 0.0
    %1105 = vmatpush1.msra.mxu0 0.0
    %1106 = vmatprep.subr.mxu0 0.0
    %1107 = vmatpush1.msra.mxu0 0.0
    %1108 = vmatprep.subr.mxu0 0.0
    %1109 = vmatpush1.msra.mxu0 0.0
    %1110 = vmatprep.subr.mxu0 0.0
    %1111 = vmatpush1.msra.mxu0 0.0
    %1112 = vmatprep.subr.mxu0 0.0
    %1113 = vmatpush1.msra.mxu0 0.0
    %1114 = vmatprep.subr.mxu0 0.0
    %1115 = vmatpush1.msra.mxu0 0.0
    %1116 = vmatprep.subr.mxu0 0.0
    %1117 = vmatpush1.msra.mxu0 0.0
    %1118 = vmatprep.subr.mxu0 0.0
    %1119 = vmatpush1.msra.mxu0 0.0
    %1120 = vmatprep.mubr.f32.mxu0 0.0
    %1121 = vmatmul.mubr.f32.gmra.mrb[0].mxu0 %v1054
    %v1122 = vpop.f32.mrb[0].mxu0
    %v1123 = vadd.f32 0.0, %v1122
    %v1124 = vpop.f32.mrb[0].mxu0
    %v1125 = vadd.f32 0.0, %v1124
    %1126 = vdwg.mxu0
    %v1127 = vsel %vm314, %v970, 0
    %1129 = vmatprep.subr.mxu0 0.0
    %1130 = vmatpush1.msra.mxu0 %v158
    %1131 = vmatprep.subr.mxu0 0.0
    %1132 = vmatpush1.msra.mxu0 %v159
    %1133 = vmatprep.subr.mxu0 0.0
    %1134 = vmatpush1.msra.mxu0 %v160
    %1135 = vmatprep.subr.mxu0 0.0
    %1136 = vmatpush1.msra.mxu0 %v161
    %1137 = vmatprep.subr.mxu0 0.0
    %1138 = vmatpush1.msra.mxu0 0.0
    %1139 = vmatprep.subr.mxu0 0.0
    %1140 = vmatpush1.msra.mxu0 0.0
    %1141 = vmatprep.subr.mxu0 0.0
    %1142 = vmatpush1.msra.mxu0 0.0
    %1143 = vmatprep.subr.mxu0 0.0
    %1144 = vmatpush1.msra.mxu0 0.0
    %1145 = vmatprep.subr.mxu0 0.0
    %1146 = vmatpush1.msra.mxu0 0.0
    %1147 = vmatprep.subr.mxu0 0.0
    %1148 = vmatpush1.msra.mxu0 0.0
    %1149 = vmatprep.subr.mxu0 0.0
    %1150 = vmatpush1.msra.mxu0 0.0
    %1151 = vmatprep.subr.mxu0 0.0
    %1152 = vmatpush1.msra.mxu0 0.0
    %1153 = vmatprep.subr.mxu0 0.0
    %1154 = vmatpush1.msra.mxu0 0.0
    %1155 = vmatprep.subr.mxu0 0.0
    %1156 = vmatpush1.msra.mxu0 0.0
    %1157 = vmatprep.subr.mxu0 0.0
    %1158 = vmatpush1.msra.mxu0 0.0
    %1159 = vmatprep.subr.mxu0 0.0
    %1160 = vmatpush1.msra.mxu0 0.0
    %1161 = vmatprep.subr.mxu0 0.0
    %1162 = vmatpush1.msra.mxu0 0.0
    %1163 = vmatprep.subr.mxu0 0.0
    %1164 = vmatpush1.msra.mxu0 0.0
    %1165 = vmatprep.subr.mxu0 0.0
    %1166 = vmatpush1.msra.mxu0 0.0
    %1167 = vmatprep.subr.mxu0 0.0
    %1168 = vmatpush1.msra.mxu0 0.0
    %1169 = vmatprep.subr.mxu0 0.0
    %1170 = vmatpush1.msra.mxu0 0.0
    %1171 = vmatprep.subr.mxu0 0.0
    %1172 = vmatpush1.msra.mxu0 0.0
    %1173 = vmatprep.subr.mxu0 0.0
    %1174 = vmatpush1.msra.mxu0 0.0
    %1175 = vmatprep.subr.mxu0 0.0
    %1176 = vmatpush1.msra.mxu0 0.0
    %1177 = vmatprep.subr.mxu0 0.0
    %1178 = vmatpush1.msra.mxu0 0.0
    %1179 = vmatprep.subr.mxu0 0.0
    %1180 = vmatpush1.msra.mxu0 0.0
    %1181 = vmatprep.subr.mxu0 0.0
    %1182 = vmatpush1.msra.mxu0 0.0
    %1183 = vmatprep.subr.mxu0 0.0
    %1184 = vmatpush1.msra.mxu0 0.0
    %1185 = vmatprep.subr.mxu0 0.0
    %1186 = vmatpush1.msra.mxu0 0.0
    %1187 = vmatprep.subr.mxu0 0.0
    %1188 = vmatpush1.msra.mxu0 0.0
    %1189 = vmatprep.subr.mxu0 0.0
    %1190 = vmatpush1.msra.mxu0 0.0
    %1191 = vmatprep.subr.mxu0 0.0
    %1192 = vmatpush1.msra.mxu0 0.0
    %1193 = vmatprep.mubr.f32.mxu0 0.0
    %1194 = vmatmul.mubr.f32.gmra.mrb[0].mxu0 %v1127
    %v1195 = vpop.f32.mrb[0].mxu0
    %v1196 = vadd.f32 0.0, %v1195
    %v1197 = vpop.f32.mrb[0].mxu0
    %1198 = vdwg.mxu0
    %v1199 = vadd.f32 %v974, %v1047
    %v1200 = vadd.f32 %v1049, %v1123
    %v1201 = vadd.f32 %v1200, %v167
    %v1202 = vadd.f32 %v1125, %v1196
    %v1203 = vadd.f32 %v1202, %v174
    %v1204 = vxor.u32 %v1199, 2147483648
    %v1205 = vmul.f32 %v1204, 1.442695
    %v1206 = vpow.pop %v1205
    %v1207 = vadd.f32 %v1206, 1.0
    %v1208 = vrcp.pop %v1207
    %v1209 = vmul.f32 1.0, %v1208
    %1211 = vrot.lane.b32.xlu0 %v1199, 32
    %v1212 = vpop.permute.xlu0 %1211
    %v1214 = vmul.f32 %v1209, %v1212
    %1216 = vrot.lane.b32.xlu0 %v1214, 64
    %v1217 = vpop.permute.xlu0 %1216
    %v1219 = vadd.f32 %v1199, %v1217
    %v1220 = vtanh.pop %v1219
    %v1221 = vsub.f32 1.0, %v1209
    %1223 = vrot.lane.b32.xlu0 %v1220, 96
    %v1224 = vpop.permute.xlu0 %1223
    %v1226 = vmul.f32 %v1221, %v1224
    %v1227 = vmul.f32 %v1209, %v917
    %v1228 = vadd.f32 %v1226, %v1227
    %v1229 = vxor.u32 %v1201, 2147483648
    %v1230 = vmul.f32 %v1229, 1.442695
    %v1231 = vpow.pop %v1230
    %v1232 = vadd.f32 %v1231, 1.0
    %v1233 = vrcp.pop %v1232
    %v1234 = vmul.f32 1.0, %v1233
    %1236 = vrot.lane.b32.xlu0 %v1201, 32
    %v1237 = vpop.permute.xlu0 %1236
    %v1239 = vmul.f32 %v1234, %v1237
    %1241 = vrot.lane.b32.xlu0 %v1239, 64
    %v1242 = vpop.permute.xlu0 %1241
    %v1244 = vadd.f32 %v1201, %v1242
    %v1245 = vtanh.pop %v1244
    %v1246 = vsub.f32 1.0, %v1234
    %1248 = vrot.lane.b32.xlu0 %v1245, 96
    %v1249 = vpop.permute.xlu0 %1248
    %v1251 = vmul.f32 %v1246, %v1249
    %v1252 = vmul.f32 %v1234, %v942
    %v1253 = vadd.f32 %v1251, %v1252
    %v1254 = vxor.u32 %v1203, 2147483648
    %v1255 = vmul.f32 %v1254, 1.442695
    %v1256 = vpow.pop %v1255
    %v1257 = vadd.f32 %v1256, 1.0
    %v1258 = vrcp.pop %v1257
    %v1259 = vmul.f32 1.0, %v1258
    %1261 = vrot.lane.b32.xlu0 %v1203, 32
    %v1262 = vpop.permute.xlu0 %1261
    %v1264 = vmul.f32 %v1259, %v1262
    %1266 = vrot.lane.b32.xlu0 %v1264, 64
    %v1267 = vpop.permute.xlu0 %1266
    %v1269 = vadd.f32 %v1203, %v1267
    %v1270 = vtanh.pop %v1269
    %v1271 = vsub.f32 1.0, %v1259
    %1273 = vrot.lane.b32.xlu0 %v1270, 96
    %v1274 = vpop.permute.xlu0 %1273
    %v1276 = vmul.f32 %v1271, %v1274
    %v1277 = vmul.f32 %v1259, %v967
    %v1278 = vadd.f32 %v1276, %v1277
    %1280 = vrot.lane.b32.xlu0 %v1278, 96
    %v1281 = vpop.permute.xlu0 %1280
    %s1283 = scalar_lea.vmem [#allocation3], 8
    %1284 = vst.msk [vmem:[%s1283] sm:$0xff] %vm314, %v1281
    %s1285 = scalar_lea.vmem [#allocation2], 32
    %v1286 = vld [vmem:[%s1285] sm:$0xff]
    %1288 = vrot.lane.b32.xlu0 %v1228, 96
    %v1289 = vpop.permute.xlu0 %1288
    %v1290 = vsel %vm314, %v1289, 0
    %1292 = vmatprep.subr.mxu0 %v143
    %1293 = vmatpush1.msra.mxu0 %v142
    %1294 = vmatprep.subr.mxu0 %v145
    %1295 = vmatpush1.msra.mxu0 %v144
    %1296 = vmatprep.subr.mxu0 %v147
    %1297 = vmatpush1.msra.mxu0 %v146
    %1298 = vmatprep.subr.mxu0 %v149
    %1299 = vmatpush1.msra.mxu0 %v148
    %1300 = vmatprep.subr.mxu0 0.0
    %1301 = vmatpush1.msra.mxu0 0.0
    %1302 = vmatprep.subr.mxu0 0.0
    %1303 = vmatpush1.msra.mxu0 0.0
    %1304 = vmatprep.subr.mxu0 0.0
    %1305 = vmatpush1.msra.mxu0 0.0
    %1306 = vmatprep.subr.mxu0 0.0
    %1307 = vmatpush1.msra.mxu0 0.0
    %1308 = vmatprep.subr.mxu0 0.0
    %1309 = vmatpush1.msra.mxu0 0.0
    %1310 = vmatprep.subr.mxu0 0.0
    %1311 = vmatpush1.msra.mxu0 0.0
    %1312 = vmatprep.subr.mxu0 0.0
    %1313 = vmatpush1.msra.mxu0 0.0
    %1314 = vmatprep.subr.mxu0 0.0
    %1315 = vmatpush1.msra.mxu0 0.0
    %1316 = vmatprep.subr.mxu0 0.0
    %1317 = vmatpush1.msra.mxu0 0.0
    %1318 = vmatprep.subr.mxu0 0.0
    %1319 = vmatpush1.msra.mxu0 0.0
    %1320 = vmatprep.subr.mxu0 0.0
    %1321 = vmatpush1.msra.mxu0 0.0
    %1322 = vmatprep.subr.mxu0 0.0
    %1323 = vmatpush1.msra.mxu0 0.0
    %1324 = vmatprep.subr.mxu0 0.0
    %1325 = vmatpush1.msra.mxu0 0.0
    %1326 = vmatprep.subr.mxu0 0.0
    %1327 = vmatpush1.msra.mxu0 0.0
    %1328 = vmatprep.subr.mxu0 0.0
    %1329 = vmatpush1.msra.mxu0 0.0
    %1330 = vmatprep.subr.mxu0 0.0
    %1331 = vmatpush1.msra.mxu0 0.0
    %1332 = vmatprep.subr.mxu0 0.0
    %1333 = vmatpush1.msra.mxu0 0.0
    %1334 = vmatprep.subr.mxu0 0.0
    %1335 = vmatpush1.msra.mxu0 0.0
    %1336 = vmatprep.subr.mxu0 0.0
    %1337 = vmatpush1.msra.mxu0 0.0
    %1338 = vmatprep.subr.mxu0 0.0
    %1339 = vmatpush1.msra.mxu0 0.0
    %1340 = vmatprep.subr.mxu0 0.0
    %1341 = vmatpush1.msra.mxu0 0.0
    %1342 = vmatprep.subr.mxu0 0.0
    %1343 = vmatpush1.msra.mxu0 0.0
    %1344 = vmatprep.subr.mxu0 0.0
    %1345 = vmatpush1.msra.mxu0 0.0
    %1346 = vmatprep.subr.mxu0 0.0
    %1347 = vmatpush1.msra.mxu0 0.0
    %1348 = vmatprep.subr.mxu0 0.0
    %1349 = vmatpush1.msra.mxu0 0.0
    %1350 = vmatprep.subr.mxu0 0.0
    %1351 = vmatpush1.msra.mxu0 0.0
    %1352 = vmatprep.subr.mxu0 0.0
    %1353 = vmatpush1.msra.mxu0 0.0
    %1354 = vmatprep.subr.mxu0 0.0
    %1355 = vmatpush1.msra.mxu0 0.0
    %1356 = vmatprep.mubr.f32.mxu0 0.0
    %1357 = vmatmul.mubr.f32.gmra.mrb[0].mxu0 %v1290
    %v1358 = vpop.f32.mrb[0].mxu0
    %v1359 = vadd.f32 0.0, %v1358
    %v1360 = vpop.f32.mrb[0].mxu0
    %v1361 = vadd.f32 0.0, %v1360
    %1362 = vdwg.mxu0
    %1364 = vrot.lane.b32.xlu0 %v1253, 96
    %v1365 = vpop.permute.xlu0 %1364
    %v1366 = vsel %vm314, %v1365, 0
    %1368 = vmatprep.subr.mxu0 %v151
    %1369 = vmatpush1.msra.mxu0 %v150
    %1370 = vmatprep.subr.mxu0 %v153
    %1371 = vmatpush1.msra.mxu0 %v152
    %1372 = vmatprep.subr.mxu0 %v155
    %1373 = vmatpush1.msra.mxu0 %v154
    %1374 = vmatprep.subr.mxu0 %v157
    %1375 = vmatpush1.msra.mxu0 %v156
    %1376 = vmatprep.subr.mxu0 0.0
    %1377 = vmatpush1.msra.mxu0 0.0
    %1378 = vmatprep.subr.mxu0 0.0
    %1379 = vmatpush1.msra.mxu0 0.0
    %1380 = vmatprep.subr.mxu0 0.0
    %1381 = vmatpush1.msra.mxu0 0.0
    %1382 = vmatprep.subr.mxu0 0.0
    %1383 = vmatpush1.msra.mxu0 0.0
    %1384 = vmatprep.subr.mxu0 0.0
    %1385 = vmatpush1.msra.mxu0 0.0
    %1386 = vmatprep.subr.mxu0 0.0
    %1387 = vmatpush1.msra.mxu0 0.0
    %1388 = vmatprep.subr.mxu0 0.0
    %1389 = vmatpush1.msra.mxu0 0.0
    %1390 = vmatprep.subr.mxu0 0.0
    %1391 = vmatpush1.msra.mxu0 0.0
    %1392 = vmatprep.subr.mxu0 0.0
    %1393 = vmatpush1.msra.mxu0 0.0
    %1394 = vmatprep.subr.mxu0 0.0
    %1395 = vmatpush1.msra.mxu0 0.0
    %1396 = vmatprep.subr.mxu0 0.0
    %1397 = vmatpush1.msra.mxu0 0.0
    %1398 = vmatprep.subr.mxu0 0.0
    %1399 = vmatpush1.msra.mxu0 0.0
    %1400 = vmatprep.subr.mxu0 0.0
    %1401 = vmatpush1.msra.mxu0 0.0
    %1402 = vmatprep.subr.mxu0 0.0
    %1403 = vmatpush1.msra.mxu0 0.0
    %1404 = vmatprep.subr.mxu0 0.0
    %1405 = vmatpush1.msra.mxu0 0.0
    %1406 = vmatprep.subr.mxu0 0.0
    %1407 = vmatpush1.msra.mxu0 0.0
    %1408 = vmatprep.subr.mxu0 0.0
    %1409 = vmatpush1.msra.mxu0 0.0
    %1410 = vmatprep.subr.mxu0 0.0
    %1411 = vmatpush1.msra.mxu0 0.0
    %1412 = vmatprep.subr.mxu0 0.0
    %1413 = vmatpush1.msra.mxu0 0.0
    %1414 = vmatprep.subr.mxu0 0.0
    %1415 = vmatpush1.msra.mxu0 0.0
    %1416 = vmatprep.subr.mxu0 0.0
    %1417 = vmatpush1.msra.mxu0 0.0
    %1418 = vmatprep.subr.mxu0 0.0
    %1419 = vmatpush1.msra.mxu0 0.0
    %1420 = vmatprep.subr.mxu0 0.0
    %1421 = vmatpush1.msra.mxu0 0.0
    %1422 = vmatprep.subr.mxu0 0.0
    %1423 = vmatpush1.msra.mxu0 0.0
    %1424 = vmatprep.subr.mxu0 0.0
    %1425 = vmatpush1.msra.mxu0 0.0
    %1426 = vmatprep.subr.mxu0 0.0
    %1427 = vmatpush1.msra.mxu0 0.0
    %1428 = vmatprep.subr.mxu0 0.0
    %1429 = vmatpush1.msra.mxu0 0.0
    %1430 = vmatprep.subr.mxu0 0.0
    %1431 = vmatpush1.msra.mxu0 0.0
    %1432 = vmatprep.mubr.f32.mxu0 0.0
    %1433 = vmatmul.mubr.f32.gmra.mrb[0].mxu0 %v1366
    %v1434 = vpop.f32.mrb[0].mxu0
    %v1435 = vadd.f32 0.0, %v1434
    %v1436 = vpop.f32.mrb[0].mxu0
    %v1437 = vadd.f32 0.0, %v1436
    %1438 = vdwg.mxu0
    %v1439 = vsel %vm314, %v1281, 0
    %1441 = vmatprep.subr.mxu0 0.0
    %1442 = vmatpush1.msra.mxu0 %v158
    %1443 = vmatprep.subr.mxu0 0.0
    %1444 = vmatpush1.msra.mxu0 %v159
    %1445 = vmatprep.subr.mxu0 0.0
    %1446 = vmatpush1.msra.mxu0 %v160
    %1447 = vmatprep.subr.mxu0 0.0
    %1448 = vmatpush1.msra.mxu0 %v161
    %1449 = vmatprep.subr.mxu0 0.0
    %1450 = vmatpush1.msra.mxu0 0.0
    %1451 = vmatprep.subr.mxu0 0.0
    %1452 = vmatpush1.msra.mxu0 0.0
    %1453 = vmatprep.subr.mxu0 0.0
    %1454 = vmatpush1.msra.mxu0 0.0
    %1455 = vmatprep.subr.mxu0 0.0
    %1456 = vmatpush1.msra.mxu0 0.0
    %1457 = vmatprep.subr.mxu0 0.0
    %1458 = vmatpush1.msra.mxu0 0.0
    %1459 = vmatprep.subr.mxu0 0.0
    %1460 = vmatpush1.msra.mxu0 0.0
    %1461 = vmatprep.subr.mxu0 0.0
    %1462 = vmatpush1.msra.mxu0 0.0
    %1463 = vmatprep.subr.mxu0 0.0
    %1464 = vmatpush1.msra.mxu0 0.0
    %1465 = vmatprep.subr.mxu0 0.0
    %1466 = vmatpush1.msra.mxu0 0.0
    %1467 = vmatprep.subr.mxu0 0.0
    %1468 = vmatpush1.msra.mxu0 0.0
    %1469 = vmatprep.subr.mxu0 0.0
    %1470 = vmatpush1.msra.mxu0 0.0
    %1471 = vmatprep.subr.mxu0 0.0
    %1472 = vmatpush1.msra.mxu0 0.0
    %1473 = vmatprep.subr.mxu0 0.0
    %1474 = vmatpush1.msra.mxu0 0.0
    %1475 = vmatprep.subr.mxu0 0.0
    %1476 = vmatpush1.msra.mxu0 0.0
    %1477 = vmatprep.subr.mxu0 0.0
    %1478 = vmatpush1.msra.mxu0 0.0
    %1479 = vmatprep.subr.mxu0 0.0
    %1480 = vmatpush1.msra.mxu0 0.0
    %1481 = vmatprep.subr.mxu0 0.0
    %1482 = vmatpush1.msra.mxu0 0.0
    %1483 = vmatprep.subr.mxu0 0.0
    %1484 = vmatpush1.msra.mxu0 0.0
    %1485 = vmatprep.subr.mxu0 0.0
    %1486 = vmatpush1.msra.mxu0 0.0
    %1487 = vmatprep.subr.mxu0 0.0
    %1488 = vmatpush1.msra.mxu0 0.0
    %1489 = vmatprep.subr.mxu0 0.0
    %1490 = vmatpush1.msra.mxu0 0.0
    %1491 = vmatprep.subr.mxu0 0.0
    %1492 = vmatpush1.msra.mxu0 0.0
    %1493 = vmatprep.subr.mxu0 0.0
    %1494 = vmatpush1.msra.mxu0 0.0
    %1495 = vmatprep.subr.mxu0 0.0
    %1496 = vmatpush1.msra.mxu0 0.0
    %1497 = vmatprep.subr.mxu0 0.0
    %1498 = vmatpush1.msra.mxu0 0.0
    %1499 = vmatprep.subr.mxu0 0.0
    %1500 = vmatpush1.msra.mxu0 0.0
    %1501 = vmatprep.subr.mxu0 0.0
    %1502 = vmatpush1.msra.mxu0 0.0
    %1503 = vmatprep.subr.mxu0 0.0
    %1504 = vmatpush1.msra.mxu0 0.0
    %1505 = vmatprep.mubr.f32.mxu0 0.0
    %1506 = vmatmul.mubr.f32.gmra.mrb[0].mxu0 %v1439
    %v1507 = vpop.f32.mrb[0].mxu0
    %v1508 = vadd.f32 0.0, %v1507
    %v1509 = vpop.f32.mrb[0].mxu0
    %1510 = vdwg.mxu0
    %v1511 = vadd.f32 %v1286, %v1359
    %v1512 = vadd.f32 %v1361, %v1435
    %v1513 = vadd.f32 %v1512, %v167
    %v1514 = vadd.f32 %v1437, %v1508
    %v1515 = vadd.f32 %v1514, %v174
    %v1516 = vxor.u32 %v1511, 2147483648
    %v1517 = vmul.f32 %v1516, 1.442695
    %v1518 = vpow.pop %v1517
    %v1519 = vadd.f32 %v1518, 1.0
    %v1520 = vrcp.pop %v1519
    %v1521 = vmul.f32 1.0, %v1520
    %1523 = vrot.lane.b32.xlu0 %v1511, 32
    %v1524 = vpop.permute.xlu0 %1523
    %v1526 = vmul.f32 %v1521, %v1524
    %1528 = vrot.lane.b32.xlu0 %v1526, 64
    %v1529 = vpop.permute.xlu0 %1528
    %v1531 = vadd.f32 %v1511, %v1529
    %v1532 = vtanh.pop %v1531
    %v1533 = vsub.f32 1.0, %v1521
    %1535 = vrot.lane.b32.xlu0 %v1532, 96
    %v1536 = vpop.permute.xlu0 %1535
    %v1538 = vmul.f32 %v1533, %v1536
    %v1539 = vmul.f32 %v1521, %v1228
    %v1540 = vadd.f32 %v1538, %v1539
    %v1541 = vxor.u32 %v1513, 2147483648
    %v1542 = vmul.f32 %v1541, 1.442695
    %v1543 = vpow.pop %v1542
    %v1544 = vadd.f32 %v1543, 1.0
    %v1545 = vrcp.pop %v1544
    %v1546 = vmul.f32 1.0, %v1545
    %1548 = vrot.lane.b32.xlu0 %v1513, 32
    %v1549 = vpop.permute.xlu0 %1548
    %v1551 = vmul.f32 %v1546, %v1549
    %1553 = vrot.lane.b32.xlu0 %v1551, 64
    %v1554 = vpop.permute.xlu0 %1553
    %v1556 = vadd.f32 %v1513, %v1554
    %v1557 = vtanh.pop %v1556
    %v1558 = vsub.f32 1.0, %v1546
    %1560 = vrot.lane.b32.xlu0 %v1557, 96
    %v1561 = vpop.permute.xlu0 %1560
    %v1563 = vmul.f32 %v1558, %v1561
    %v1564 = vmul.f32 %v1546, %v1253
    %v1565 = vadd.f32 %v1563, %v1564
    %v1566 = vxor.u32 %v1515, 2147483648
    %v1567 = vmul.f32 %v1566, 1.442695
    %v1568 = vpow.pop %v1567
    %v1569 = vadd.f32 %v1568, 1.0
    %v1570 = vrcp.pop %v1569
    %v1571 = vmul.f32 1.0, %v1570
    %1573 = vrot.lane.b32.xlu0 %v1515, 32
    %v1574 = vpop.permute.xlu0 %1573
    %v1576 = vmul.f32 %v1571, %v1574
    %1578 = vrot.lane.b32.xlu0 %v1576, 64
    %v1579 = vpop.permute.xlu0 %1578
    %v1581 = vadd.f32 %v1515, %v1579
    %v1582 = vtanh.pop %v1581
    %v1583 = vsub.f32 1.0, %v1571
    %1585 = vrot.lane.b32.xlu0 %v1582, 96
    %v1586 = vpop.permute.xlu0 %1585
    %v1588 = vmul.f32 %v1583, %v1586
    %v1589 = vmul.f32 %v1571, %v1278
    %v1590 = vadd.f32 %v1588, %v1589
    %1592 = vrot.lane.b32.xlu0 %v1590, 96
    %v1593 = vpop.permute.xlu0 %1592
    %s1595 = scalar_lea.vmem [#allocation3], 16
    %1596 = vst.msk [vmem:[%s1595] sm:$0xff] %vm314, %v1593
    %s1597 = scalar_lea.vmem [#allocation2], 40
    %v1598 = vld [vmem:[%s1597] sm:$0xff]
    %1600 = vrot.lane.b32.xlu0 %v1540, 96
    %v1601 = vpop.permute.xlu0 %1600
    %v1602 = vsel %vm314, %v1601, 0
    %1604 = vmatprep.subr.mxu0 %v143
    %1605 = vmatpush1.msra.mxu0 %v142
    %1606 = vmatprep.subr.mxu0 %v145
    %1607 = vmatpush1.msra.mxu0 %v144
    %1608 = vmatprep.subr.mxu0 %v147
    %1609 = vmatpush1.msra.mxu0 %v146
    %1610 = vmatprep.subr.mxu0 %v149
    %1611 = vmatpush1.msra.mxu0 %v148
    %1612 = vmatprep.subr.mxu0 0.0
    %1613 = vmatpush1.msra.mxu0 0.0
    %1614 = vmatprep.subr.mxu0 0.0
    %1615 = vmatpush1.msra.mxu0 0.0
    %1616 = vmatprep.subr.mxu0 0.0
    %1617 = vmatpush1.msra.mxu0 0.0
    %1618 = vmatprep.subr.mxu0 0.0
    %1619 = vmatpush1.msra.mxu0 0.0
    %1620 = vmatprep.subr.mxu0 0.0
    %1621 = vmatpush1.msra.mxu0 0.0
    %1622 = vmatprep.subr.mxu0 0.0
    %1623 = vmatpush1.msra.mxu0 0.0
    %1624 = vmatprep.subr.mxu0 0.0
    %1625 = vmatpush1.msra.mxu0 0.0
    %1626 = vmatprep.subr.mxu0 0.0
    %1627 = vmatpush1.msra.mxu0 0.0
    %1628 = vmatprep.subr.mxu0 0.0
    %1629 = vmatpush1.msra.mxu0 0.0
    %1630 = vmatprep.subr.mxu0 0.0
    %1631 = vmatpush1.msra.mxu0 0.0
    %1632 = vmatprep.subr.mxu0 0.0
    %1633 = vmatpush1.msra.mxu0 0.0
    %1634 = vmatprep.subr.mxu0 0.0
    %1635 = vmatpush1.msra.mxu0 0.0
    %1636 = vmatprep.subr.mxu0 0.0
    %1637 = vmatpush1.msra.mxu0 0.0
    %1638 = vmatprep.subr.mxu0 0.0
    %1639 = vmatpush1.msra.mxu0 0.0
    %1640 = vmatprep.subr.mxu0 0.0
    %1641 = vmatpush1.msra.mxu0 0.0
    %1642 = vmatprep.subr.mxu0 0.0
    %1643 = vmatpush1.msra.mxu0 0.0
    %1644 = vmatprep.subr.mxu0 0.0
    %1645 = vmatpush1.msra.mxu0 0.0
    %1646 = vmatprep.subr.mxu0 0.0
    %1647 = vmatpush1.msra.mxu0 0.0
    %1648 = vmatprep.subr.mxu0 0.0
    %1649 = vmatpush1.msra.mxu0 0.0
    %1650 = vmatprep.subr.mxu0 0.0
    %1651 = vmatpush1.msra.mxu0 0.0
    %1652 = vmatprep.subr.mxu0 0.0
    %1653 = vmatpush1.msra.mxu0 0.0
    %1654 = vmatprep.subr.mxu0 0.0
    %1655 = vmatpush1.msra.mxu0 0.0
    %1656 = vmatprep.subr.mxu0 0.0
    %1657 = vmatpush1.msra.mxu0 0.0
    %1658 = vmatprep.subr.mxu0 0.0
    %1659 = vmatpush1.msra.mxu0 0.0
    %1660 = vmatprep.subr.mxu0 0.0
    %1661 = vmatpush1.msra.mxu0 0.0
    %1662 = vmatprep.subr.mxu0 0.0
    %1663 = vmatpush1.msra.mxu0 0.0
    %1664 = vmatprep.subr.mxu0 0.0
    %1665 = vmatpush1.msra.mxu0 0.0
    %1666 = vmatprep.subr.mxu0 0.0
    %1667 = vmatpush1.msra.mxu0 0.0
    %1668 = vmatprep.mubr.f32.mxu0 0.0
    %1669 = vmatmul.mubr.f32.gmra.mrb[0].mxu0 %v1602
    %v1670 = vpop.f32.mrb[0].mxu0
    %v1671 = vadd.f32 0.0, %v1670
    %v1672 = vpop.f32.mrb[0].mxu0
    %v1673 = vadd.f32 0.0, %v1672
    %1674 = vdwg.mxu0
    %1676 = vrot.lane.b32.xlu0 %v1565, 96
    %v1677 = vpop.permute.xlu0 %1676
    %v1678 = vsel %vm314, %v1677, 0
    %1680 = vmatprep.subr.mxu0 %v151
    %1681 = vmatpush1.msra.mxu0 %v150
    %1682 = vmatprep.subr.mxu0 %v153
    %1683 = vmatpush1.msra.mxu0 %v152
    %1684 = vmatprep.subr.mxu0 %v155
    %1685 = vmatpush1.msra.mxu0 %v154
    %1686 = vmatprep.subr.mxu0 %v157
    %1687 = vmatpush1.msra.mxu0 %v156
    %1688 = vmatprep.subr.mxu0 0.0
    %1689 = vmatpush1.msra.mxu0 0.0
    %1690 = vmatprep.subr.mxu0 0.0
    %1691 = vmatpush1.msra.mxu0 0.0
    %1692 = vmatprep.subr.mxu0 0.0
    %1693 = vmatpush1.msra.mxu0 0.0
    %1694 = vmatprep.subr.mxu0 0.0
    %1695 = vmatpush1.msra.mxu0 0.0
    %1696 = vmatprep.subr.mxu0 0.0
    %1697 = vmatpush1.msra.mxu0 0.0
    %1698 = vmatprep.subr.mxu0 0.0
    %1699 = vmatpush1.msra.mxu0 0.0
    %1700 = vmatprep.subr.mxu0 0.0
    %1701 = vmatpush1.msra.mxu0 0.0
    %1702 = vmatprep.subr.mxu0 0.0
    %1703 = vmatpush1.msra.mxu0 0.0
    %1704 = vmatprep.subr.mxu0 0.0
    %1705 = vmatpush1.msra.mxu0 0.0
    %1706 = vmatprep.subr.mxu0 0.0
    %1707 = vmatpush1.msra.mxu0 0.0
    %1708 = vmatprep.subr.mxu0 0.0
    %1709 = vmatpush1.msra.mxu0 0.0
    %1710 = vmatprep.subr.mxu0 0.0
    %1711 = vmatpush1.msra.mxu0 0.0
    %1712 = vmatprep.subr.mxu0 0.0
    %1713 = vmatpush1.msra.mxu0 0.0
    %1714 = vmatprep.subr.mxu0 0.0
    %1715 = vmatpush1.msra.mxu0 0.0
    %1716 = vmatprep.subr.mxu0 0.0
    %1717 = vmatpush1.msra.mxu0 0.0
    %1718 = vmatprep.subr.mxu0 0.0
    %1719 = vmatpush1.msra.mxu0 0.0
    %1720 = vmatprep.subr.mxu0 0.0
    %1721 = vmatpush1.msra.mxu0 0.0
    %1722 = vmatprep.subr.mxu0 0.0
    %1723 = vmatpush1.msra.mxu0 0.0
    %1724 = vmatprep.subr.mxu0 0.0
    %1725 = vmatpush1.msra.mxu0 0.0
    %1726 = vmatprep.subr.mxu0 0.0
    %1727 = vmatpush1.msra.mxu0 0.0
    %1728 = vmatprep.subr.mxu0 0.0
    %1729 = vmatpush1.msra.mxu0 0.0
    %1730 = vmatprep.subr.mxu0 0.0
    %1731 = vmatpush1.msra.mxu0 0.0
    %1732 = vmatprep.subr.mxu0 0.0
    %1733 = vmatpush1.msra.mxu0 0.0
    %1734 = vmatprep.subr.mxu0 0.0
    %1735 = vmatpush1.msra.mxu0 0.0
    %1736 = vmatprep.subr.mxu0 0.0
    %1737 = vmatpush1.msra.mxu0 0.0
    %1738 = vmatprep.subr.mxu0 0.0
    %1739 = vmatpush1.msra.mxu0 0.0
    %1740 = vmatprep.subr.mxu0 0.0
    %1741 = vmatpush1.msra.mxu0 0.0
    %1742 = vmatprep.subr.mxu0 0.0
    %1743 = vmatpush1.msra.mxu0 0.0
    %1744 = vmatprep.mubr.f32.mxu0 0.0
    %1745 = vmatmul.mubr.f32.gmra.mrb[0].mxu0 %v1678
    %v1746 = vpop.f32.mrb[0].mxu0
    %v1747 = vadd.f32 0.0, %v1746
    %v1748 = vpop.f32.mrb[0].mxu0
    %v1749 = vadd.f32 0.0, %v1748
    %1750 = vdwg.mxu0
    %v1751 = vsel %vm314, %v1593, 0
    %1753 = vmatprep.subr.mxu0 0.0
    %1754 = vmatpush1.msra.mxu0 %v158
    %1755 = vmatprep.subr.mxu0 0.0
    %1756 = vmatpush1.msra.mxu0 %v159
    %1757 = vmatprep.subr.mxu0 0.0
    %1758 = vmatpush1.msra.mxu0 %v160
    %1759 = vmatprep.subr.mxu0 0.0
    %1760 = vmatpush1.msra.mxu0 %v161
    %1761 = vmatprep.subr.mxu0 0.0
    %1762 = vmatpush1.msra.mxu0 0.0
    %1763 = vmatprep.subr.mxu0 0.0
    %1764 = vmatpush1.msra.mxu0 0.0
    %1765 = vmatprep.subr.mxu0 0.0
    %1766 = vmatpush1.msra.mxu0 0.0
    %1767 = vmatprep.subr.mxu0 0.0
    %1768 = vmatpush1.msra.mxu0 0.0
    %1769 = vmatprep.subr.mxu0 0.0
    %1770 = vmatpush1.msra.mxu0 0.0
    %1771 = vmatprep.subr.mxu0 0.0
    %1772 = vmatpush1.msra.mxu0 0.0
    %1773 = vmatprep.subr.mxu0 0.0
    %1774 = vmatpush1.msra.mxu0 0.0
    %1775 = vmatprep.subr.mxu0 0.0
    %1776 = vmatpush1.msra.mxu0 0.0
    %1777 = vmatprep.subr.mxu0 0.0
    %1778 = vmatpush1.msra.mxu0 0.0
    %1779 = vmatprep.subr.mxu0 0.0
    %1780 = vmatpush1.msra.mxu0 0.0
    %1781 = vmatprep.subr.mxu0 0.0
    %1782 = vmatpush1.msra.mxu0 0.0
    %1783 = vmatprep.subr.mxu0 0.0
    %1784 = vmatpush1.msra.mxu0 0.0
    %1785 = vmatprep.subr.mxu0 0.0
    %1786 = vmatpush1.msra.mxu0 0.0
    %1787 = vmatprep.subr.mxu0 0.0
    %1788 = vmatpush1.msra.mxu0 0.0
    %1789 = vmatprep.subr.mxu0 0.0
    %1790 = vmatpush1.msra.mxu0 0.0
    %1791 = vmatprep.subr.mxu0 0.0
    %1792 = vmatpush1.msra.mxu0 0.0
    %1793 = vmatprep.subr.mxu0 0.0
    %1794 = vmatpush1.msra.mxu0 0.0
    %1795 = vmatprep.subr.mxu0 0.0
    %1796 = vmatpush1.msra.mxu0 0.0
    %1797 = vmatprep.subr.mxu0 0.0
    %1798 = vmatpush1.msra.mxu0 0.0
    %1799 = vmatprep.subr.mxu0 0.0
    %1800 = vmatpush1.msra.mxu0 0.0
    %1801 = vmatprep.subr.mxu0 0.0
    %1802 = vmatpush1.msra.mxu0 0.0
    %1803 = vmatprep.subr.mxu0 0.0
    %1804 = vmatpush1.msra.mxu0 0.0
    %1805 = vmatprep.subr.mxu0 0.0
    %1806 = vmatpush1.msra.mxu0 0.0
    %1807 = vmatprep.subr.mxu0 0.0
    %1808 = vmatpush1.msra.mxu0 0.0
    %1809 = vmatprep.subr.mxu0 0.0
    %1810 = vmatpush1.msra.mxu0 0.0
    %1811 = vmatprep.subr.mxu0 0.0
    %1812 = vmatpush1.msra.mxu0 0.0
    %1813 = vmatprep.subr.mxu0 0.0
    %1814 = vmatpush1.msra.mxu0 0.0
    %1815 = vmatprep.subr.mxu0 0.0
    %1816 = vmatpush1.msra.mxu0 0.0
    %1817 = vmatprep.mubr.f32.mxu0 0.0
    %1818 = vmatmul.mubr.f32.gmra.mrb[0].mxu0 %v1751
    %v1819 = vpop.f32.mrb[0].mxu0
    %v1820 = vadd.f32 0.0, %v1819
    %v1821 = vpop.f32.mrb[0].mxu0
    %1822 = vdwg.mxu0
    %v1823 = vadd.f32 %v1598, %v1671
    %v1824 = vadd.f32 %v1673, %v1747
    %v1825 = vadd.f32 %v1824, %v167
    %v1826 = vadd.f32 %v1749, %v1820
    %v1827 = vadd.f32 %v1826, %v174
    %v1828 = vxor.u32 %v1823, 2147483648
    %v1829 = vmul.f32 %v1828, 1.442695
    %v1830 = vpow.pop %v1829
    %v1831 = vadd.f32 %v1830, 1.0
    %v1832 = vrcp.pop %v1831
    %v1833 = vmul.f32 1.0, %v1832
    %1835 = vrot.lane.b32.xlu0 %v1823, 32
    %v1836 = vpop.permute.xlu0 %1835
    %v1838 = vmul.f32 %v1833, %v1836
    %1840 = vrot.lane.b32.xlu0 %v1838, 64
    %v1841 = vpop.permute.xlu0 %1840
    %v1843 = vadd.f32 %v1823, %v1841
    %v1844 = vtanh.pop %v1843
    %v1845 = vsub.f32 1.0, %v1833
    %1847 = vrot.lane.b32.xlu0 %v1844, 96
    %v1848 = vpop.permute.xlu0 %1847
    %v1850 = vmul.f32 %v1845, %v1848
    %v1851 = vmul.f32 %v1833, %v1540
    %v1852 = vadd.f32 %v1850, %v1851
    %v1853 = vxor.u32 %v1825, 2147483648
    %v1854 = vmul.f32 %v1853, 1.442695
    %v1855 = vpow.pop %v1854
    %v1856 = vadd.f32 %v1855, 1.0
    %v1857 = vrcp.pop %v1856
    %v1858 = vmul.f32 1.0, %v1857
    %1860 = vrot.lane.b32.xlu0 %v1825, 32
    %v1861 = vpop.permute.xlu0 %1860
    %v1863 = vmul.f32 %v1858, %v1861
    %1865 = vrot.lane.b32.xlu0 %v1863, 64
    %v1866 = vpop.permute.xlu0 %1865
    %v1868 = vadd.f32 %v1825, %v1866
    %v1869 = vtanh.pop %v1868
    %v1870 = vsub.f32 1.0, %v1858
    %1872 = vrot.lane.b32.xlu0 %v1869, 96
    %v1873 = vpop.permute.xlu0 %1872
    %v1875 = vmul.f32 %v1870, %v1873
    %v1876 = vmul.f32 %v1858, %v1565
    %v1877 = vadd.f32 %v1875, %v1876
    %v1878 = vxor.u32 %v1827, 2147483648
    %v1879 = vmul.f32 %v1878, 1.442695
    %v1880 = vpow.pop %v1879
    %v1881 = vadd.f32 %v1880, 1.0
    %v1882 = vrcp.pop %v1881
    %v1883 = vmul.f32 1.0, %v1882
    %1885 = vrot.lane.b32.xlu0 %v1827, 32
    %v1886 = vpop.permute.xlu0 %1885
    %v1888 = vmul.f32 %v1883, %v1886
    %1890 = vrot.lane.b32.xlu0 %v1888, 64
    %v1891 = vpop.permute.xlu0 %1890
    %v1893 = vadd.f32 %v1827, %v1891
    %v1894 = vtanh.pop %v1893
    %v1895 = vsub.f32 1.0, %v1883
    %1897 = vrot.lane.b32.xlu0 %v1894, 96
    %v1898 = vpop.permute.xlu0 %1897
    %v1900 = vmul.f32 %v1895, %v1898
    %v1901 = vmul.f32 %v1883, %v1590
    %v1902 = vadd.f32 %v1900, %v1901
    %1904 = vrot.lane.b32.xlu0 %v1902, 96
    %v1905 = vpop.permute.xlu0 %1904
    %s1907 = scalar_lea.vmem [#allocation3], 24
    %1908 = vst.msk [vmem:[%s1907] sm:$0xff] %vm314, %v1905
    %1910 = vrot.lane.b32.xlu0 %v1852, 96
    %v1911 = vpop.permute.xlu0 %1910
    %v1912 = vsel %vm314, %v1911, 0
    %1914 = vmatprep.subr.mxu0 %v143
    %1915 = vmatpush1.msra.mxu0 %v142
    %1916 = vmatprep.subr.mxu0 %v145
    %1917 = vmatpush1.msra.mxu0 %v144
    %1918 = vmatprep.subr.mxu0 %v147
    %1919 = vmatpush1.msra.mxu0 %v146
    %1920 = vmatprep.subr.mxu0 %v149
    %1921 = vmatpush1.msra.mxu0 %v148
    %1922 = vmatprep.subr.mxu0 0.0
    %1923 = vmatpush1.msra.mxu0 0.0
    %1924 = vmatprep.subr.mxu0 0.0
    %1925 = vmatpush1.msra.mxu0 0.0
    %1926 = vmatprep.subr.mxu0 0.0
    %1927 = vmatpush1.msra.mxu0 0.0
    %1928 = vmatprep.subr.mxu0 0.0
    %1929 = vmatpush1.msra.mxu0 0.0
    %1930 = vmatprep.subr.mxu0 0.0
    %1931 = vmatpush1.msra.mxu0 0.0
    %1932 = vmatprep.subr.mxu0 0.0
    %1933 = vmatpush1.msra.mxu0 0.0
    %1934 = vmatprep.subr.mxu0 0.0
    %1935 = vmatpush1.msra.mxu0 0.0
    %1936 = vmatprep.subr.mxu0 0.0
    %1937 = vmatpush1.msra.mxu0 0.0
    %1938 = vmatprep.subr.mxu0 0.0
    %1939 = vmatpush1.msra.mxu0 0.0
    %1940 = vmatprep.subr.mxu0 0.0
    %1941 = vmatpush1.msra.mxu0 0.0
    %1942 = vmatprep.subr.mxu0 0.0
    %1943 = vmatpush1.msra.mxu0 0.0
    %1944 = vmatprep.subr.mxu0 0.0
    %1945 = vmatpush1.msra.mxu0 0.0
    %1946 = vmatprep.subr.mxu0 0.0
    %1947 = vmatpush1.msra.mxu0 0.0
    %1948 = vmatprep.subr.mxu0 0.0
    %1949 = vmatpush1.msra.mxu0 0.0
    %1950 = vmatprep.subr.mxu0 0.0
    %1951 = vmatpush1.msra.mxu0 0.0
    %1952 = vmatprep.subr.mxu0 0.0
    %1953 = vmatpush1.msra.mxu0 0.0
    %1954 = vmatprep.subr.mxu0 0.0
    %1955 = vmatpush1.msra.mxu0 0.0
    %1956 = vmatprep.subr.mxu0 0.0
    %1957 = vmatpush1.msra.mxu0 0.0
    %1958 = vmatprep.subr.mxu0 0.0
    %1959 = vmatpush1.msra.mxu0 0.0
    %1960 = vmatprep.subr.mxu0 0.0
    %1961 = vmatpush1.msra.mxu0 0.0
    %1962 = vmatprep.subr.mxu0 0.0
    %1963 = vmatpush1.msra.mxu0 0.0
    %1964 = vmatprep.subr.mxu0 0.0
    %1965 = vmatpush1.msra.mxu0 0.0
    %1966 = vmatprep.subr.mxu0 0.0
    %1967 = vmatpush1.msra.mxu0 0.0
    %1968 = vmatprep.subr.mxu0 0.0
    %1969 = vmatpush1.msra.mxu0 0.0
    %1970 = vmatprep.subr.mxu0 0.0
    %1971 = vmatpush1.msra.mxu0 0.0
    %1972 = vmatprep.subr.mxu0 0.0
    %1973 = vmatpush1.msra.mxu0 0.0
    %1974 = vmatprep.subr.mxu0 0.0
    %1975 = vmatpush1.msra.mxu0 0.0
    %1976 = vmatprep.subr.mxu0 0.0
    %1977 = vmatpush1.msra.mxu0 0.0
    %1978 = vmatprep.mubr.f32.mxu0 0.0
    %1979 = vmatmul.mubr.f32.gmra.mrb[0].mxu0 %v1912
    %v1980 = vpop.f32.mrb[0].mxu0
    %v1981 = vpop.f32.mrb[0].mxu0
    %v1982 = vadd.f32 0.0, %v1981
    %1983 = vdwg.mxu0
    %1985 = vrot.lane.b32.xlu0 %v1877, 96
    %v1986 = vpop.permute.xlu0 %1985
    %v1987 = vsel %vm314, %v1986, 0
    %1989 = vmatprep.subr.mxu0 %v151
    %1990 = vmatpush1.msra.mxu0 %v150
    %1991 = vmatprep.subr.mxu0 %v153
    %1992 = vmatpush1.msra.mxu0 %v152
    %1993 = vmatprep.subr.mxu0 %v155
    %1994 = vmatpush1.msra.mxu0 %v154
    %1995 = vmatprep.subr.mxu0 %v157
    %1996 = vmatpush1.msra.mxu0 %v156
    %1997 = vmatprep.subr.mxu0 0.0
    %1998 = vmatpush1.msra.mxu0 0.0
    %1999 = vmatprep.subr.mxu0 0.0
    %2000 = vmatpush1.msra.mxu0 0.0
    %2001 = vmatprep.subr.mxu0 0.0
    %2002 = vmatpush1.msra.mxu0 0.0
    %2003 = vmatprep.subr.mxu0 0.0
    %2004 = vmatpush1.msra.mxu0 0.0
    %2005 = vmatprep.subr.mxu0 0.0
    %2006 = vmatpush1.msra.mxu0 0.0
    %2007 = vmatprep.subr.mxu0 0.0
    %2008 = vmatpush1.msra.mxu0 0.0
    %2009 = vmatprep.subr.mxu0 0.0
    %2010 = vmatpush1.msra.mxu0 0.0
    %2011 = vmatprep.subr.mxu0 0.0
    %2012 = vmatpush1.msra.mxu0 0.0
    %2013 = vmatprep.subr.mxu0 0.0
    %2014 = vmatpush1.msra.mxu0 0.0
    %2015 = vmatprep.subr.mxu0 0.0
    %2016 = vmatpush1.msra.mxu0 0.0
    %2017 = vmatprep.subr.mxu0 0.0
    %2018 = vmatpush1.msra.mxu0 0.0
    %2019 = vmatprep.subr.mxu0 0.0
    %2020 = vmatpush1.msra.mxu0 0.0
    %2021 = vmatprep.subr.mxu0 0.0
    %2022 = vmatpush1.msra.mxu0 0.0
    %2023 = vmatprep.subr.mxu0 0.0
    %2024 = vmatpush1.msra.mxu0 0.0
    %2025 = vmatprep.subr.mxu0 0.0
    %2026 = vmatpush1.msra.mxu0 0.0
    %2027 = vmatprep.subr.mxu0 0.0
    %2028 = vmatpush1.msra.mxu0 0.0
    %2029 = vmatprep.subr.mxu0 0.0
    %2030 = vmatpush1.msra.mxu0 0.0
    %2031 = vmatprep.subr.mxu0 0.0
    %2032 = vmatpush1.msra.mxu0 0.0
    %2033 = vmatprep.subr.mxu0 0.0
    %2034 = vmatpush1.msra.mxu0 0.0
    %2035 = vmatprep.subr.mxu0 0.0
    %2036 = vmatpush1.msra.mxu0 0.0
    %2037 = vmatprep.subr.mxu0 0.0
    %2038 = vmatpush1.msra.mxu0 0.0
    %2039 = vmatprep.subr.mxu0 0.0
    %2040 = vmatpush1.msra.mxu0 0.0
    %2041 = vmatprep.subr.mxu0 0.0
    %2042 = vmatpush1.msra.mxu0 0.0
    %2043 = vmatprep.subr.mxu0 0.0
    %2044 = vmatpush1.msra.mxu0 0.0
    %2045 = vmatprep.subr.mxu0 0.0
    %2046 = vmatpush1.msra.mxu0 0.0
    %2047 = vmatprep.subr.mxu0 0.0
    %2048 = vmatpush1.msra.mxu0 0.0
    %2049 = vmatprep.subr.mxu0 0.0
    %2050 = vmatpush1.msra.mxu0 0.0
    %2051 = vmatprep.subr.mxu0 0.0
    %2052 = vmatpush1.msra.mxu0 0.0
    %2053 = vmatprep.mubr.f32.mxu0 0.0
    %2054 = vmatmul.mubr.f32.gmra.mrb[0].mxu0 %v1987
    %v2055 = vpop.f32.mrb[0].mxu0
    %v2056 = vadd.f32 0.0, %v2055
    %v2057 = vpop.f32.mrb[0].mxu0
    %v2058 = vadd.f32 0.0, %v2057
    %2059 = vdwg.mxu0
    %v2060 = vsel %vm314, %v1905, 0
    %2062 = vmatprep.subr.mxu0 0.0
    %2063 = vmatpush1.msra.mxu0 %v158
    %2064 = vmatprep.subr.mxu0 0.0
    %2065 = vmatpush1.msra.mxu0 %v159
    %2066 = vmatprep.subr.mxu0 0.0
    %2067 = vmatpush1.msra.mxu0 %v160
    %2068 = vmatprep.subr.mxu0 0.0
    %2069 = vmatpush1.msra.mxu0 %v161
    %2070 = vmatprep.subr.mxu0 0.0
    %2071 = vmatpush1.msra.mxu0 0.0
    %2072 = vmatprep.subr.mxu0 0.0
    %2073 = vmatpush1.msra.mxu0 0.0
    %2074 = vmatprep.subr.mxu0 0.0
    %2075 = vmatpush1.msra.mxu0 0.0
    %2076 = vmatprep.subr.mxu0 0.0
    %2077 = vmatpush1.msra.mxu0 0.0
    %2078 = vmatprep.subr.mxu0 0.0
    %2079 = vmatpush1.msra.mxu0 0.0
    %2080 = vmatprep.subr.mxu0 0.0
    %2081 = vmatpush1.msra.mxu0 0.0
    %2082 = vmatprep.subr.mxu0 0.0
    %2083 = vmatpush1.msra.mxu0 0.0
    %2084 = vmatprep.subr.mxu0 0.0
    %2085 = vmatpush1.msra.mxu0 0.0
    %2086 = vmatprep.subr.mxu0 0.0
    %2087 = vmatpush1.msra.mxu0 0.0
    %2088 = vmatprep.subr.mxu0 0.0
    %2089 = vmatpush1.msra.mxu0 0.0
    %2090 = vmatprep.subr.mxu0 0.0
    %2091 = vmatpush1.msra.mxu0 0.0
    %2092 = vmatprep.subr.mxu0 0.0
    %2093 = vmatpush1.msra.mxu0 0.0
    %2094 = vmatprep.subr.mxu0 0.0
    %2095 = vmatpush1.msra.mxu0 0.0
    %2096 = vmatprep.subr.mxu0 0.0
    %2097 = vmatpush1.msra.mxu0 0.0
    %2098 = vmatprep.subr.mxu0 0.0
    %2099 = vmatpush1.msra.mxu0 0.0
    %2100 = vmatprep.subr.mxu0 0.0
    %2101 = vmatpush1.msra.mxu0 0.0
    %2102 = vmatprep.subr.mxu0 0.0
    %2103 = vmatpush1.msra.mxu0 0.0
    %2104 = vmatprep.subr.mxu0 0.0
    %2105 = vmatpush1.msra.mxu0 0.0
    %2106 = vmatprep.subr.mxu0 0.0
    %2107 = vmatpush1.msra.mxu0 0.0
    %2108 = vmatprep.subr.mxu0 0.0
    %2109 = vmatpush1.msra.mxu0 0.0
    %2110 = vmatprep.subr.mxu0 0.0
    %2111 = vmatpush1.msra.mxu0 0.0
    %2112 = vmatprep.subr.mxu0 0.0
    %2113 = vmatpush1.msra.mxu0 0.0
    %2114 = vmatprep.subr.mxu0 0.0
    %2115 = vmatpush1.msra.mxu0 0.0
    %2116 = vmatprep.subr.mxu0 0.0
    %2117 = vmatpush1.msra.mxu0 0.0
    %2118 = vmatprep.subr.mxu0 0.0
    %2119 = vmatpush1.msra.mxu0 0.0
    %2120 = vmatprep.subr.mxu0 0.0
    %2121 = vmatpush1.msra.mxu0 0.0
    %2122 = vmatprep.subr.mxu0 0.0
    %2123 = vmatpush1.msra.mxu0 0.0
    %2124 = vmatprep.subr.mxu0 0.0
    %2125 = vmatpush1.msra.mxu0 0.0
    %2126 = vmatprep.mubr.f32.mxu0 0.0
    %2127 = vmatmul.mubr.f32.gmra.mrb[0].mxu0 %v2060
    %v2128 = vpop.f32.mrb[0].mxu0
    %v2129 = vadd.f32 0.0, %v2128
    %v2130 = vpop.f32.mrb[0].mxu0
    %2131 = vdwg.mxu0
    %v2132 = vadd.f32 %v1982, %v2056
    %v2133 = vadd.f32 %v2132, %v167
    %v2134 = vadd.f32 %v2058, %v2129
    %v2135 = vadd.f32 %v2134, %v174
    %v2136 = vxor.u32 %v2133, 2147483648
    %v2137 = vmul.f32 %v2136, 1.442695
    %v2138 = vpow.pop %v2137
    %v2139 = vadd.f32 %v2138, 1.0
    %v2140 = vrcp.pop %v2139
    %v2141 = vmul.f32 1.0, %v2140
    %2143 = vrot.lane.b32.xlu0 %v2133, 32
    %v2144 = vpop.permute.xlu0 %2143
    %v2146 = vmul.f32 %v2141, %v2144
    %2148 = vrot.lane.b32.xlu0 %v2146, 64
    %v2149 = vpop.permute.xlu0 %2148
    %v2151 = vadd.f32 %v2133, %v2149
    %v2152 = vtanh.pop %v2151
    %v2153 = vsub.f32 1.0, %v2141
    %2155 = vrot.lane.b32.xlu0 %v2152, 96
    %v2156 = vpop.permute.xlu0 %2155
    %v2158 = vmul.f32 %v2153, %v2156
    %v2159 = vmul.f32 %v2141, %v1877
    %v2160 = vadd.f32 %v2158, %v2159
    %v2161 = vxor.u32 %v2135, 2147483648
    %v2162 = vmul.f32 %v2161, 1.442695
    %v2163 = vpow.pop %v2162
    %v2164 = vadd.f32 %v2163, 1.0
    %v2165 = vrcp.pop %v2164
    %v2166 = vmul.f32 1.0, %v2165
    %2168 = vrot.lane.b32.xlu0 %v2135, 32
    %v2169 = vpop.permute.xlu0 %2168
    %v2171 = vmul.f32 %v2166, %v2169
    %2173 = vrot.lane.b32.xlu0 %v2171, 64
    %v2174 = vpop.permute.xlu0 %2173
    %v2176 = vadd.f32 %v2135, %v2174
    %v2177 = vtanh.pop %v2176
    %v2178 = vsub.f32 1.0, %v2166
    %2180 = vrot.lane.b32.xlu0 %v2177, 96
    %v2181 = vpop.permute.xlu0 %2180
    %v2183 = vmul.f32 %v2178, %v2181
    %v2184 = vmul.f32 %v2166, %v1902
    %v2185 = vadd.f32 %v2183, %v2184
    %2187 = vrot.lane.b32.xlu0 %v2185, 96
    %v2188 = vpop.permute.xlu0 %2187
    %s2190 = scalar_lea.vmem [#allocation3], 32
    %2191 = vst.msk [vmem:[%s2190] sm:$0xff] %vm314, %v2188
    %2193 = vrot.lane.b32.xlu0 %v2160, 96
    %v2194 = vpop.permute.xlu0 %2193
    %v2195 = vsel %vm314, %v2194, 0
    %2197 = vmatprep.subr.mxu0 %v151
    %2198 = vmatpush1.msra.mxu0 %v150
    %2199 = vmatprep.subr.mxu0 %v153
    %2200 = vmatpush1.msra.mxu0 %v152
    %2201 = vmatprep.subr.mxu0 %v155
    %2202 = vmatpush1.msra.mxu0 %v154
    %2203 = vmatprep.subr.mxu0 %v157
    %2204 = vmatpush1.msra.mxu0 %v156
    %2205 = vmatprep.subr.mxu0 0.0
    %2206 = vmatpush1.msra.mxu0 0.0
    %2207 = vmatprep.subr.mxu0 0.0
    %2208 = vmatpush1.msra.mxu0 0.0
    %2209 = vmatprep.subr.mxu0 0.0
    %2210 = vmatpush1.msra.mxu0 0.0
    %2211 = vmatprep.subr.mxu0 0.0
    %2212 = vmatpush1.msra.mxu0 0.0
    %2213 = vmatprep.subr.mxu0 0.0
    %2214 = vmatpush1.msra.mxu0 0.0
    %2215 = vmatprep.subr.mxu0 0.0
    %2216 = vmatpush1.msra.mxu0 0.0
    %2217 = vmatprep.subr.mxu0 0.0
    %2218 = vmatpush1.msra.mxu0 0.0
    %2219 = vmatprep.subr.mxu0 0.0
    %2220 = vmatpush1.msra.mxu0 0.0
    %2221 = vmatprep.subr.mxu0 0.0
    %2222 = vmatpush1.msra.mxu0 0.0
    %2223 = vmatprep.subr.mxu0 0.0
    %2224 = vmatpush1.msra.mxu0 0.0
    %2225 = vmatprep.subr.mxu0 0.0
    %2226 = vmatpush1.msra.mxu0 0.0
    %2227 = vmatprep.subr.mxu0 0.0
    %2228 = vmatpush1.msra.mxu0 0.0
    %2229 = vmatprep.subr.mxu0 0.0
    %2230 = vmatpush1.msra.mxu0 0.0
    %2231 = vmatprep.subr.mxu0 0.0
    %2232 = vmatpush1.msra.mxu0 0.0
    %2233 = vmatprep.subr.mxu0 0.0
    %2234 = vmatpush1.msra.mxu0 0.0
    %2235 = vmatprep.subr.mxu0 0.0
    %2236 = vmatpush1.msra.mxu0 0.0
    %2237 = vmatprep.subr.mxu0 0.0
    %2238 = vmatpush1.msra.mxu0 0.0
    %2239 = vmatprep.subr.mxu0 0.0
    %2240 = vmatpush1.msra.mxu0 0.0
    %2241 = vmatprep.subr.mxu0 0.0
    %2242 = vmatpush1.msra.mxu0 0.0
    %2243 = vmatprep.subr.mxu0 0.0
    %2244 = vmatpush1.msra.mxu0 0.0
    %2245 = vmatprep.subr.mxu0 0.0
    %2246 = vmatpush1.msra.mxu0 0.0
    %2247 = vmatprep.subr.mxu0 0.0
    %2248 = vmatpush1.msra.mxu0 0.0
    %2249 = vmatprep.subr.mxu0 0.0
    %2250 = vmatpush1.msra.mxu0 0.0
    %2251 = vmatprep.subr.mxu0 0.0
    %2252 = vmatpush1.msra.mxu0 0.0
    %2253 = vmatprep.subr.mxu0 0.0
    %2254 = vmatpush1.msra.mxu0 0.0
    %2255 = vmatprep.subr.mxu0 0.0
    %2256 = vmatpush1.msra.mxu0 0.0
    %2257 = vmatprep.subr.mxu0 0.0
    %2258 = vmatpush1.msra.mxu0 0.0
    %2259 = vmatprep.subr.mxu0 0.0
    %2260 = vmatpush1.msra.mxu0 0.0
    %2261 = vmatprep.mubr.f32.mxu0 0.0
    %2262 = vmatmul.mubr.f32.gmra.mrb[0].mxu0 %v2195
    %v2263 = vpop.f32.mrb[0].mxu0
    %v2264 = vpop.f32.mrb[0].mxu0
    %v2265 = vadd.f32 0.0, %v2264
    %2266 = vdwg.mxu0
    %v2267 = vsel %vm314, %v2188, 0
    %2269 = vmatprep.subr.mxu0 0.0
    %2270 = vmatpush1.msra.mxu0 %v158
    %2271 = vmatprep.subr.mxu0 0.0
    %2272 = vmatpush1.msra.mxu0 %v159
    %2273 = vmatprep.subr.mxu0 0.0
    %2274 = vmatpush1.msra.mxu0 %v160
    %2275 = vmatprep.subr.mxu0 0.0
    %2276 = vmatpush1.msra.mxu0 %v161
    %2277 = vmatprep.subr.mxu0 0.0
    %2278 = vmatpush1.msra.mxu0 0.0
    %2279 = vmatprep.subr.mxu0 0.0
    %2280 = vmatpush1.msra.mxu0 0.0
    %2281 = vmatprep.subr.mxu0 0.0
    %2282 = vmatpush1.msra.mxu0 0.0
    %2283 = vmatprep.subr.mxu0 0.0
    %2284 = vmatpush1.msra.mxu0 0.0
    %2285 = vmatprep.subr.mxu0 0.0
    %2286 = vmatpush1.msra.mxu0 0.0
    %2287 = vmatprep.subr.mxu0 0.0
    %2288 = vmatpush1.msra.mxu0 0.0
    %2289 = vmatprep.subr.mxu0 0.0
    %2290 = vmatpush1.msra.mxu0 0.0
    %2291 = vmatprep.subr.mxu0 0.0
    %2292 = vmatpush1.msra.mxu0 0.0
    %2293 = vmatprep.subr.mxu0 0.0
    %2294 = vmatpush1.msra.mxu0 0.0
    %2295 = vmatprep.subr.mxu0 0.0
    %2296 = vmatpush1.msra.mxu0 0.0
    %2297 = vmatprep.subr.mxu0 0.0
    %2298 = vmatpush1.msra.mxu0 0.0
    %2299 = vmatprep.subr.mxu0 0.0
    %2300 = vmatpush1.msra.mxu0 0.0
    %2301 = vmatprep.subr.mxu0 0.0
    %2302 = vmatpush1.msra.mxu0 0.0
    %2303 = vmatprep.subr.mxu0 0.0
    %2304 = vmatpush1.msra.mxu0 0.0
    %2305 = vmatprep.subr.mxu0 0.0
    %2306 = vmatpush1.msra.mxu0 0.0
    %2307 = vmatprep.subr.mxu0 0.0
    %2308 = vmatpush1.msra.mxu0 0.0
    %2309 = vmatprep.subr.mxu0 0.0
    %2310 = vmatpush1.msra.mxu0 0.0
    %2311 = vmatprep.subr.mxu0 0.0
    %2312 = vmatpush1.msra.mxu0 0.0
    %2313 = vmatprep.subr.mxu0 0.0
    %2314 = vmatpush1.msra.mxu0 0.0
    %2315 = vmatprep.subr.mxu0 0.0
    %2316 = vmatpush1.msra.mxu0 0.0
    %2317 = vmatprep.subr.mxu0 0.0
    %2318 = vmatpush1.msra.mxu0 0.0
    %2319 = vmatprep.subr.mxu0 0.0
    %2320 = vmatpush1.msra.mxu0 0.0
    %2321 = vmatprep.subr.mxu0 0.0
    %2322 = vmatpush1.msra.mxu0 0.0
    %2323 = vmatprep.subr.mxu0 0.0
    %2324 = vmatpush1.msra.mxu0 0.0
    %2325 = vmatprep.subr.mxu0 0.0
    %2326 = vmatpush1.msra.mxu0 0.0
    %2327 = vmatprep.subr.mxu0 0.0
    %2328 = vmatpush1.msra.mxu0 0.0
    %2329 = vmatprep.subr.mxu0 0.0
    %2330 = vmatpush1.msra.mxu0 0.0
    %2331 = vmatprep.subr.mxu0 0.0
    %2332 = vmatpush1.msra.mxu0 0.0
    %2333 = vmatprep.mubr.f32.mxu0 0.0
    %2334 = vmatmul.mubr.f32.gmra.mrb[0].mxu0 %v2267
    %v2335 = vpop.f32.mrb[0].mxu0
    %v2336 = vadd.f32 0.0, %v2335
    %v2337 = vpop.f32.mrb[0].mxu0
    %2338 = vdwg.mxu0
    %v2339 = vadd.f32 %v2265, %v2336
    %v2340 = vadd.f32 %v2339, %v174
    %v2341 = vxor.u32 %v2340, 2147483648
    %v2342 = vmul.f32 %v2341, 1.442695
    %v2343 = vpow.pop %v2342
    %v2344 = vadd.f32 %v2343, 1.0
    %v2345 = vrcp.pop %v2344
    %v2346 = vmul.f32 1.0, %v2345
    %2348 = vrot.lane.b32.xlu0 %v2340, 32
    %v2349 = vpop.permute.xlu0 %2348
    %v2351 = vmul.f32 %v2346, %v2349
    %2353 = vrot.lane.b32.xlu0 %v2351, 64
    %v2354 = vpop.permute.xlu0 %2353
    %v2356 = vadd.f32 %v2340, %v2354
    %v2357 = vtanh.pop %v2356
    %v2358 = vsub.f32 1.0, %v2346
    %2360 = vrot.lane.b32.xlu0 %v2357, 96
    %v2361 = vpop.permute.xlu0 %2360
    %v2363 = vmul.f32 %v2358, %v2361
    %v2364 = vmul.f32 %v2346, %v2185
    %v2365 = vadd.f32 %v2363, %v2364
    %2367 = vrot.lane.b32.xlu0 %v2365, 96
    %v2368 = vpop.permute.xlu0 %2367
    %s2370 = scalar_lea.vmem [#allocation3], 40
    %2371 = vst.msk [vmem:[%s2370] sm:$0xff] %vm314, %v2368
    %v2372 = vld [vmem:[#allocation3] sm:$0xff]
    %v2373 = vld [vmem:[#allocation3 + $0x8] sm:$0xff]
    %v2374 = vld [vmem:[#allocation3 + $0x10] sm:$0xff]
    %v2375 = vld [vmem:[#allocation3 + $0x18] sm:$0xff]
    %v2376 = vld [vmem:[#allocation3 + $0x20] sm:$0xff]
    %v2377 = vld [vmem:[#allocation3 + $0x28] sm:$0xff]
    %v2378 = vld [vmem:[%s11] sm:$0xff]
    %v2379 = vld [vmem:[%s11 + $0x8] sm:$0xff]
    %v2380 = vld [vmem:[%s11 + $0x10] sm:$0xff]
    %v2381 = vld [vmem:[%s11 + $0x18] sm:$0xff]
    %v2382 = vld [vmem:[%s12] sm:$0x1]
    %v2384 = vlaneseq
    %v2385 = vshrl.u32 %v2384, 7
    %v2386 = vsub.s32 0, %v2385
    %v2387 = vrot.slane %v2382, %v2386
    %v2390 = vsel %vm314, %v2372, 0
    %v2393 = vsel %vm314, %v2373, 0
    %v2396 = vsel %vm314, %v2374, 0
    %v2399 = vsel %vm314, %v2375, 0
    %v2402 = vsel %vm314, %v2376, 0
    %v2405 = vsel %vm314, %v2377, 0
    %2407 = vmatprep.subr.mxu0 0.0
    %2408 = vmatpush1.msra.mxu0 %v2378
    %2409 = vmatprep.subr.mxu0 0.0
    %2410 = vmatpush1.msra.mxu0 %v2379
    %2411 = vmatprep.subr.mxu0 0.0
    %2412 = vmatpush1.msra.mxu0 %v2380
    %2413 = vmatprep.subr.mxu0 0.0
    %2414 = vmatpush1.msra.mxu0 %v2381
    %2415 = vmatprep.subr.mxu0 0.0
    %2416 = vmatpush1.msra.mxu0 0.0
    %2417 = vmatprep.subr.mxu0 0.0
    %2418 = vmatpush1.msra.mxu0 0.0
    %2419 = vmatprep.subr.mxu0 0.0
    %2420 = vmatpush1.msra.mxu0 0.0
    %2421 = vmatprep.subr.mxu0 0.0
    %2422 = vmatpush1.msra.mxu0 0.0
    %2423 = vmatprep.subr.mxu0 0.0
    %2424 = vmatpush1.msra.mxu0 0.0
    %2425 = vmatprep.subr.mxu0 0.0
    %2426 = vmatpush1.msra.mxu0 0.0
    %2427 = vmatprep.subr.mxu0 0.0
    %2428 = vmatpush1.msra.mxu0 0.0
    %2429 = vmatprep.subr.mxu0 0.0
    %2430 = vmatpush1.msra.mxu0 0.0
    %2431 = vmatprep.subr.mxu0 0.0
    %2432 = vmatpush1.msra.mxu0 0.0
    %2433 = vmatprep.subr.mxu0 0.0
    %2434 = vmatpush1.msra.mxu0 0.0
    %2435 = vmatprep.subr.mxu0 0.0
    %2436 = vmatpush1.msra.mxu0 0.0
    %2437 = vmatprep.subr.mxu0 0.0
    %2438 = vmatpush1.msra.mxu0 0.0
    %2439 = vmatprep.subr.mxu0 0.0
    %2440 = vmatpush1.msra.mxu0 0.0
    %2441 = vmatprep.subr.mxu0 0.0
    %2442 = vmatpush1.msra.mxu0 0.0
    %2443 = vmatprep.subr.mxu0 0.0
    %2444 = vmatpush1.msra.mxu0 0.0
    %2445 = vmatprep.subr.mxu0 0.0
    %2446 = vmatpush1.msra.mxu0 0.0
    %2447 = vmatprep.subr.mxu0 0.0
    %2448 = vmatpush1.msra.mxu0 0.0
    %2449 = vmatprep.subr.mxu0 0.0
    %2450 = vmatpush1.msra.mxu0 0.0
    %2451 = vmatprep.subr.mxu0 0.0
    %2452 = vmatpush1.msra.mxu0 0.0
    %2453 = vmatprep.subr.mxu0 0.0
    %2454 = vmatpush1.msra.mxu0 0.0
    %2455 = vmatprep.subr.mxu0 0.0
    %2456 = vmatpush1.msra.mxu0 0.0
    %2457 = vmatprep.subr.mxu0 0.0
    %2458 = vmatpush1.msra.mxu0 0.0
    %2459 = vmatprep.subr.mxu0 0.0
    %2460 = vmatpush1.msra.mxu0 0.0
    %2461 = vmatprep.subr.mxu0 0.0
    %2462 = vmatpush1.msra.mxu0 0.0
    %2463 = vmatprep.subr.mxu0 0.0
    %2464 = vmatpush1.msra.mxu0 0.0
    %2465 = vmatprep.subr.mxu0 0.0
    %2466 = vmatpush1.msra.mxu0 0.0
    %2467 = vmatprep.subr.mxu0 0.0
    %2468 = vmatpush1.msra.mxu0 0.0
    %2469 = vmatprep.subr.mxu0 0.0
    %2470 = vmatpush1.msra.mxu0 0.0
    %2471 = vmatprep.mubr.f32.mxu0 0.0
    %2472 = vmatmul.mubr.f32.gmra.mrb[0].mxu0 %v2390
    %v2473 = vpop.f32.mrb[0].mxu0
    %v2474 = vadd.f32 %v2387, %v2473
    %v2475 = vpop.f32.mrb[0].mxu0
    %2476 = vmatprep.mubr.f32.mxu0 0.0
    %2477 = vmatmul.mubr.f32.gmra.mrb[0].mxu0 %v2393
    %v2478 = vpop.f32.mrb[0].mxu0
    %v2479 = vadd.f32 %v2387, %v2478
    %v2480 = vpop.f32.mrb[0].mxu0
    %2481 = vmatprep.mubr.f32.mxu0 0.0
    %2482 = vmatmul.mubr.f32.gmra.mrb[0].mxu0 %v2396
    %v2483 = vpop.f32.mrb[0].mxu0
    %v2484 = vadd.f32 %v2387, %v2483
    %v2485 = vpop.f32.mrb[0].mxu0
    %2486 = vmatprep.mubr.f32.mxu0 0.0
    %2487 = vmatmul.mubr.f32.gmra.mrb[0].mxu0 %v2399
    %v2488 = vpop.f32.mrb[0].mxu0
    %v2489 = vadd.f32 %v2387, %v2488
    %v2490 = vpop.f32.mrb[0].mxu0
    %2491 = vmatprep.mubr.f32.mxu0 0.0
    %2492 = vmatmul.mubr.f32.gmra.mrb[0].mxu0 %v2402
    %v2493 = vpop.f32.mrb[0].mxu0
    %v2494 = vadd.f32 %v2387, %v2493
    %v2495 = vpop.f32.mrb[0].mxu0
    %2496 = vmatprep.mubr.f32.mxu0 0.0
    %2497 = vmatmul.mubr.f32.gmra.mrb[0].mxu0 %v2405
    %v2498 = vpop.f32.mrb[0].mxu0
    %v2499 = vadd.f32 %v2387, %v2498
    %v2500 = vpop.f32.mrb[0].mxu0
    %2501 = vdwg.mxu0
    %2502 = vmax.xlane.f32.xlu0 %v2474
    %v2503 = vpop.xlane.xlu0 %2502
    %2504 = vmax.xlane.f32.xlu0 %v2479
    %v2505 = vpop.xlane.xlu0 %2504
    %2506 = vmax.xlane.f32.xlu0 %v2484
    %v2507 = vpop.xlane.xlu0 %2506
    %2508 = vmax.xlane.f32.xlu0 %v2489
    %v2509 = vpop.xlane.xlu0 %2508
    %2510 = vmax.xlane.f32.xlu0 %v2494
    %v2511 = vpop.xlane.xlu0 %2510
    %2512 = vmax.xlane.f32.xlu0 %v2499
    %v2513 = vpop.xlane.xlu0 %2512
    %v2514 = vsub.f32 %v2474, %v2503
    %v2515 = vsub.f32 %v2479, %v2505
    %v2516 = vsub.f32 %v2484, %v2507
    %v2517 = vsub.f32 %v2489, %v2509
    %v2518 = vsub.f32 %v2494, %v2511
    %v2519 = vsub.f32 %v2499, %v2513
    %v2520 = vmul.f32 %v2514, 1.442695
    %v2521 = vpow.pop %v2520
    %v2522 = vmul.f32 %v2515, 1.442695
    %v2523 = vpow.pop %v2522
    %v2524 = vmul.f32 %v2516, 1.442695
    %v2525 = vpow.pop %v2524
    %v2526 = vmul.f32 %v2517, 1.442695
    %v2527 = vpow.pop %v2526
    %v2528 = vmul.f32 %v2518, 1.442695
    %v2529 = vpow.pop %v2528
    %v2530 = vmul.f32 %v2519, 1.442695
    %v2531 = vpow.pop %v2530
    %2532 = vadd.xlane.f32.xlu0 %v2521
    %v2533 = vpop.xlane.xlu0 %2532
    %2534 = vadd.xlane.f32.xlu0 %v2523
    %v2535 = vpop.xlane.xlu0 %2534
    %2536 = vadd.xlane.f32.xlu0 %v2525
    %v2537 = vpop.xlane.xlu0 %2536
    %2538 = vadd.xlane.f32.xlu0 %v2527
    %v2539 = vpop.xlane.xlu0 %2538
    %2540 = vadd.xlane.f32.xlu0 %v2529
    %v2541 = vpop.xlane.xlu0 %2540
    %2542 = vadd.xlane.f32.xlu0 %v2531
    %v2543 = vpop.xlane.xlu0 %2542
    %v2544 = vrcp.pop %v2533
    %v2545 = vrcp.pop %v2535
    %v2546 = vrcp.pop %v2537
    %v2547 = vrcp.pop %v2539
    %v2548 = vrcp.pop %v2541
    %v2549 = vrcp.pop %v2543
    %v2550 = vmul.f32 %v2521, %v2544
    %v2551 = vmul.f32 %v2523, %v2545
    %v2552 = vmul.f32 %v2525, %v2546
    %v2553 = vmul.f32 %v2527, %v2547
    %v2554 = vmul.f32 %v2529, %v2548
    %v2555 = vmul.f32 %v2531, %v2549
    %2556 = vst [vmem:[#allocation18] sm:$0xff] %v2550
    %2557 = vst [vmem:[#allocation18 + $0x8] sm:$0xff] %v2551
    %2558 = vst [vmem:[#allocation18 + $0x10] sm:$0xff] %v2552
    %2559 = vst [vmem:[#allocation18 + $0x18] sm:$0xff] %v2553
    %2560 = vst [vmem:[#allocation18 + $0x20] sm:$0xff] %v2554
    %2561 = vst [vmem:[#allocation18 + $0x28] sm:$0xff] %v2555
    // Predicated region
    $region86: #{tpu_custom_call.1} parent=1 // pred_check
      _
    $region87: #{tpu_custom_call.1} parent=1 // pred_check_branch
      %2563 = sbr.rel (0) target = $region89
    $region88: #{tpu_custom_call.1} parent=1 // pred_region
      %s2565 = ssub.s32 768, 768
      %2566 = vsyncadd [#allocation6], %s2565
      %s2567 = sshll.u32 [#allocation18], 4
      %s2568 = int_to_ptr.vmem [resolvable:$true] %s2567
      %2573 = dma.vmem_to_hbm [thread:$0]  %s2568, 768, %s13, [#allocation6], 128, 128, 8
    $region89: #{tpu_custom_call.1} parent=1 // pred_fallthru
      _
    // Predicated region
    $region90: #{tpu_custom_call.1} parent=1 // pred_check
      _
    $region91: #{tpu_custom_call.1} parent=1 // pred_check_branch
      %2575 = sbr.rel (0) target = $region93
    $region92: #{tpu_custom_call.1} parent=1 // pred_region
      %2576 = dma.done [#allocation6], 768
    $region93: #{tpu_custom_call.1} parent=1 // pred_fallthru
      _
    %2577 = vsyncpa [#allocation5], 1
    %2578 = vsyncpa [#allocation8], 1
    %2579 = vsyncpa [#allocation11], 1
    %2580 = vsyncpa [#allocation14], 1
    %2581 = vsyncpa [#allocation17], 1
    %2582 = vsyncpa [#allocation6], 1

</llo_original>
